<compile_context>
chip_gen: v6e
topology: v6e:2x2x1
jax: 0.10.0
libtpu: 0.0.40
codegen_flags: <defaults>
</compile_context>

<pallas_src>
import functools
import math

import jax
import jax.numpy as jnp
from jax.experimental import pallas as pl
from jax.experimental.pallas import tpu as pltpu


def _round_up(x, m):
    return (x + m - 1) // m * m


# ----------------------------------------------------------------------------
# Fused Classify kernel:
#   1x1 conv (matmul) + folded-BN affine + SiLU  ->  global average pool
#   (accumulated across row tiles)  ->  Linear + bias  ->  masked softmax,
#   single lane-dense store per batch element.
# ----------------------------------------------------------------------------
def _classify_kernel(x_ref, wc_ref, sc_ref, bc_ref, wl_ref, bl_ref, o_ref, acc_ref,
                     *, tr, hw_valid, inv_hw, c2, need_row_mask):
    r = pl.program_id(1)

    @pl.when(r == 0)
    def _():
        acc_ref[...] = jnp.zeros_like(acc_ref)

    # ---- 1x1 conv as (TR, C1p) @ (C1p, 1280) bf16 matmul, f32 accumulation ----
    h = jnp.dot(x_ref[0], wc_ref[...], preferred_element_type=jnp.float32)
    h = h * sc_ref[...] + bc_ref[...]        # folded BatchNorm affine (f32)
    h = h * jax.nn.sigmoid(h)                # SiLU (f32 epilogue)

    if need_row_mask:
        # Rows beyond H*W are zero-padded input; the conv would still emit
        # SiLU(bn_bias) there, so mask them out of the average pool.
        row = r * tr + jax.lax.broadcasted_iota(jnp.int32, (tr, 1), 0)
        h = jnp.where(row < hw_valid, h, 0.0)

    # ---- global-average-pool numerator, accumulated across row tiles ----
    acc_ref[...] += jnp.sum(h, axis=0, keepdims=True)

    # ---- epilogue on the last row tile: mean -> Linear -> softmax ----
    @pl.when(r == pl.num_programs(1) - 1)
    def _():
        pooled = acc_ref[...] * inv_hw                                    # (1, 1280) f32
        logits = jnp.dot(pooled.astype(wl_ref.dtype), wl_ref[...],
                         preferred_element_type=jnp.float32) + bl_ref[...]
        # mask the lane padding (c2 padded up to a multiple of 128)
        col = jax.lax.broadcasted_iota(jnp.int32, logits.shape, 1)
        logits = jnp.where(col < c2, logits, -1e30)
        m = jnp.max(logits, axis=-1, keepdims=True)
        e = jnp.exp(logits - m)
        o_ref[0] = (e / jnp.sum(e, axis=-1, keepdims=True)).astype(o_ref.dtype)


def classify_fused(x_rows, w_conv, conv_scale, conv_bias, w_lin, lin_bias,
                   *, tr, hw_valid, c2):
    """x_rows: (N, HWp, C1p) bf16; w_conv: (C1p, 1280) bf16; conv_scale/bias: (1, 1280) f32;
    w_lin: (1280, C2p) bf16; lin_bias: (1, C2p) f32  ->  (N, 1, C2p) f32 probabilities."""
    n, hw_pad, c1p = x_rows.shape
    c_ = w_conv.shape[1]
    c2p = w_lin.shape[1]
    n_row_tiles = hw_pad // tr

    kernel = functools.partial(
        _classify_kernel,
        tr=tr, hw_valid=hw_valid, inv_hw=1.0 / float(hw_valid), c2=c2,
        need_row_mask=(hw_pad != hw_valid))

    return pl.pallas_call(
        kernel,
        out_shape=jax.ShapeDtypeStruct((n, 1, c2p), jnp.float32),
        grid=(n, n_row_tiles),
        in_specs=[
            pl.BlockSpec((1, tr, c1p), lambda i, r: (i, r, 0)),   # activations (row-tiled)
            pl.BlockSpec((c1p, c_), lambda i, r: (0, 0)),         # conv weight (resident)
            pl.BlockSpec((1, c_), lambda i, r: (0, 0)),           # folded-BN scale
            pl.BlockSpec((1, c_), lambda i, r: (0, 0)),           # folded-BN bias
            pl.BlockSpec((c_, c2p), lambda i, r: (0, 0)),         # linear weight (resident)
            pl.BlockSpec((1, c2p), lambda i, r: (0, 0)),          # linear bias
        ],
        out_specs=pl.BlockSpec((1, 1, c2p), lambda i, r: (i, 0, 0)),
        scratch_shapes=[pltpu.VMEM((1, c_), jnp.float32)],        # avg-pool accumulator
        compiler_params=pltpu.CompilerParams(
            dimension_semantics=("parallel", "arbitrary")),
    )(x_rows, w_conv, conv_scale, conv_bias, w_lin, lin_bias)


def classify_forward(params, x_nchw):
    """NCHW (already channel-concatenated) input -> (N, c2) softmax probs (eval path)."""
    w_conv, conv_scale, conv_bias, w_lin, lin_bias = params
    c1, c_ = w_conv.shape
    c2 = w_lin.shape[1]
    n, cin, h, w = x_nchw.shape
    assert cin == c1, (cin, c1)
    hw = h * w

    x_rows = jnp.transpose(x_nchw, (0, 2, 3, 1)).reshape(n, hw, c1)

    # Padding for clean (8, 128) tiling / lane-dense stores:
    #   K (=c1) -> multiple of 128, rows -> multiple of TR, c2 -> multiple of 128.
    c1p = _round_up(c1, 128)
    tr = min(256, _round_up(hw, 8))          # 256 rows keeps the (TR, 1280) f32
    hw_pad = _round_up(hw, tr)               # intermediate ~1.25 MiB (v7x-safe)
    c2p = _round_up(c2, 128)

    x_rows = jnp.pad(x_rows, ((0, 0), (0, hw_pad - hw), (0, c1p - c1))).astype(jnp.bfloat16)
    w_conv_p = jnp.pad(w_conv, ((0, c1p - c1), (0, 0))).astype(jnp.bfloat16)
    w_lin_p = jnp.pad(w_lin, ((0, 0), (0, c2p - c2))).astype(jnp.bfloat16)
    lin_bias_p = jnp.pad(lin_bias, ((0, 0), (0, c2p - c2)))

    out = classify_fused(x_rows, w_conv_p, conv_scale, conv_bias, w_lin_p, lin_bias_p,
                         tr=tr, hw_valid=hw, c2=c2)          # (N, 1, c2p)
    return out[:, 0, :c2]


# ----------------------------------------------------------------------------
# Module wrapper with deterministic (eval-folded) parameters
# ----------------------------------------------------------------------------
class ClassifyPallas:
    """Pallas/TPU implementation of ultralytics Classify (eval forward)."""

    def __init__(self, key, c1, c2, c_=1280, eps=1e-5):
        kw, kg, kb, km, kv, kl, klb = jax.random.split(key, 7)
        # Conv2d(c1, c_, k=1, bias=False) + BatchNorm2d(c_) folded for eval.
        w = jax.random.normal(kw, (c1, c_), jnp.float32) / math.sqrt(c1)
        gamma = 1.0 + 0.1 * jax.random.normal(kg, (c_,), jnp.float32)
        beta = 0.1 * jax.random.normal(kb, (c_,), jnp.float32)
        mean = 0.1 * jax.random.normal(km, (c_,), jnp.float32)
        var = jnp.abs(jax.random.normal(kv, (c_,), jnp.float32)) + 0.5
        scale = gamma / jnp.sqrt(var + eps)
        bias = beta - mean * scale
        # Linear(c_, c2), bias=True.
        wl = jax.random.normal(kl, (c_, c2), jnp.float32) / math.sqrt(c_)
        bl = 0.1 * jax.random.normal(klb, (c2,), jnp.float32)

        self.c1, self.c2, self.c_ = c1, c2, c_
        self.params = (w, scale.reshape(1, c_), bias.reshape(1, c_),
                       wl, bl.reshape(1, c2))
        self._forward = jax.jit(classify_forward)

    def __call__(self, x):
        # Classify.forward: `if isinstance(x, list): x = torch.cat(x, 1)`
        if isinstance(x, (list, tuple)):
            x = jnp.concatenate(list(x), axis=1)
        # Dropout(p=0.0) is an identity; eval branch applies softmax (in-kernel).
        return self._forward(self.params, x)


# ----------------------------------------------------------------------------
# Pure-JAX reference (same bf16 matmul casts) for correctness checking
# ----------------------------------------------------------------------------
def reference_jax(params, x_nchw):
    w_conv, scale, bias, w_lin, bl = params
    x = jnp.transpose(x_nchw, (0, 2, 3, 1))
    n, h, w, c1 = x.shape
    xf = x.reshape(n, h * w, c1).astype(jnp.bfloat16)
    hfeat = jnp.dot(xf, w_conv.astype(jnp.bfloat16), preferred_element_type=jnp.float32)
    hfeat = hfeat * scale + bias
    hfeat = hfeat * jax.nn.sigmoid(hfeat)                       # SiLU
    pooled = jnp.mean(hfeat, axis=1)                            # AdaptiveAvgPool2d(1)
    logits = jnp.dot(pooled.astype(jnp.bfloat16), w_lin.astype(jnp.bfloat16),
                     preferred_element_type=jnp.float32) + bl
    return jax.nn.softmax(logits, axis=-1)


if __name__ == "__main__":
    key = jax.random.PRNGKey(0)
    kparams, kx0, kx1, kx2 = jax.random.split(key, 4)

    c1, c2 = 128, 10
    model = ClassifyPallas(kparams, c1=c1, c2=c2)

    # List input exercises the `torch.cat(x, 1)` branch of Classify.forward.
    xs = [jax.random.normal(kx0, (2, 64, 16, 16), jnp.float32),
          jax.random.normal(kx1, (2, 64, 16, 16), jnp.float32)]

    y = jax.block_until_ready(model(xs))
    assert y.shape == (2, c2), y.shape
    assert bool(jnp.all(jnp.isfinite(y)))
    assert bool(jnp.allclose(jnp.sum(y, axis=-1), 1.0, atol=1e-3))

    y_ref = reference_jax(model.params, jnp.concatenate(xs, axis=1))
    assert bool(jnp.allclose(y, y_ref, atol=3e-3, rtol=3e-3)), \
        float(jnp.max(jnp.abs(y - y_ref)))

    # Single-tensor input with H*W not a multiple of 8 exercises the row-mask path.
    x_odd = jax.random.normal(kx2, (2, c1, 13, 13), jnp.float32)
    y2 = jax.block_until_ready(model(x_odd))
    y2_ref = reference_jax(model.params, x_odd)
    assert y2.shape == (2, c2)
    assert bool(jnp.allclose(y2, y2_ref, atol=3e-3, rtol=3e-3)), \
        float(jnp.max(jnp.abs(y2 - y2_ref)))

    print("KERNEL_OK")
</pallas_src>

<mosaic_0001>
module attributes {stable_mosaic.version = 11 : i64} {
  func.func @_classify_kernel(%arg0: i32, %arg1: i32, %arg2: memref<1x256x128xbf16, #tpu.memory_space<vmem>>, %arg3: memref<128x1280xbf16, #tpu.memory_space<vmem>>, %arg4: memref<1x1280xf32, #tpu.memory_space<vmem>>, %arg5: memref<1x1280xf32, #tpu.memory_space<vmem>>, %arg6: memref<1280x128xbf16, #tpu.memory_space<vmem>>, %arg7: memref<1x128xf32, #tpu.memory_space<vmem>>, %arg8: memref<1x1x128xf32, #tpu.memory_space<vmem>>, %arg9: memref<1x1280xf32, #tpu.memory_space<vmem>>) attributes {dimension_semantics = [#tpu.dimension_semantics<parallel>, #tpu.dimension_semantics<arbitrary>], iteration_bounds = array<i64: 2, 1>, scalar_prefetch = 0 : i64, scratch_operands = 1 : i64, tpu.core_type = #tpu.core_type<tc>, window_params = [{transform_indices = @transform_0, window_bounds = array<i64: 1, 256, 128>}, {pipeline_mode = #tpu.pipeline_mode<synchronous>, transform_indices = @transform_1, window_bounds = array<i64: 128, 1280>}, {pipeline_mode = #tpu.pipeline_mode<synchronous>, transform_indices = @transform_2, window_bounds = array<i64: 1, 1280>}, {pipeline_mode = #tpu.pipeline_mode<synchronous>, transform_indices = @transform_3, window_bounds = array<i64: 1, 1280>}, {pipeline_mode = #tpu.pipeline_mode<synchronous>, transform_indices = @transform_4, window_bounds = array<i64: 1280, 128>}, {pipeline_mode = #tpu.pipeline_mode<synchronous>, transform_indices = @transform_5, window_bounds = array<i64: 1, 128>}, {transform_indices = @transform_6, window_bounds = array<i64: 1, 1, 128>}]} {
    %c0_i32 = arith.constant 0 : i32
    %0 = arith.cmpi eq, %arg1, %c0_i32 : i32
    %1 = arith.extui %0 : i1 to i32
    %c0_i32_0 = arith.constant 0 : i32
    %2 = arith.cmpi ne, %1, %c0_i32_0 : i32
    scf.if %2 {
      %cst_17 = arith.constant 0.000000e+00 : f32
      %27 = vector.broadcast %cst_17 : f32 to vector<1x1280xf32>
      %c0_18 = arith.constant 0 : index
      %c0_19 = arith.constant 0 : index
      %28 = vector.load %arg9[%c0_18, %c0_19] : memref<1x1280xf32, #tpu.memory_space<vmem>>, vector<1x1280xf32>
      tpu.vector_store %arg9[%c0_18, %c0_19], %27 {strides = array<i32>} : memref<1x1280xf32, #tpu.memory_space<vmem>>, vector<1x1280xf32>,
    } else {
    }
    %c0 = arith.constant 0 : index
    %c0_1 = arith.constant 0 : index
    %c0_2 = arith.constant 0 : index
    %3 = vector.load %arg2[%c0, %c0_1, %c0_2] : memref<1x256x128xbf16, #tpu.memory_space<vmem>>, vector<1x256x128xbf16>
    %4 = vector.shape_cast %3 : vector<1x256x128xbf16> to vector<256x128xbf16>
    %c0_3 = arith.constant 0 : index
    %c0_4 = arith.constant 0 : index
    %5 = vector.load %arg3[%c0_3, %c0_4] : memref<128x1280xbf16, #tpu.memory_space<vmem>>, vector<128x1280xbf16>
    %cst = arith.constant dense<0.000000e+00> : vector<256x1280xf32>
    %6 = tpu.matmul %4, %5, %cst {dimension_numbers = #tpu.dot_dimension_numbers<[1], [0], [0], [1], [0, 0, 1, 1], [], []>} : vector<256x128xbf16>, vector<128x1280xbf16>, vector<256x1280xf32> -> vector<256x1280xf32>
    %c0_5 = arith.constant 0 : index
    %c0_6 = arith.constant 0 : index
    %7 = vector.load %arg4[%c0_5, %c0_6] : memref<1x1280xf32, #tpu.memory_space<vmem>>, vector<1x1280xf32>
    %8 = vector.broadcast %7 : vector<1x1280xf32> to vector<256x1280xf32>
    %9 = arith.mulf %6, %8 : vector<256x1280xf32>
    %c0_7 = arith.constant 0 : index
    %c0_8 = arith.constant 0 : index
    %10 = vector.load %arg5[%c0_7, %c0_8] : memref<1x1280xf32, #tpu.memory_space<vmem>>, vector<1x1280xf32>
    %11 = vector.broadcast %10 : vector<1x1280xf32> to vector<256x1280xf32>
    %12 = arith.addf %9, %11 : vector<256x1280xf32>
    %13 = arith.negf %12 : vector<256x1280xf32>
    %14 = math.exp %13 : vector<256x1280xf32>
    %cst_9 = arith.constant 1.000000e+00 : f32
    %15 = vector.broadcast %cst_9 : f32 to vector<256x1280xf32>
    %16 = arith.addf %15, %14 : vector<256x1280xf32>
    %17 = arith.divf %15, %16 : vector<256x1280xf32>
    %18 = arith.mulf %12, %17 : vector<256x1280xf32>
    %c0_10 = arith.constant 0 : index
    %c0_11 = arith.constant 0 : index
    %19 = vector.load %arg9[%c0_10, %c0_11] : memref<1x1280xf32, #tpu.memory_space<vmem>>, vector<1x1280xf32>
    %cst_12 = arith.constant dense<0.000000e+00> : vector<1280xf32>
    %20 = vector.multi_reduction <add>, %18, %cst_12 [0] : vector<256x1280xf32> to vector<1280xf32>
    %21 = vector.shape_cast %20 : vector<1280xf32> to vector<1x1280xf32>
    %22 = arith.addf %19, %21 : vector<1x1280xf32>
    %c0_13 = arith.constant 0 : index
    %c0_14 = arith.constant 0 : index
    %23 = vector.load %arg9[%c0_13, %c0_14] : memref<1x1280xf32, #tpu.memory_space<vmem>>, vector<1x1280xf32>
    tpu.vector_store %arg9[%c0_13, %c0_14], %22 {strides = array<i32>} : memref<1x1280xf32, #tpu.memory_space<vmem>>, vector<1x1280xf32>,
    %c0_i32_15 = arith.constant 0 : i32
    %24 = arith.cmpi eq, %arg1, %c0_i32_15 : i32
    %25 = arith.extui %24 : i1 to i32
    %c0_i32_16 = arith.constant 0 : i32
    %26 = arith.cmpi ne, %25, %c0_i32_16 : i32
    scf.if %26 {
      %c0_17 = arith.constant 0 : index
      %c0_18 = arith.constant 0 : index
      %27 = vector.load %arg9[%c0_17, %c0_18] : memref<1x1280xf32, #tpu.memory_space<vmem>>, vector<1x1280xf32>
      %cst_19 = arith.constant 3.906250e-03 : f32
      %28 = vector.broadcast %cst_19 : f32 to vector<1x1280xf32>
      %29 = arith.mulf %27, %28 : vector<1x1280xf32>
      %30 = arith.truncf %29 : vector<1x1280xf32> to vector<1x1280xbf16>
      %c0_20 = arith.constant 0 : index
      %c0_21 = arith.constant 0 : index
      %31 = vector.load %arg6[%c0_20, %c0_21] : memref<1280x128xbf16, #tpu.memory_space<vmem>>, vector<1280x128xbf16>
      %cst_22 = arith.constant dense<0.000000e+00> : vector<1x128xf32>
      %32 = tpu.matmul %30, %31, %cst_22 {dimension_numbers = #tpu.dot_dimension_numbers<[1], [0], [0], [1], [0, 0, 1, 1], [], []>} : vector<1x1280xbf16>, vector<1280x128xbf16>, vector<1x128xf32> -> vector<1x128xf32>
      %c0_23 = arith.constant 0 : index
      %c0_24 = arith.constant 0 : index
      %33 = vector.load %arg7[%c0_23, %c0_24] : memref<1x128xf32, #tpu.memory_space<vmem>>, vector<1x128xf32>
      %34 = arith.addf %32, %33 : vector<1x128xf32>
      %35 = tpu.iota {dimensions = array<i32: 1>} : vector<1x128xi32>
      %c10_i32 = arith.constant 10 : i32
      %36 = vector.broadcast %c10_i32 : i32 to vector<1x128xi32>
      %37 = arith.cmpi slt, %35, %36 : vector<1x128xi32>
      %cst_25 = arith.constant -1.000000e+30 : f32
      %38 = vector.broadcast %cst_25 : f32 to vector<1x128xf32>
      %39 = arith.select %37, %34, %38 : vector<1x128xi1>, vector<1x128xf32>
      %cst_26 = arith.constant dense<0xFF800000> : vector<1xf32>
      %40 = vector.multi_reduction <maximumf>, %39, %cst_26 [1] : vector<1x128xf32> to vector<1xf32>
      %41 = vector.shape_cast %40 : vector<1xf32> to vector<1x1xf32>
      %42 = vector.broadcast %41 : vector<1x1xf32> to vector<1x128xf32>
      %43 = arith.subf %39, %42 : vector<1x128xf32>
      %44 = math.exp %43 : vector<1x128xf32>
      %cst_27 = arith.constant dense<0.000000e+00> : vector<1xf32>
      %45 = vector.multi_reduction <add>, %44, %cst_27 [1] : vector<1x128xf32> to vector<1xf32>
      %46 = vector.shape_cast %45 : vector<1xf32> to vector<1x1xf32>
      %47 = vector.broadcast %46 : vector<1x1xf32> to vector<1x128xf32>
      %48 = arith.divf %44, %47 : vector<1x128xf32>
      %c0_28 = arith.constant 0 : index
      %c0_29 = arith.constant 0 : index
      %c0_30 = arith.constant 0 : index
      %49 = vector.load %arg8[%c0_28, %c0_29, %c0_30] : memref<1x1x128xf32, #tpu.memory_space<vmem>>, vector<1x1x128xf32>
      %50 = vector.shape_cast %49 : vector<1x1x128xf32> to vector<1x128xf32>
      %51 = vector.shape_cast %48 : vector<1x128xf32> to vector<1x1x128xf32>
      tpu.vector_store %arg8[%c0_28, %c0_29, %c0_30], %51 {strides = array<i32>} : memref<1x1x128xf32, #tpu.memory_space<vmem>>, vector<1x1x128xf32>,
    } else {
    }
    return
  }
  func.func @transform_0(%arg0: i32, %arg1: i32) -> (i32, i32, i32) {
    %c0_i32 = arith.constant 0 : i32
    %c0_i32_0 = arith.constant 0 : i32
    return %arg0, %arg1, %c0_i32 : i32, i32, i32
  }
  func.func @transform_1(%arg0: i32, %arg1: i32) -> (i32, i32) {
    %c0_i32 = arith.constant 0 : i32
    %c0_i32_0 = arith.constant 0 : i32
    %c0_i32_1 = arith.constant 0 : i32
    return %c0_i32, %c0_i32_0 : i32, i32
  }
  func.func @transform_2(%arg0: i32, %arg1: i32) -> (i32, i32) {
    %c0_i32 = arith.constant 0 : i32
    %c0_i32_0 = arith.constant 0 : i32
    %c0_i32_1 = arith.constant 0 : i32
    return %c0_i32, %c0_i32_0 : i32, i32
  }
  func.func @transform_3(%arg0: i32, %arg1: i32) -> (i32, i32) {
    %c0_i32 = arith.constant 0 : i32
    %c0_i32_0 = arith.constant 0 : i32
    %c0_i32_1 = arith.constant 0 : i32
    return %c0_i32, %c0_i32_0 : i32, i32
  }
  func.func @transform_4(%arg0: i32, %arg1: i32) -> (i32, i32) {
    %c0_i32 = arith.constant 0 : i32
    %c0_i32_0 = arith.constant 0 : i32
    %c0_i32_1 = arith.constant 0 : i32
    return %c0_i32, %c0_i32_0 : i32, i32
  }
  func.func @transform_5(%arg0: i32, %arg1: i32) -> (i32, i32) {
    %c0_i32 = arith.constant 0 : i32
    %c0_i32_0 = arith.constant 0 : i32
    %c0_i32_1 = arith.constant 0 : i32
    return %c0_i32, %c0_i32_0 : i32, i32
  }
  func.func @transform_6(%arg0: i32, %arg1: i32) -> (i32, i32, i32) {
    %c0_i32 = arith.constant 0 : i32
    %c0_i32_0 = arith.constant 0 : i32
    %c0_i32_1 = arith.constant 0 : i32
    return %arg0, %c0_i32, %c0_i32_0 : i32, i32, i32
  }
}

</mosaic_0001>

<llo_original>
// kernel: classify_forward.1
$region0: #{classify_forward.1}
  #allocation0 [shape = 'u32[]', space=smem, size = 0x4, offset = 0x4, fixed_abs, tag = 'smem constant byte address 0x4 - core index']
  #allocation1 [shape = 'u32[144,128]{1,0:T(1,128)}', space=vmem, size = 0x12000, scoped, tag = 'internal scratch']
  #allocation2 [shape = 'f32[1,1280]{1,0:T(1,128)}', space=vmem, size = 0x1400, scoped, tag = 'scratch operand']
  %s0 = inlined_call_operand.vmem [shape: bf16[2,256,128], index: 0, kind: input, shape index: {}]
  %s1 = inlined_call_operand.vmem [shape: bf16[128,1280], index: 1, kind: input, shape index: {}]
  %s2 = inlined_call_operand.vmem [shape: f32[1,1280], index: 2, kind: input, shape index: {}]
  %s3 = inlined_call_operand.vmem [shape: f32[1,1280], index: 3, kind: input, shape index: {}]
  %s4 = inlined_call_operand.vmem [shape: bf16[1280,128], index: 4, kind: input, shape index: {}]
  %s5 = inlined_call_operand.vmem [shape: f32[1,128], index: 5, kind: input, shape index: {}]
  %s6 = inlined_call_operand.hbm [shape: f32[2,1,128], index: 6, kind: output, shape index: {}]
  %s7 = sld [smem:[#allocation0]]
  $region65: #{classify_forward.1} parent=0
    _
  %s9 = ssub.s32 1, %s7
  %s10 = scalar_select 0, %s9, %s7
  $region1: #{classify_forward.1} parent=0
    #allocation3 [shape = 'u8[1024]{0}', space=vmem, size = 0x400, scoped, tag = 'output window, operand 0']
    #allocation4 [shape = 's32[2]{0}', space=sflag, size = 0x8, scoped, tag = 'scoped memory for classify_forward.1']
    %11 = vsyncpa [#allocation4], 0
    %s12 = scalar_lea.sflag [#allocation4], 1
    %13 = vsyncpa %s12, 0
    loop: start=0, step=1, limit=4
    $region2: #{classify_forward.1} parent=1 // loop_pre_header
      _
    $region3: #{classify_forward.1} parent=1 // loop_header
      %s15 = sphi 0, %s19
      %p16 = scmp.ge.s32.totalorder %s15, 4
      %s22 = sphi 0, %s34
      %s23 = sphi 0, %s30
      %s24 = sphi 0, %s22
      %s25 = sphi 0, %s23
      %s26 = sphi 0, %s24
      %s27 = sphi 0, %s25
      %s39 = sphi 0, %s41
      %s42 = sphi 0, %s39
      %s43 = sphi 0, %s42
      %s59 = sphi 0, %s43
      %s63 = sphi 0, %s63
      %s65 = sphi 0, %s63
      %s66 = sphi 0, %s65
      %s80 = sphi 0, %s66
      %s84 = sphi 0, %s84
      %s86 = sphi 0, %s84
      %s87 = sphi 0, %s86
      %s101 = sphi 0, %s87
      %s105 = sphi 0, %s105
      %s107 = sphi 0, %s105
      %s108 = sphi 0, %s107
      %s122 = sphi 0, %s108
      %s126 = sphi 0, %s126
      %s128 = sphi 0, %s126
      %s129 = sphi 0, %s128
      %s143 = sphi 0, %s129
      %s147 = sphi 0, %s147
      %s149 = sphi 0, %s147
      %s150 = sphi 0, %s149
      %s164 = sphi 0, %s150
      %s170 = sphi 0, %s172
      %s173 = sphi 0, %s170
      %s174 = sphi 0, %s173
      %s190 = sphi 0, %s174
    $region4: #{classify_forward.1} parent=1 // loop_header_branch
      %18 = sbr.rel (%p16) target = $region8
    $region5: #{classify_forward.1} parent=1 // loop_body
      %s20 = ssub.s32 %s15, 1
      %s21 = ssub.s32 %s15, 2
      %s28 = sadd.s32 1, %s23
      %p29 = scmp.ge.s32.totalorder %s28, 1
      %s30 = scalar_select %p29, 0, %s28
      %s31 = sadd.s32 1, %s22
      %s32 = scalar_select %p29, %s31, %s22
      %p33 = scmp.ge.s32.totalorder %s32, 2
      %s34 = scalar_select %p33, 0, %s32
      %s35 = ssub.s32 %s22, %s34
      %s36 = ssub.s32 %s23, %s30
      %s37 = sor.u32 %s35, %s36
      %p38 = scmp.eq.s32.totalorder %s37, 0
      %s40 = sadd.s32 %s39, 1
      %s41 = scalar_select %p38, %s39, %s40
      %p44 = pneg %p38
      %p45 = scmp.eq.s32.totalorder %s15, 1
      %p46 = por %p44, %p45
      %p47 = scmp.ne.s32.totalorder %s39, %s42
      %p48 = scmp.eq.s32.totalorder %s15, 0
      %p49 = por %p47, %p48
      %p50 = scmp.ne.s32.totalorder %s39, %s42
      %p51 = scmp.eq.s32.totalorder %s20, 1
      %p52 = por %p50, %p51
      %p53 = scmp.ne.s32.totalorder %s42, %s43
      %p54 = scmp.eq.s32.totalorder %s20, 0
      %p55 = por %p53, %p54
      %p56 = scmp.ne.s32.totalorder %s42, %s43
      %p57 = scmp.eq.s32.totalorder %s21, 1
      %p58 = por %p56, %p57
      %p60 = scmp.ne.s32.totalorder %s43, %s59
      %p61 = scmp.eq.s32.totalorder %s21, 0
      %p62 = por %p60, %p61
      %s64 = sadd.s32 %s63, 1
      %p67 = scmp.eq.s32.totalorder %s15, 1
      %p68 = scmp.ne.s32.totalorder %s63, %s65
      %p69 = scmp.eq.s32.totalorder %s15, 0
      %p70 = por %p68, %p69
      %p71 = scmp.ne.s32.totalorder %s63, %s65
      %p72 = scmp.eq.s32.totalorder %s20, 1
      %p73 = por %p71, %p72
      %p74 = scmp.ne.s32.totalorder %s65, %s66
      %p75 = scmp.eq.s32.totalorder %s20, 0
      %p76 = por %p74, %p75
      %p77 = scmp.ne.s32.totalorder %s65, %s66
      %p78 = scmp.eq.s32.totalorder %s21, 1
      %p79 = por %p77, %p78
      %p81 = scmp.ne.s32.totalorder %s66, %s80
      %p82 = scmp.eq.s32.totalorder %s21, 0
      %p83 = por %p81, %p82
      %s85 = sadd.s32 %s84, 1
      %p88 = scmp.eq.s32.totalorder %s15, 1
      %p89 = scmp.ne.s32.totalorder %s84, %s86
      %p90 = scmp.eq.s32.totalorder %s15, 0
      %p91 = por %p89, %p90
      %p92 = scmp.ne.s32.totalorder %s84, %s86
      %p93 = scmp.eq.s32.totalorder %s20, 1
      %p94 = por %p92, %p93
      %p95 = scmp.ne.s32.totalorder %s86, %s87
      %p96 = scmp.eq.s32.totalorder %s20, 0
      %p97 = por %p95, %p96
      %p98 = scmp.ne.s32.totalorder %s86, %s87
      %p99 = scmp.eq.s32.totalorder %s21, 1
      %p100 = por %p98, %p99
      %p102 = scmp.ne.s32.totalorder %s87, %s101
      %p103 = scmp.eq.s32.totalorder %s21, 0
      %p104 = por %p102, %p103
      %s106 = sadd.s32 %s105, 1
      %p109 = scmp.eq.s32.totalorder %s15, 1
      %p110 = scmp.ne.s32.totalorder %s105, %s107
      %p111 = scmp.eq.s32.totalorder %s15, 0
      %p112 = por %p110, %p111
      %p113 = scmp.ne.s32.totalorder %s105, %s107
      %p114 = scmp.eq.s32.totalorder %s20, 1
      %p115 = por %p113, %p114
      %p116 = scmp.ne.s32.totalorder %s107, %s108
      %p117 = scmp.eq.s32.totalorder %s20, 0
      %p118 = por %p116, %p117
      %p119 = scmp.ne.s32.totalorder %s107, %s108
      %p120 = scmp.eq.s32.totalorder %s21, 1
      %p121 = por %p119, %p120
      %p123 = scmp.ne.s32.totalorder %s108, %s122
      %p124 = scmp.eq.s32.totalorder %s21, 0
      %p125 = por %p123, %p124
      %s127 = sadd.s32 %s126, 1
      %p130 = scmp.eq.s32.totalorder %s15, 1
      %p131 = scmp.ne.s32.totalorder %s126, %s128
      %p132 = scmp.eq.s32.totalorder %s15, 0
      %p133 = por %p131, %p132
      %p134 = scmp.ne.s32.totalorder %s126, %s128
      %p135 = scmp.eq.s32.totalorder %s20, 1
      %p136 = por %p134, %p135
      %p137 = scmp.ne.s32.totalorder %s128, %s129
      %p138 = scmp.eq.s32.totalorder %s20, 0
      %p139 = por %p137, %p138
      %p140 = scmp.ne.s32.totalorder %s128, %s129
      %p141 = scmp.eq.s32.totalorder %s21, 1
      %p142 = por %p140, %p141
      %p144 = scmp.ne.s32.totalorder %s129, %s143
      %p145 = scmp.eq.s32.totalorder %s21, 0
      %p146 = por %p144, %p145
      %s148 = sadd.s32 %s147, 1
      %p151 = scmp.eq.s32.totalorder %s15, 1
      %p152 = scmp.ne.s32.totalorder %s147, %s149
      %p153 = scmp.eq.s32.totalorder %s15, 0
      %p154 = por %p152, %p153
      %p155 = scmp.ne.s32.totalorder %s147, %s149
      %p156 = scmp.eq.s32.totalorder %s20, 1
      %p157 = por %p155, %p156
      %p158 = scmp.ne.s32.totalorder %s149, %s150
      %p159 = scmp.eq.s32.totalorder %s20, 0
      %p160 = por %p158, %p159
      %p161 = scmp.ne.s32.totalorder %s149, %s150
      %p162 = scmp.eq.s32.totalorder %s21, 1
      %p163 = por %p161, %p162
      %p165 = scmp.ne.s32.totalorder %s150, %s164
      %p166 = scmp.eq.s32.totalorder %s21, 0
      %p167 = por %p165, %p166
      %s168 = ssub.s32 %s22, %s34
      %p169 = scmp.eq.s32.totalorder %s168, 0
      %s171 = sadd.s32 %s170, 1
      %s172 = scalar_select %p169, %s170, %s171
      %p175 = pneg %p169
      %p176 = scmp.eq.s32.totalorder %s15, 1
      %p177 = por %p175, %p176
      %p178 = scmp.ne.s32.totalorder %s170, %s173
      %p179 = scmp.eq.s32.totalorder %s15, 0
      %p180 = por %p178, %p179
      %p181 = scmp.ne.s32.totalorder %s170, %s173
      %p182 = scmp.eq.s32.totalorder %s20, 1
      %p183 = por %p181, %p182
      %p184 = scmp.ne.s32.totalorder %s173, %s174
      %p185 = scmp.eq.s32.totalorder %s20, 0
      %p186 = por %p184, %p185
      %p187 = scmp.ne.s32.totalorder %s173, %s174
      %p188 = scmp.eq.s32.totalorder %s21, 1
      %p189 = por %p187, %p188
      %p191 = scmp.ne.s32.totalorder %s174, %s190
      %p192 = scmp.eq.s32.totalorder %s21, 0
      %p193 = por %p191, %p192
      %p194 = scmp.le.s32.totalorder 1, %s15
      %p195 = scmp.lt.s32.totalorder %s15, 3
      %p196 = pnand %p194, %p195
      %p197 = pneg %p196
      // Predicated region
      $region9: #{classify_forward.1} parent=5 // pred_check
        _
      $region10: #{classify_forward.1} parent=5 // pred_check_branch
        %199 = sbr.rel (%p196) target = $region12
      $region11: #{classify_forward.1} parent=5 // pred_region
        %s200 = ssub.s32 %s15, 1
        // Predicated region
        $region13: #{classify_forward.1} parent=11 // pred_check
          %p201 = pneg %p76
        $region14: #{classify_forward.1} parent=11 // pred_check_branch
          %203 = sbr.rel (%p201) target = $region16
        $region15: #{classify_forward.1} parent=11 // pred_region
          _
        $region16: #{classify_forward.1} parent=11 // pred_fallthru
          _
        // Predicated region
        $region17: #{classify_forward.1} parent=11 // pred_check
          %p204 = pneg %p97
        $region18: #{classify_forward.1} parent=11 // pred_check_branch
          %206 = sbr.rel (%p204) target = $region20
        $region19: #{classify_forward.1} parent=11 // pred_region
          _
        $region20: #{classify_forward.1} parent=11 // pred_fallthru
          _
        // Predicated region
        $region21: #{classify_forward.1} parent=11 // pred_check
          %p207 = pneg %p118
        $region22: #{classify_forward.1} parent=11 // pred_check_branch
          %209 = sbr.rel (%p207) target = $region24
        $region23: #{classify_forward.1} parent=11 // pred_region
          _
        $region24: #{classify_forward.1} parent=11 // pred_fallthru
          _
        // Predicated region
        $region25: #{classify_forward.1} parent=11 // pred_check
          %p210 = pneg %p139
        $region26: #{classify_forward.1} parent=11 // pred_check_branch
          %212 = sbr.rel (%p210) target = $region28
        $region27: #{classify_forward.1} parent=11 // pred_region
          _
        $region28: #{classify_forward.1} parent=11 // pred_fallthru
          _
        // Predicated region
        $region29: #{classify_forward.1} parent=11 // pred_check
          %p213 = pneg %p160
        $region30: #{classify_forward.1} parent=11 // pred_check_branch
          %215 = sbr.rel (%p213) target = $region32
        $region31: #{classify_forward.1} parent=11 // pred_region
          _
        $region32: #{classify_forward.1} parent=11 // pred_fallthru
          _
      $region12: #{classify_forward.1} parent=5 // pred_fallthru
        _
      %p216 = scmp.lt.s32.totalorder %s15, 2
      // Predicated region
      $region33: #{classify_forward.1} parent=5 // pred_check
        %p217 = pneg %p216
      $region34: #{classify_forward.1} parent=5 // pred_check_branch
        %219 = sbr.rel (%p217) target = $region36
      $region35: #{classify_forward.1} parent=5 // pred_region
        // Predicated region
        $region37: #{classify_forward.1} parent=35 // pred_check
          %p220 = pneg %p49
        $region38: #{classify_forward.1} parent=35 // pred_check_branch
          %222 = sbr.rel (%p220) target = $region40
        $region39: #{classify_forward.1} parent=35 // pred_region
          %s223 = smul.u32 32, %s23
          %p224 = scmp.lt.s32.totalorder %s22, 1
          %s225 = scalar_select %p224, %s22, 1
          %p226 = scmp.lt.s32.totalorder %s223, 31
          %s227 = scalar_select %p226, %s223, 31
          %s228 = smul.addr %s225, 32
          %s229 = sadd.s32 %s227, %s228
          %s230 = smul.addr %s229, 4
          %s231 = scalar_lea.vmem %s0, %s230
          %s232 = smul.u32 32, %s23
        $region40: #{classify_forward.1} parent=35 // pred_fallthru
          _
      $region36: #{classify_forward.1} parent=5 // pred_fallthru
        _
      %p233 = scmp.le.s32.totalorder 1, %s15
      %p234 = scmp.lt.s32.totalorder %s15, 3
      %p235 = pnand %p233, %p234
      %p236 = pneg %p235
      // Predicated region
      $region41: #{classify_forward.1} parent=5 // pred_check
        _
      $region42: #{classify_forward.1} parent=5 // pred_check_branch
        %238 = sbr.rel (%p235) target = $region44
      $region43: #{classify_forward.1} parent=5 // pred_region
        %s239 = ssub.s32 %s15, 1
        %s240 = smul.u32 32, %s25
        %p241 = scmp.lt.s32.totalorder %s24, 1
        %s242 = scalar_select %p241, %s24, 1
        %p243 = scmp.lt.s32.totalorder %s240, 31
        %s244 = scalar_select %p243, %s240, 31
        %s245 = smul.addr %s242, 32
        %s246 = sadd.s32 %s244, %s245
        %s247 = smul.addr %s246, 4
        %s248 = scalar_lea.vmem %s0, %s247
        %p249 = pneg %p55
        %p250 = pneg %p52
        %p251 = pneg %p76
        %p252 = pneg %p73
        %p253 = pneg %p97
        %p254 = pneg %p94
        %p255 = pneg %p118
        %p256 = pneg %p115
        %p257 = pneg %p139
        %p258 = pneg %p136
        %p259 = pneg %p160
        %p260 = pneg %p157
        %p261 = pneg %p186
        %p262 = pneg %p183
        %s263 = sand.u32 %s173, 1
        %s264 = scalar_lea.sflag [#allocation4], %s263
        %s265 = sand.u32 %s173, 1
        %s266 = scalar_lea.vmem [#allocation3], %s265
        %s267 = smul.u32 32, %s25
        %p268 = scmp.lt.s32.totalorder %s24, 1
        %s269 = scalar_select %p268, %s24, 1
        %p270 = scmp.lt.s32.totalorder %s267, 31
        %s271 = scalar_select %p270, %s267, 31
        %s272 = smul.addr %s269, 32
        %s273 = sadd.s32 %s271, %s272
        %s274 = smul.addr %s273, 4
        %s275 = scalar_lea.vmem %s0, %s274
        %s276 = smul.u32 32, %s25
        %p278 = scmp.eq.s32.totalorder %s25, 0
        // Predicated region
        $region45: #{classify_forward.1} parent=43 // pred_check
          %p279 = pneg %p278
        $region46: #{classify_forward.1} parent=43 // pred_check_branch
          %281 = sbr.rel (%p279) target = $region48
        $region47: #{classify_forward.1} parent=43 // pred_region
          %282 = vst [vmem:[#allocation2] sm:$0xff] 0.0
          %v283 = vlaneseq
          %vm284 = vcmp.ge.s32.totalorder %v283, 0
          %vm285 = vcmp.lt.s32.totalorder %v283, 256
          %vm286 = vmand %vm284, %vm285
          %287 = vst.msk [vmem:[#allocation2 + $0x8] sm:$0x3] %vm286, 0.0
        $region48: #{classify_forward.1} parent=43 // pred_fallthru
          _
        %v288 = vld [vmem:[%s275] sm:$0xf]
        %v289 = vld [vmem:[%s275 + $0x4] sm:$0xf]
        %v290 = vld [vmem:[%s275 + $0x8] sm:$0xf]
        %v291 = vld [vmem:[%s275 + $0xc] sm:$0xf]
        %v292 = vld [vmem:[%s275 + $0x10] sm:$0xf]
        %v293 = vld [vmem:[%s275 + $0x14] sm:$0xf]
        %v294 = vld [vmem:[%s275 + $0x18] sm:$0xf]
        %v295 = vld [vmem:[%s275 + $0x1c] sm:$0xf]
        %v296 = vld [vmem:[%s275 + $0x20] sm:$0xf]
        %v297 = vld [vmem:[%s275 + $0x24] sm:$0xf]
        %v298 = vld [vmem:[%s275 + $0x28] sm:$0xf]
        %v299 = vld [vmem:[%s275 + $0x2c] sm:$0xf]
        %v300 = vld [vmem:[%s275 + $0x30] sm:$0xf]
        %v301 = vld [vmem:[%s275 + $0x34] sm:$0xf]
        %v302 = vld [vmem:[%s275 + $0x38] sm:$0xf]
        %v303 = vld [vmem:[%s275 + $0x3c] sm:$0xf]
        %v304 = vld [vmem:[%s275 + $0x40] sm:$0xf]
        %v305 = vld [vmem:[%s275 + $0x44] sm:$0xf]
        %v306 = vld [vmem:[%s275 + $0x48] sm:$0xf]
        %v307 = vld [vmem:[%s275 + $0x4c] sm:$0xf]
        %v308 = vld [vmem:[%s275 + $0x50] sm:$0xf]
        %v309 = vld [vmem:[%s275 + $0x54] sm:$0xf]
        %v310 = vld [vmem:[%s275 + $0x58] sm:$0xf]
        %v311 = vld [vmem:[%s275 + $0x5c] sm:$0xf]
        %v312 = vld [vmem:[%s275 + $0x60] sm:$0xf]
        %v313 = vld [vmem:[%s275 + $0x64] sm:$0xf]
        %v314 = vld [vmem:[%s275 + $0x68] sm:$0xf]
        %v315 = vld [vmem:[%s275 + $0x6c] sm:$0xf]
        %v316 = vld [vmem:[%s275 + $0x70] sm:$0xf]
        %v317 = vld [vmem:[%s275 + $0x74] sm:$0xf]
        %v318 = vld [vmem:[%s275 + $0x78] sm:$0xf]
        %v319 = vld [vmem:[%s275 + $0x7c] sm:$0xf]
        %v320 = vld [vmem:[%s1] sm:$0xff]
        %v321 = vld [vmem:[%s1 + $0x8] sm:$0xff]
        %v322 = vld [vmem:[%s1 + $0x10] sm:$0xff]
        %v323 = vld [vmem:[%s1 + $0x18] sm:$0xff]
        %v324 = vld [vmem:[%s1 + $0x20] sm:$0xff]
        %v325 = vld [vmem:[%s1 + $0x28] sm:$0xff]
        %v326 = vld [vmem:[%s1 + $0x30] sm:$0xff]
        %v327 = vld [vmem:[%s1 + $0x38] sm:$0xff]
        %v328 = vld [vmem:[%s1 + $0x40] sm:$0xff]
        %v329 = vld [vmem:[%s1 + $0x48] sm:$0xff]
        %v330 = vld [vmem:[%s1 + $0x50] sm:$0xff]
        %v331 = vld [vmem:[%s1 + $0x58] sm:$0xff]
        %v332 = vld [vmem:[%s1 + $0x60] sm:$0xff]
        %v333 = vld [vmem:[%s1 + $0x68] sm:$0xff]
        %v334 = vld [vmem:[%s1 + $0x70] sm:$0xff]
        %v335 = vld [vmem:[%s1 + $0x78] sm:$0xff]
        %v336 = vld [vmem:[%s1 + $0x80] sm:$0xff]
        %v337 = vld [vmem:[%s1 + $0x88] sm:$0xff]
        %v338 = vld [vmem:[%s1 + $0x90] sm:$0xff]
        %v339 = vld [vmem:[%s1 + $0x98] sm:$0xff]
        %v340 = vld [vmem:[%s1 + $0xa0] sm:$0xff]
        %v341 = vld [vmem:[%s1 + $0xa8] sm:$0xff]
        %v342 = vld [vmem:[%s1 + $0xb0] sm:$0xff]
        %v343 = vld [vmem:[%s1 + $0xb8] sm:$0xff]
        %v344 = vld [vmem:[%s1 + $0xc0] sm:$0xff]
        %v345 = vld [vmem:[%s1 + $0xc8] sm:$0xff]
        %v346 = vld [vmem:[%s1 + $0xd0] sm:$0xff]
        %v347 = vld [vmem:[%s1 + $0xd8] sm:$0xff]
        %v348 = vld [vmem:[%s1 + $0xe0] sm:$0xff]
        %v349 = vld [vmem:[%s1 + $0xe8] sm:$0xff]
        %v350 = vld [vmem:[%s1 + $0xf0] sm:$0xff]
        %v351 = vld [vmem:[%s1 + $0xf8] sm:$0xff]
        %v352 = vld [vmem:[%s1 + $0x100] sm:$0xff]
        %v353 = vld [vmem:[%s1 + $0x108] sm:$0xff]
        %v354 = vld [vmem:[%s1 + $0x110] sm:$0xff]
        %v355 = vld [vmem:[%s1 + $0x118] sm:$0xff]
        %v356 = vld [vmem:[%s1 + $0x120] sm:$0xff]
        %v357 = vld [vmem:[%s1 + $0x128] sm:$0xff]
        %v358 = vld [vmem:[%s1 + $0x130] sm:$0xff]
        %v359 = vld [vmem:[%s1 + $0x138] sm:$0xff]
        %v360 = vld [vmem:[%s1 + $0x140] sm:$0xff]
        %v361 = vld [vmem:[%s1 + $0x148] sm:$0xff]
        %v362 = vld [vmem:[%s1 + $0x150] sm:$0xff]
        %v363 = vld [vmem:[%s1 + $0x158] sm:$0xff]
        %v364 = vld [vmem:[%s1 + $0x160] sm:$0xff]
        %v365 = vld [vmem:[%s1 + $0x168] sm:$0xff]
        %v366 = vld [vmem:[%s1 + $0x170] sm:$0xff]
        %v367 = vld [vmem:[%s1 + $0x178] sm:$0xff]
        %v368 = vld [vmem:[%s1 + $0x180] sm:$0xff]
        %v369 = vld [vmem:[%s1 + $0x188] sm:$0xff]
        %v370 = vld [vmem:[%s1 + $0x190] sm:$0xff]
        %v371 = vld [vmem:[%s1 + $0x198] sm:$0xff]
        %v372 = vld [vmem:[%s1 + $0x1a0] sm:$0xff]
        %v373 = vld [vmem:[%s1 + $0x1a8] sm:$0xff]
        %v374 = vld [vmem:[%s1 + $0x1b0] sm:$0xff]
        %v375 = vld [vmem:[%s1 + $0x1b8] sm:$0xff]
        %v376 = vld [vmem:[%s1 + $0x1c0] sm:$0xff]
        %v377 = vld [vmem:[%s1 + $0x1c8] sm:$0xff]
        %v378 = vld [vmem:[%s1 + $0x1d0] sm:$0xff]
        %v379 = vld [vmem:[%s1 + $0x1d8] sm:$0xff]
        %v380 = vld [vmem:[%s1 + $0x1e0] sm:$0xff]
        %v381 = vld [vmem:[%s1 + $0x1e8] sm:$0xff]
        %v382 = vld [vmem:[%s1 + $0x1f0] sm:$0xff]
        %v383 = vld [vmem:[%s1 + $0x1f8] sm:$0xff]
        %v384 = vld [vmem:[%s1 + $0x200] sm:$0xff]
        %v385 = vld [vmem:[%s1 + $0x208] sm:$0xff]
        %v386 = vld [vmem:[%s1 + $0x210] sm:$0xff]
        %v387 = vld [vmem:[%s1 + $0x218] sm:$0xff]
        %v388 = vld [vmem:[%s1 + $0x220] sm:$0xff]
        %v389 = vld [vmem:[%s1 + $0x228] sm:$0xff]
        %v390 = vld [vmem:[%s1 + $0x230] sm:$0xff]
        %v391 = vld [vmem:[%s1 + $0x238] sm:$0xff]
        %v392 = vld [vmem:[%s1 + $0x240] sm:$0xff]
        %v393 = vld [vmem:[%s1 + $0x248] sm:$0xff]
        %v394 = vld [vmem:[%s1 + $0x250] sm:$0xff]
        %v395 = vld [vmem:[%s1 + $0x258] sm:$0xff]
        %v396 = vld [vmem:[%s1 + $0x260] sm:$0xff]
        %v397 = vld [vmem:[%s1 + $0x268] sm:$0xff]
        %v398 = vld [vmem:[%s1 + $0x270] sm:$0xff]
        %v399 = vld [vmem:[%s1 + $0x278] sm:$0xff]
        %v432 = vunpack.c.l.b16 %v288
        %v433 = vunpack.c.l.b16 %v289
        %v434 = vunpack.c.l.b16 %v290
        %v435 = vunpack.c.l.b16 %v291
        %v436 = vunpack.c.l.b16 %v292
        %v437 = vunpack.c.l.b16 %v293
        %v438 = vunpack.c.l.b16 %v294
        %v439 = vunpack.c.l.b16 %v295
        %v440 = vunpack.c.l.b16 %v296
        %v441 = vunpack.c.l.b16 %v297
        %v442 = vunpack.c.l.b16 %v298
        %v443 = vunpack.c.l.b16 %v299
        %v444 = vunpack.c.l.b16 %v300
        %v445 = vunpack.c.l.b16 %v301
        %v446 = vunpack.c.l.b16 %v302
        %v447 = vunpack.c.l.b16 %v303
        %v448 = vunpack.c.l.b16 %v304
        %v449 = vunpack.c.l.b16 %v305
        %v450 = vunpack.c.l.b16 %v306
        %v451 = vunpack.c.l.b16 %v307
        %v452 = vunpack.c.l.b16 %v308
        %v453 = vunpack.c.l.b16 %v309
        %v454 = vunpack.c.l.b16 %v310
        %v455 = vunpack.c.l.b16 %v311
        %v456 = vunpack.c.l.b16 %v312
        %v457 = vunpack.c.l.b16 %v313
        %v458 = vunpack.c.l.b16 %v314
        %v459 = vunpack.c.l.b16 %v315
        %v460 = vunpack.c.l.b16 %v316
        %v461 = vunpack.c.l.b16 %v317
        %v462 = vunpack.c.l.b16 %v318
        %v463 = vunpack.c.l.b16 %v319
        %v464 = vpack.c.b16 %v433, %v432
        %v465 = vpack.c.b16 %v435, %v434
        %v466 = vpack.c.b16 %v437, %v436
        %v467 = vpack.c.b16 %v439, %v438
        %v468 = vpack.c.b16 %v441, %v440
        %v469 = vpack.c.b16 %v443, %v442
        %v470 = vpack.c.b16 %v445, %v444
        %v471 = vpack.c.b16 %v447, %v446
        %v472 = vpack.c.b16 %v449, %v448
        %v473 = vpack.c.b16 %v451, %v450
        %v474 = vpack.c.b16 %v453, %v452
        %v475 = vpack.c.b16 %v455, %v454
        %v476 = vpack.c.b16 %v457, %v456
        %v477 = vpack.c.b16 %v459, %v458
        %v478 = vpack.c.b16 %v461, %v460
        %v479 = vpack.c.b16 %v463, %v462
        %v576 = vunpack.c.l.b16 %v320
        %v577 = vunpack.c.h.b16 %v320
        %v578 = vunpack.c.l.b16 %v321
        %v579 = vunpack.c.h.b16 %v321
        %v580 = vunpack.c.l.b16 %v322
        %v581 = vunpack.c.h.b16 %v322
        %v582 = vunpack.c.l.b16 %v323
        %v583 = vunpack.c.h.b16 %v323
        %v584 = vunpack.c.l.b16 %v324
        %v585 = vunpack.c.h.b16 %v324
        %v586 = vunpack.c.l.b16 %v325
        %v587 = vunpack.c.h.b16 %v325
        %v588 = vunpack.c.l.b16 %v326
        %v589 = vunpack.c.h.b16 %v326
        %v590 = vunpack.c.l.b16 %v327
        %v591 = vunpack.c.h.b16 %v327
        %v592 = vunpack.c.l.b16 %v328
        %v593 = vunpack.c.h.b16 %v328
        %v594 = vunpack.c.l.b16 %v329
        %v595 = vunpack.c.h.b16 %v329
        %v596 = vunpack.c.l.b16 %v330
        %v597 = vunpack.c.h.b16 %v330
        %v598 = vunpack.c.l.b16 %v331
        %v599 = vunpack.c.h.b16 %v331
        %v600 = vunpack.c.l.b16 %v332
        %v601 = vunpack.c.h.b16 %v332
        %v602 = vunpack.c.l.b16 %v333
        %v603 = vunpack.c.h.b16 %v333
        %v604 = vunpack.c.l.b16 %v334
        %v605 = vunpack.c.h.b16 %v334
        %v606 = vunpack.c.l.b16 %v335
        %v607 = vunpack.c.h.b16 %v335
        %v608 = vunpack.c.l.b16 %v336
        %v609 = vunpack.c.h.b16 %v336
        %v610 = vunpack.c.l.b16 %v337
        %v611 = vunpack.c.h.b16 %v337
        %v612 = vunpack.c.l.b16 %v338
        %v613 = vunpack.c.h.b16 %v338
        %v614 = vunpack.c.l.b16 %v339
        %v615 = vunpack.c.h.b16 %v339
        %v616 = vunpack.c.l.b16 %v340
        %v617 = vunpack.c.h.b16 %v340
        %v618 = vunpack.c.l.b16 %v341
        %v619 = vunpack.c.h.b16 %v341
        %v620 = vunpack.c.l.b16 %v342
        %v621 = vunpack.c.h.b16 %v342
        %v622 = vunpack.c.l.b16 %v343
        %v623 = vunpack.c.h.b16 %v343
        %v624 = vunpack.c.l.b16 %v344
        %v625 = vunpack.c.h.b16 %v344
        %v626 = vunpack.c.l.b16 %v345
        %v627 = vunpack.c.h.b16 %v345
        %v628 = vunpack.c.l.b16 %v346
        %v629 = vunpack.c.h.b16 %v346
        %v630 = vunpack.c.l.b16 %v347
        %v631 = vunpack.c.h.b16 %v347
        %v632 = vunpack.c.l.b16 %v348
        %v633 = vunpack.c.h.b16 %v348
        %v634 = vunpack.c.l.b16 %v349
        %v635 = vunpack.c.h.b16 %v349
        %v636 = vunpack.c.l.b16 %v350
        %v637 = vunpack.c.h.b16 %v350
        %v638 = vunpack.c.l.b16 %v351
        %v639 = vunpack.c.h.b16 %v351
        %v640 = vunpack.c.l.b16 %v352
        %v641 = vunpack.c.h.b16 %v352
        %v642 = vunpack.c.l.b16 %v353
        %v643 = vunpack.c.h.b16 %v353
        %v644 = vunpack.c.l.b16 %v354
        %v645 = vunpack.c.h.b16 %v354
        %v646 = vunpack.c.l.b16 %v355
        %v647 = vunpack.c.h.b16 %v355
        %v648 = vunpack.c.l.b16 %v356
        %v649 = vunpack.c.h.b16 %v356
        %v650 = vunpack.c.l.b16 %v357
        %v651 = vunpack.c.h.b16 %v357
        %v652 = vunpack.c.l.b16 %v358
        %v653 = vunpack.c.h.b16 %v358
        %v654 = vunpack.c.l.b16 %v359
        %v655 = vunpack.c.h.b16 %v359
        %v656 = vunpack.c.l.b16 %v360
        %v657 = vunpack.c.h.b16 %v360
        %v658 = vunpack.c.l.b16 %v361
        %v659 = vunpack.c.h.b16 %v361
        %v660 = vunpack.c.l.b16 %v362
        %v661 = vunpack.c.h.b16 %v362
        %v662 = vunpack.c.l.b16 %v363
        %v663 = vunpack.c.h.b16 %v363
        %v664 = vunpack.c.l.b16 %v364
        %v665 = vunpack.c.h.b16 %v364
        %v666 = vunpack.c.l.b16 %v365
        %v667 = vunpack.c.h.b16 %v365
        %v668 = vunpack.c.l.b16 %v366
        %v669 = vunpack.c.h.b16 %v366
        %v670 = vunpack.c.l.b16 %v367
        %v671 = vunpack.c.h.b16 %v367
        %v672 = vunpack.c.l.b16 %v368
        %v673 = vunpack.c.h.b16 %v368
        %v674 = vunpack.c.l.b16 %v369
        %v675 = vunpack.c.h.b16 %v369
        %v676 = vunpack.c.l.b16 %v370
        %v677 = vunpack.c.h.b16 %v370
        %v678 = vunpack.c.l.b16 %v371
        %v679 = vunpack.c.h.b16 %v371
        %v680 = vunpack.c.l.b16 %v372
        %v681 = vunpack.c.h.b16 %v372
        %v682 = vunpack.c.l.b16 %v373
        %v683 = vunpack.c.h.b16 %v373
        %v684 = vunpack.c.l.b16 %v374
        %v685 = vunpack.c.h.b16 %v374
        %v686 = vunpack.c.l.b16 %v375
        %v687 = vunpack.c.h.b16 %v375
        %v688 = vunpack.c.l.b16 %v376
        %v689 = vunpack.c.h.b16 %v376
        %v690 = vunpack.c.l.b16 %v377
        %v691 = vunpack.c.h.b16 %v377
        %v692 = vunpack.c.l.b16 %v378
        %v693 = vunpack.c.h.b16 %v378
        %v694 = vunpack.c.l.b16 %v379
        %v695 = vunpack.c.h.b16 %v379
        %v696 = vunpack.c.l.b16 %v380
        %v697 = vunpack.c.h.b16 %v380
        %v698 = vunpack.c.l.b16 %v381
        %v699 = vunpack.c.h.b16 %v381
        %v700 = vunpack.c.l.b16 %v382
        %v701 = vunpack.c.h.b16 %v382
        %v702 = vunpack.c.l.b16 %v383
        %v703 = vunpack.c.h.b16 %v383
        %v704 = vunpack.c.l.b16 %v384
        %v705 = vunpack.c.h.b16 %v384
        %v706 = vunpack.c.l.b16 %v385
        %v707 = vunpack.c.h.b16 %v385
        %v708 = vunpack.c.l.b16 %v386
        %v709 = vunpack.c.h.b16 %v386
        %v710 = vunpack.c.l.b16 %v387
        %v711 = vunpack.c.h.b16 %v387
        %v712 = vunpack.c.l.b16 %v388
        %v713 = vunpack.c.h.b16 %v388
        %v714 = vunpack.c.l.b16 %v389
        %v715 = vunpack.c.h.b16 %v389
        %v716 = vunpack.c.l.b16 %v390
        %v717 = vunpack.c.h.b16 %v390
        %v718 = vunpack.c.l.b16 %v391
        %v719 = vunpack.c.h.b16 %v391
        %v720 = vunpack.c.l.b16 %v392
        %v721 = vunpack.c.h.b16 %v392
        %v722 = vunpack.c.l.b16 %v393
        %v723 = vunpack.c.h.b16 %v393
        %v724 = vunpack.c.l.b16 %v394
        %v725 = vunpack.c.h.b16 %v394
        %v726 = vunpack.c.l.b16 %v395
        %v727 = vunpack.c.h.b16 %v395
        %v728 = vunpack.c.l.b16 %v396
        %v729 = vunpack.c.h.b16 %v396
        %v730 = vunpack.c.l.b16 %v397
        %v731 = vunpack.c.h.b16 %v397
        %v732 = vunpack.c.l.b16 %v398
        %v733 = vunpack.c.h.b16 %v398
        %v734 = vunpack.c.l.b16 %v399
        %v735 = vunpack.c.h.b16 %v399
        %v736 = vpack.c.b16 %v586, %v576
        %v737 = vpack.c.b16 %v587, %v577
        %v738 = vpack.c.b16 %v588, %v578
        %v739 = vpack.c.b16 %v589, %v579
        %v740 = vpack.c.b16 %v590, %v580
        %v741 = vpack.c.b16 %v591, %v581
        %v742 = vpack.c.b16 %v592, %v582
        %v743 = vpack.c.b16 %v593, %v583
        %v744 = vpack.c.b16 %v594, %v584
        %v745 = vpack.c.b16 %v595, %v585
        %v746 = vpack.c.b16 %v606, %v596
        %v747 = vpack.c.b16 %v607, %v597
        %v748 = vpack.c.b16 %v608, %v598
        %v749 = vpack.c.b16 %v609, %v599
        %v750 = vpack.c.b16 %v610, %v600
        %v751 = vpack.c.b16 %v611, %v601
        %v752 = vpack.c.b16 %v612, %v602
        %v753 = vpack.c.b16 %v613, %v603
        %v754 = vpack.c.b16 %v614, %v604
        %v755 = vpack.c.b16 %v615, %v605
        %v756 = vpack.c.b16 %v626, %v616
        %v757 = vpack.c.b16 %v627, %v617
        %v758 = vpack.c.b16 %v628, %v618
        %v759 = vpack.c.b16 %v629, %v619
        %v760 = vpack.c.b16 %v630, %v620
        %v761 = vpack.c.b16 %v631, %v621
        %v762 = vpack.c.b16 %v632, %v622
        %v763 = vpack.c.b16 %v633, %v623
        %v764 = vpack.c.b16 %v634, %v624
        %v765 = vpack.c.b16 %v635, %v625
        %v766 = vpack.c.b16 %v646, %v636
        %v767 = vpack.c.b16 %v647, %v637
        %v768 = vpack.c.b16 %v648, %v638
        %v769 = vpack.c.b16 %v649, %v639
        %v770 = vpack.c.b16 %v650, %v640
        %v771 = vpack.c.b16 %v651, %v641
        %v772 = vpack.c.b16 %v652, %v642
        %v773 = vpack.c.b16 %v653, %v643
        %v774 = vpack.c.b16 %v654, %v644
        %v775 = vpack.c.b16 %v655, %v645
        %v776 = vpack.c.b16 %v666, %v656
        %v777 = vpack.c.b16 %v667, %v657
        %v778 = vpack.c.b16 %v668, %v658
        %v779 = vpack.c.b16 %v669, %v659
        %v780 = vpack.c.b16 %v670, %v660
        %v781 = vpack.c.b16 %v671, %v661
        %v782 = vpack.c.b16 %v672, %v662
        %v783 = vpack.c.b16 %v673, %v663
        %v784 = vpack.c.b16 %v674, %v664
        %v785 = vpack.c.b16 %v675, %v665
        %v786 = vpack.c.b16 %v686, %v676
        %v787 = vpack.c.b16 %v687, %v677
        %v788 = vpack.c.b16 %v688, %v678
        %v789 = vpack.c.b16 %v689, %v679
        %v790 = vpack.c.b16 %v690, %v680
        %v791 = vpack.c.b16 %v691, %v681
        %v792 = vpack.c.b16 %v692, %v682
        %v793 = vpack.c.b16 %v693, %v683
        %v794 = vpack.c.b16 %v694, %v684
        %v795 = vpack.c.b16 %v695, %v685
        %v796 = vpack.c.b16 %v706, %v696
        %v797 = vpack.c.b16 %v707, %v697
        %v798 = vpack.c.b16 %v708, %v698
        %v799 = vpack.c.b16 %v709, %v699
        %v800 = vpack.c.b16 %v710, %v700
        %v801 = vpack.c.b16 %v711, %v701
        %v802 = vpack.c.b16 %v712, %v702
        %v803 = vpack.c.b16 %v713, %v703
        %v804 = vpack.c.b16 %v714, %v704
        %v805 = vpack.c.b16 %v715, %v705
        %v806 = vpack.c.b16 %v726, %v716
        %v807 = vpack.c.b16 %v727, %v717
        %v808 = vpack.c.b16 %v728, %v718
        %v809 = vpack.c.b16 %v729, %v719
        %v810 = vpack.c.b16 %v730, %v720
        %v811 = vpack.c.b16 %v731, %v721
        %v812 = vpack.c.b16 %v732, %v722
        %v813 = vpack.c.b16 %v733, %v723
        %v814 = vpack.c.b16 %v734, %v724
        %v815 = vpack.c.b16 %v735, %v725
        %896 = vmatprep.subr.bf16.mxu0 %v807
        %897 = vmatpush1.bf16.msra.mxu0 %v806
        %898 = vmatprep.subr.bf16.mxu0 %v797
        %899 = vmatpush1.bf16.msra.mxu0 %v796
        %900 = vmatprep.subr.bf16.mxu0 %v787
        %901 = vmatpush1.bf16.msra.mxu0 %v786
        %902 = vmatprep.subr.bf16.mxu0 %v777
        %903 = vmatpush1.bf16.msra.mxu0 %v776
        %904 = vmatprep.subr.bf16.mxu0 %v767
        %905 = vmatpush1.bf16.msra.mxu0 %v766
        %906 = vmatprep.subr.bf16.mxu0 %v757
        %907 = vmatpush1.bf16.msra.mxu0 %v756
        %908 = vmatprep.subr.bf16.mxu0 %v747
        %909 = vmatpush1.bf16.msra.mxu0 %v746
        %910 = vmatprep.subr.bf16.mxu0 %v737
        %911 = vmatpush1.bf16.msra.mxu0 %v736
        %912 = vmatprep.subr.bf16.mxu0 0
        %913 = vmatpush2.bf16.msra.mxu0 0
        %914 = vmatprep.subr.bf16.mxu0 0
        %915 = vmatpush2.bf16.msra.mxu0 0
        %916 = vmatprep.subr.bf16.mxu0 0
        %917 = vmatpush2.bf16.msra.mxu0 0
        %918 = vmatprep.subr.bf16.mxu0 0
        %919 = vmatpush2.bf16.msra.mxu0 0
        %920 = vmatprep.subr.bf16.mxu0 0
        %921 = vmatpush2.bf16.msra.mxu0 0
        %922 = vmatprep.subr.bf16.mxu0 0
        %923 = vmatpush2.bf16.msra.mxu0 0
        %924 = vmatprep.subr.bf16.mxu0 0
        %925 = vmatpush2.bf16.msra.mxu0 0
        %926 = vmatprep.subr.bf16.mxu0 0
        %927 = vmatpush2.bf16.msra.mxu0 0
        %928 = vmatprep.mubr.bf16.mxu0 0
        %929 = vmatmul.mubr.bf16.gmra.mxu0 %v464
        %v930 = vpop.f32.mrf.mxu0
        %v931 = vadd.f32 0.0, %v930
        %v932 = vpop.f32.mrf.mxu0
        %v933 = vadd.f32 0.0, %v932
        %v934 = vpop.f32.mrf.mxu0
        %v935 = vadd.f32 0.0, %v934
        %v936 = vpop.f32.mrf.mxu0
        %v937 = vadd.f32 0.0, %v936
        %938 = vmatprep.mubr.bf16.mxu0 0
        %939 = vmatmul.mubr.bf16.gmra.mxu0 %v465
        %v940 = vpop.f32.mrf.mxu0
        %v941 = vadd.f32 0.0, %v940
        %v942 = vpop.f32.mrf.mxu0
        %v943 = vadd.f32 0.0, %v942
        %v944 = vpop.f32.mrf.mxu0
        %v945 = vadd.f32 0.0, %v944
        %v946 = vpop.f32.mrf.mxu0
        %v947 = vadd.f32 0.0, %v946
        %948 = vmatprep.mubr.bf16.mxu0 0
        %949 = vmatmul.mubr.bf16.gmra.mxu0 %v466
        %v950 = vpop.f32.mrf.mxu0
        %v951 = vadd.f32 0.0, %v950
        %v952 = vpop.f32.mrf.mxu0
        %v953 = vadd.f32 0.0, %v952
        %v954 = vpop.f32.mrf.mxu0
        %v955 = vadd.f32 0.0, %v954
        %v956 = vpop.f32.mrf.mxu0
        %v957 = vadd.f32 0.0, %v956
        %958 = vmatprep.mubr.bf16.mxu0 0
        %959 = vmatmul.mubr.bf16.gmra.mxu0 %v467
        %v960 = vpop.f32.mrf.mxu0
        %v961 = vadd.f32 0.0, %v960
        %v962 = vpop.f32.mrf.mxu0
        %v963 = vadd.f32 0.0, %v962
        %v964 = vpop.f32.mrf.mxu0
        %v965 = vadd.f32 0.0, %v964
        %v966 = vpop.f32.mrf.mxu0
        %v967 = vadd.f32 0.0, %v966
        %968 = vmatprep.mubr.bf16.mxu0 0
        %969 = vmatmul.mubr.bf16.gmra.mxu0 %v468
        %v970 = vpop.f32.mrf.mxu0
        %v971 = vadd.f32 0.0, %v970
        %v972 = vpop.f32.mrf.mxu0
        %v973 = vadd.f32 0.0, %v972
        %v974 = vpop.f32.mrf.mxu0
        %v975 = vadd.f32 0.0, %v974
        %v976 = vpop.f32.mrf.mxu0
        %v977 = vadd.f32 0.0, %v976
        %978 = vmatprep.mubr.bf16.mxu0 0
        %979 = vmatmul.mubr.bf16.gmra.mxu0 %v469
        %v980 = vpop.f32.mrf.mxu0
        %v981 = vadd.f32 0.0, %v980
        %v982 = vpop.f32.mrf.mxu0
        %v983 = vadd.f32 0.0, %v982
        %v984 = vpop.f32.mrf.mxu0
        %v985 = vadd.f32 0.0, %v984
        %v986 = vpop.f32.mrf.mxu0
        %v987 = vadd.f32 0.0, %v986
        %988 = vmatprep.mubr.bf16.mxu0 0
        %989 = vmatmul.mubr.bf16.gmra.mxu0 %v470
        %v990 = vpop.f32.mrf.mxu0
        %v991 = vadd.f32 0.0, %v990
        %v992 = vpop.f32.mrf.mxu0
        %v993 = vadd.f32 0.0, %v992
        %v994 = vpop.f32.mrf.mxu0
        %v995 = vadd.f32 0.0, %v994
        %v996 = vpop.f32.mrf.mxu0
        %v997 = vadd.f32 0.0, %v996
        %998 = vmatprep.mubr.bf16.mxu0 0
        %999 = vmatmul.mubr.bf16.gmra.mxu0 %v471
        %v1000 = vpop.f32.mrf.mxu0
        %v1001 = vadd.f32 0.0, %v1000
        %v1002 = vpop.f32.mrf.mxu0
        %v1003 = vadd.f32 0.0, %v1002
        %v1004 = vpop.f32.mrf.mxu0
        %v1005 = vadd.f32 0.0, %v1004
        %v1006 = vpop.f32.mrf.mxu0
        %v1007 = vadd.f32 0.0, %v1006
        %1008 = vmatprep.mubr.bf16.mxu0 0
        %1009 = vmatmul.mubr.bf16.gmra.mxu0 %v472
        %v1010 = vpop.f32.mrf.mxu0
        %v1011 = vadd.f32 0.0, %v1010
        %v1012 = vpop.f32.mrf.mxu0
        %v1013 = vadd.f32 0.0, %v1012
        %v1014 = vpop.f32.mrf.mxu0
        %v1015 = vadd.f32 0.0, %v1014
        %v1016 = vpop.f32.mrf.mxu0
        %v1017 = vadd.f32 0.0, %v1016
        %1018 = vmatprep.mubr.bf16.mxu0 0
        %1019 = vmatmul.mubr.bf16.gmra.mxu0 %v473
        %v1020 = vpop.f32.mrf.mxu0
        %v1021 = vadd.f32 0.0, %v1020
        %v1022 = vpop.f32.mrf.mxu0
        %v1023 = vadd.f32 0.0, %v1022
        %v1024 = vpop.f32.mrf.mxu0
        %v1025 = vadd.f32 0.0, %v1024
        %v1026 = vpop.f32.mrf.mxu0
        %v1027 = vadd.f32 0.0, %v1026
        %1028 = vmatprep.mubr.bf16.mxu0 0
        %1029 = vmatmul.mubr.bf16.gmra.mxu0 %v474
        %v1030 = vpop.f32.mrf.mxu0
        %v1031 = vadd.f32 0.0, %v1030
        %v1032 = vpop.f32.mrf.mxu0
        %v1033 = vadd.f32 0.0, %v1032
        %v1034 = vpop.f32.mrf.mxu0
        %v1035 = vadd.f32 0.0, %v1034
        %v1036 = vpop.f32.mrf.mxu0
        %v1037 = vadd.f32 0.0, %v1036
        %1038 = vmatprep.mubr.bf16.mxu0 0
        %1039 = vmatmul.mubr.bf16.gmra.mxu0 %v475
        %v1040 = vpop.f32.mrf.mxu0
        %v1041 = vadd.f32 0.0, %v1040
        %v1042 = vpop.f32.mrf.mxu0
        %v1043 = vadd.f32 0.0, %v1042
        %v1044 = vpop.f32.mrf.mxu0
        %v1045 = vadd.f32 0.0, %v1044
        %v1046 = vpop.f32.mrf.mxu0
        %v1047 = vadd.f32 0.0, %v1046
        %1048 = vmatprep.mubr.bf16.mxu0 0
        %1049 = vmatmul.mubr.bf16.gmra.mxu0 %v476
        %v1050 = vpop.f32.mrf.mxu0
        %v1051 = vadd.f32 0.0, %v1050
        %v1052 = vpop.f32.mrf.mxu0
        %v1053 = vadd.f32 0.0, %v1052
        %v1054 = vpop.f32.mrf.mxu0
        %v1055 = vadd.f32 0.0, %v1054
        %v1056 = vpop.f32.mrf.mxu0
        %v1057 = vadd.f32 0.0, %v1056
        %1058 = vmatprep.mubr.bf16.mxu0 0
        %1059 = vmatmul.mubr.bf16.gmra.mxu0 %v477
        %v1060 = vpop.f32.mrf.mxu0
        %v1061 = vadd.f32 0.0, %v1060
        %v1062 = vpop.f32.mrf.mxu0
        %v1063 = vadd.f32 0.0, %v1062
        %v1064 = vpop.f32.mrf.mxu0
        %v1065 = vadd.f32 0.0, %v1064
        %v1066 = vpop.f32.mrf.mxu0
        %v1067 = vadd.f32 0.0, %v1066
        %1068 = vmatprep.mubr.bf16.mxu0 0
        %1069 = vmatmul.mubr.bf16.gmra.mxu0 %v478
        %v1070 = vpop.f32.mrf.mxu0
        %v1071 = vadd.f32 0.0, %v1070
        %v1072 = vpop.f32.mrf.mxu0
        %v1073 = vadd.f32 0.0, %v1072
        %v1074 = vpop.f32.mrf.mxu0
        %v1075 = vadd.f32 0.0, %v1074
        %v1076 = vpop.f32.mrf.mxu0
        %v1077 = vadd.f32 0.0, %v1076
        %1078 = vmatprep.mubr.bf16.mxu0 0
        %1079 = vmatmul.mubr.bf16.gmra.mxu0 %v479
        %v1080 = vpop.f32.mrf.mxu0
        %v1081 = vadd.f32 0.0, %v1080
        %v1082 = vpop.f32.mrf.mxu0
        %v1083 = vadd.f32 0.0, %v1082
        %v1084 = vpop.f32.mrf.mxu0
        %v1085 = vadd.f32 0.0, %v1084
        %v1086 = vpop.f32.mrf.mxu0
        %v1087 = vadd.f32 0.0, %v1086
        %1088 = vdwg.mxu0
        %1089 = vmatprep.subr.bf16.mxu0 %v809
        %1090 = vmatpush1.bf16.msra.mxu0 %v808
        %1091 = vmatprep.subr.bf16.mxu0 %v799
        %1092 = vmatpush1.bf16.msra.mxu0 %v798
        %1093 = vmatprep.subr.bf16.mxu0 %v789
        %1094 = vmatpush1.bf16.msra.mxu0 %v788
        %1095 = vmatprep.subr.bf16.mxu0 %v779
        %1096 = vmatpush1.bf16.msra.mxu0 %v778
        %1097 = vmatprep.subr.bf16.mxu0 %v769
        %1098 = vmatpush1.bf16.msra.mxu0 %v768
        %1099 = vmatprep.subr.bf16.mxu0 %v759
        %1100 = vmatpush1.bf16.msra.mxu0 %v758
        %1101 = vmatprep.subr.bf16.mxu0 %v749
        %1102 = vmatpush1.bf16.msra.mxu0 %v748
        %1103 = vmatprep.subr.bf16.mxu0 %v739
        %1104 = vmatpush1.bf16.msra.mxu0 %v738
        %1105 = vmatprep.subr.bf16.mxu0 0
        %1106 = vmatpush2.bf16.msra.mxu0 0
        %1107 = vmatprep.subr.bf16.mxu0 0
        %1108 = vmatpush2.bf16.msra.mxu0 0
        %1109 = vmatprep.subr.bf16.mxu0 0
        %1110 = vmatpush2.bf16.msra.mxu0 0
        %1111 = vmatprep.subr.bf16.mxu0 0
        %1112 = vmatpush2.bf16.msra.mxu0 0
        %1113 = vmatprep.subr.bf16.mxu0 0
        %1114 = vmatpush2.bf16.msra.mxu0 0
        %1115 = vmatprep.subr.bf16.mxu0 0
        %1116 = vmatpush2.bf16.msra.mxu0 0
        %1117 = vmatprep.subr.bf16.mxu0 0
        %1118 = vmatpush2.bf16.msra.mxu0 0
        %1119 = vmatprep.subr.bf16.mxu0 0
        %1120 = vmatpush2.bf16.msra.mxu0 0
        %1121 = vmatprep.mubr.bf16.mxu0 0
        %1122 = vmatmul.mubr.bf16.gmra.mxu0 %v464
        %v1123 = vpop.f32.mrf.mxu0
        %v1124 = vadd.f32 0.0, %v1123
        %v1125 = vpop.f32.mrf.mxu0
        %v1126 = vadd.f32 0.0, %v1125
        %v1127 = vpop.f32.mrf.mxu0
        %v1128 = vadd.f32 0.0, %v1127
        %v1129 = vpop.f32.mrf.mxu0
        %v1130 = vadd.f32 0.0, %v1129
        %1131 = vmatprep.mubr.bf16.mxu0 0
        %1132 = vmatmul.mubr.bf16.gmra.mxu0 %v465
        %v1133 = vpop.f32.mrf.mxu0
        %v1134 = vadd.f32 0.0, %v1133
        %v1135 = vpop.f32.mrf.mxu0
        %v1136 = vadd.f32 0.0, %v1135
        %v1137 = vpop.f32.mrf.mxu0
        %v1138 = vadd.f32 0.0, %v1137
        %v1139 = vpop.f32.mrf.mxu0
        %v1140 = vadd.f32 0.0, %v1139
        %1141 = vmatprep.mubr.bf16.mxu0 0
        %1142 = vmatmul.mubr.bf16.gmra.mxu0 %v466
        %v1143 = vpop.f32.mrf.mxu0
        %v1144 = vadd.f32 0.0, %v1143
        %v1145 = vpop.f32.mrf.mxu0
        %v1146 = vadd.f32 0.0, %v1145
        %v1147 = vpop.f32.mrf.mxu0
        %v1148 = vadd.f32 0.0, %v1147
        %v1149 = vpop.f32.mrf.mxu0
        %v1150 = vadd.f32 0.0, %v1149
        %1151 = vmatprep.mubr.bf16.mxu0 0
        %1152 = vmatmul.mubr.bf16.gmra.mxu0 %v467
        %v1153 = vpop.f32.mrf.mxu0
        %v1154 = vadd.f32 0.0, %v1153
        %v1155 = vpop.f32.mrf.mxu0
        %v1156 = vadd.f32 0.0, %v1155
        %v1157 = vpop.f32.mrf.mxu0
        %v1158 = vadd.f32 0.0, %v1157
        %v1159 = vpop.f32.mrf.mxu0
        %v1160 = vadd.f32 0.0, %v1159
        %1161 = vmatprep.mubr.bf16.mxu0 0
        %1162 = vmatmul.mubr.bf16.gmra.mxu0 %v468
        %v1163 = vpop.f32.mrf.mxu0
        %v1164 = vadd.f32 0.0, %v1163
        %v1165 = vpop.f32.mrf.mxu0
        %v1166 = vadd.f32 0.0, %v1165
        %v1167 = vpop.f32.mrf.mxu0
        %v1168 = vadd.f32 0.0, %v1167
        %v1169 = vpop.f32.mrf.mxu0
        %v1170 = vadd.f32 0.0, %v1169
        %1171 = vmatprep.mubr.bf16.mxu0 0
        %1172 = vmatmul.mubr.bf16.gmra.mxu0 %v469
        %v1173 = vpop.f32.mrf.mxu0
        %v1174 = vadd.f32 0.0, %v1173
        %v1175 = vpop.f32.mrf.mxu0
        %v1176 = vadd.f32 0.0, %v1175
        %v1177 = vpop.f32.mrf.mxu0
        %v1178 = vadd.f32 0.0, %v1177
        %v1179 = vpop.f32.mrf.mxu0
        %v1180 = vadd.f32 0.0, %v1179
        %1181 = vmatprep.mubr.bf16.mxu0 0
        %1182 = vmatmul.mubr.bf16.gmra.mxu0 %v470
        %v1183 = vpop.f32.mrf.mxu0
        %v1184 = vadd.f32 0.0, %v1183
        %v1185 = vpop.f32.mrf.mxu0
        %v1186 = vadd.f32 0.0, %v1185
        %v1187 = vpop.f32.mrf.mxu0
        %v1188 = vadd.f32 0.0, %v1187
        %v1189 = vpop.f32.mrf.mxu0
        %v1190 = vadd.f32 0.0, %v1189
        %1191 = vmatprep.mubr.bf16.mxu0 0
        %1192 = vmatmul.mubr.bf16.gmra.mxu0 %v471
        %v1193 = vpop.f32.mrf.mxu0
        %v1194 = vadd.f32 0.0, %v1193
        %v1195 = vpop.f32.mrf.mxu0
        %v1196 = vadd.f32 0.0, %v1195
        %v1197 = vpop.f32.mrf.mxu0
        %v1198 = vadd.f32 0.0, %v1197
        %v1199 = vpop.f32.mrf.mxu0
        %v1200 = vadd.f32 0.0, %v1199
        %1201 = vmatprep.mubr.bf16.mxu0 0
        %1202 = vmatmul.mubr.bf16.gmra.mxu0 %v472
        %v1203 = vpop.f32.mrf.mxu0
        %v1204 = vadd.f32 0.0, %v1203
        %v1205 = vpop.f32.mrf.mxu0
        %v1206 = vadd.f32 0.0, %v1205
        %v1207 = vpop.f32.mrf.mxu0
        %v1208 = vadd.f32 0.0, %v1207
        %v1209 = vpop.f32.mrf.mxu0
        %v1210 = vadd.f32 0.0, %v1209
        %1211 = vmatprep.mubr.bf16.mxu0 0
        %1212 = vmatmul.mubr.bf16.gmra.mxu0 %v473
        %v1213 = vpop.f32.mrf.mxu0
        %v1214 = vadd.f32 0.0, %v1213
        %v1215 = vpop.f32.mrf.mxu0
        %v1216 = vadd.f32 0.0, %v1215
        %v1217 = vpop.f32.mrf.mxu0
        %v1218 = vadd.f32 0.0, %v1217
        %v1219 = vpop.f32.mrf.mxu0
        %v1220 = vadd.f32 0.0, %v1219
        %1221 = vmatprep.mubr.bf16.mxu0 0
        %1222 = vmatmul.mubr.bf16.gmra.mxu0 %v474
        %v1223 = vpop.f32.mrf.mxu0
        %v1224 = vadd.f32 0.0, %v1223
        %v1225 = vpop.f32.mrf.mxu0
        %v1226 = vadd.f32 0.0, %v1225
        %v1227 = vpop.f32.mrf.mxu0
        %v1228 = vadd.f32 0.0, %v1227
        %v1229 = vpop.f32.mrf.mxu0
        %v1230 = vadd.f32 0.0, %v1229
        %1231 = vmatprep.mubr.bf16.mxu0 0
        %1232 = vmatmul.mubr.bf16.gmra.mxu0 %v475
        %v1233 = vpop.f32.mrf.mxu0
        %v1234 = vadd.f32 0.0, %v1233
        %v1235 = vpop.f32.mrf.mxu0
        %v1236 = vadd.f32 0.0, %v1235
        %v1237 = vpop.f32.mrf.mxu0
        %v1238 = vadd.f32 0.0, %v1237
        %v1239 = vpop.f32.mrf.mxu0
        %v1240 = vadd.f32 0.0, %v1239
        %1241 = vmatprep.mubr.bf16.mxu0 0
        %1242 = vmatmul.mubr.bf16.gmra.mxu0 %v476
        %v1243 = vpop.f32.mrf.mxu0
        %v1244 = vadd.f32 0.0, %v1243
        %v1245 = vpop.f32.mrf.mxu0
        %v1246 = vadd.f32 0.0, %v1245
        %v1247 = vpop.f32.mrf.mxu0
        %v1248 = vadd.f32 0.0, %v1247
        %v1249 = vpop.f32.mrf.mxu0
        %v1250 = vadd.f32 0.0, %v1249
        %1251 = vmatprep.mubr.bf16.mxu0 0
        %1252 = vmatmul.mubr.bf16.gmra.mxu0 %v477
        %v1253 = vpop.f32.mrf.mxu0
        %v1254 = vadd.f32 0.0, %v1253
        %v1255 = vpop.f32.mrf.mxu0
        %v1256 = vadd.f32 0.0, %v1255
        %v1257 = vpop.f32.mrf.mxu0
        %v1258 = vadd.f32 0.0, %v1257
        %v1259 = vpop.f32.mrf.mxu0
        %v1260 = vadd.f32 0.0, %v1259
        %1261 = vmatprep.mubr.bf16.mxu0 0
        %1262 = vmatmul.mubr.bf16.gmra.mxu0 %v478
        %v1263 = vpop.f32.mrf.mxu0
        %v1264 = vadd.f32 0.0, %v1263
        %v1265 = vpop.f32.mrf.mxu0
        %v1266 = vadd.f32 0.0, %v1265
        %v1267 = vpop.f32.mrf.mxu0
        %v1268 = vadd.f32 0.0, %v1267
        %v1269 = vpop.f32.mrf.mxu0
        %v1270 = vadd.f32 0.0, %v1269
        %1271 = vmatprep.mubr.bf16.mxu0 0
        %1272 = vmatmul.mubr.bf16.gmra.mxu0 %v479
        %v1273 = vpop.f32.mrf.mxu0
        %v1274 = vadd.f32 0.0, %v1273
        %v1275 = vpop.f32.mrf.mxu0
        %v1276 = vadd.f32 0.0, %v1275
        %v1277 = vpop.f32.mrf.mxu0
        %v1278 = vadd.f32 0.0, %v1277
        %v1279 = vpop.f32.mrf.mxu0
        %v1280 = vadd.f32 0.0, %v1279
        %1281 = vdwg.mxu0
        %1282 = vmatprep.subr.bf16.mxu0 %v811
        %1283 = vmatpush1.bf16.msra.mxu0 %v810
        %1284 = vmatprep.subr.bf16.mxu0 %v801
        %1285 = vmatpush1.bf16.msra.mxu0 %v800
        %1286 = vmatprep.subr.bf16.mxu0 %v791
        %1287 = vmatpush1.bf16.msra.mxu0 %v790
        %1288 = vmatprep.subr.bf16.mxu0 %v781
        %1289 = vmatpush1.bf16.msra.mxu0 %v780
        %1290 = vmatprep.subr.bf16.mxu0 %v771
        %1291 = vmatpush1.bf16.msra.mxu0 %v770
        %1292 = vmatprep.subr.bf16.mxu0 %v761
        %1293 = vmatpush1.bf16.msra.mxu0 %v760
        %1294 = vmatprep.subr.bf16.mxu0 %v751
        %1295 = vmatpush1.bf16.msra.mxu0 %v750
        %1296 = vmatprep.subr.bf16.mxu0 %v741
        %1297 = vmatpush1.bf16.msra.mxu0 %v740
        %1298 = vmatprep.subr.bf16.mxu0 0
        %1299 = vmatpush2.bf16.msra.mxu0 0
        %1300 = vmatprep.subr.bf16.mxu0 0
        %1301 = vmatpush2.bf16.msra.mxu0 0
        %1302 = vmatprep.subr.bf16.mxu0 0
        %1303 = vmatpush2.bf16.msra.mxu0 0
        %1304 = vmatprep.subr.bf16.mxu0 0
        %1305 = vmatpush2.bf16.msra.mxu0 0
        %1306 = vmatprep.subr.bf16.mxu0 0
        %1307 = vmatpush2.bf16.msra.mxu0 0
        %1308 = vmatprep.subr.bf16.mxu0 0
        %1309 = vmatpush2.bf16.msra.mxu0 0
        %1310 = vmatprep.subr.bf16.mxu0 0
        %1311 = vmatpush2.bf16.msra.mxu0 0
        %1312 = vmatprep.subr.bf16.mxu0 0
        %1313 = vmatpush2.bf16.msra.mxu0 0
        %1314 = vmatprep.mubr.bf16.mxu0 0
        %1315 = vmatmul.mubr.bf16.gmra.mxu0 %v464
        %v1316 = vpop.f32.mrf.mxu0
        %v1317 = vadd.f32 0.0, %v1316
        %v1318 = vpop.f32.mrf.mxu0
        %v1319 = vadd.f32 0.0, %v1318
        %v1320 = vpop.f32.mrf.mxu0
        %v1321 = vadd.f32 0.0, %v1320
        %v1322 = vpop.f32.mrf.mxu0
        %v1323 = vadd.f32 0.0, %v1322
        %1324 = vmatprep.mubr.bf16.mxu0 0
        %1325 = vmatmul.mubr.bf16.gmra.mxu0 %v465
        %v1326 = vpop.f32.mrf.mxu0
        %v1327 = vadd.f32 0.0, %v1326
        %v1328 = vpop.f32.mrf.mxu0
        %v1329 = vadd.f32 0.0, %v1328
        %v1330 = vpop.f32.mrf.mxu0
        %v1331 = vadd.f32 0.0, %v1330
        %v1332 = vpop.f32.mrf.mxu0
        %v1333 = vadd.f32 0.0, %v1332
        %1334 = vmatprep.mubr.bf16.mxu0 0
        %1335 = vmatmul.mubr.bf16.gmra.mxu0 %v466
        %v1336 = vpop.f32.mrf.mxu0
        %v1337 = vadd.f32 0.0, %v1336
        %v1338 = vpop.f32.mrf.mxu0
        %v1339 = vadd.f32 0.0, %v1338
        %v1340 = vpop.f32.mrf.mxu0
        %v1341 = vadd.f32 0.0, %v1340
        %v1342 = vpop.f32.mrf.mxu0
        %v1343 = vadd.f32 0.0, %v1342
        %1344 = vmatprep.mubr.bf16.mxu0 0
        %1345 = vmatmul.mubr.bf16.gmra.mxu0 %v467
        %v1346 = vpop.f32.mrf.mxu0
        %v1347 = vadd.f32 0.0, %v1346
        %v1348 = vpop.f32.mrf.mxu0
        %v1349 = vadd.f32 0.0, %v1348
        %v1350 = vpop.f32.mrf.mxu0
        %v1351 = vadd.f32 0.0, %v1350
        %v1352 = vpop.f32.mrf.mxu0
        %v1353 = vadd.f32 0.0, %v1352
        %1354 = vmatprep.mubr.bf16.mxu0 0
        %1355 = vmatmul.mubr.bf16.gmra.mxu0 %v468
        %v1356 = vpop.f32.mrf.mxu0
        %v1357 = vadd.f32 0.0, %v1356
        %v1358 = vpop.f32.mrf.mxu0
        %v1359 = vadd.f32 0.0, %v1358
        %v1360 = vpop.f32.mrf.mxu0
        %v1361 = vadd.f32 0.0, %v1360
        %v1362 = vpop.f32.mrf.mxu0
        %v1363 = vadd.f32 0.0, %v1362
        %1364 = vmatprep.mubr.bf16.mxu0 0
        %1365 = vmatmul.mubr.bf16.gmra.mxu0 %v469
        %v1366 = vpop.f32.mrf.mxu0
        %v1367 = vadd.f32 0.0, %v1366
        %v1368 = vpop.f32.mrf.mxu0
        %v1369 = vadd.f32 0.0, %v1368
        %v1370 = vpop.f32.mrf.mxu0
        %v1371 = vadd.f32 0.0, %v1370
        %v1372 = vpop.f32.mrf.mxu0
        %v1373 = vadd.f32 0.0, %v1372
        %1374 = vmatprep.mubr.bf16.mxu0 0
        %1375 = vmatmul.mubr.bf16.gmra.mxu0 %v470
        %v1376 = vpop.f32.mrf.mxu0
        %v1377 = vadd.f32 0.0, %v1376
        %v1378 = vpop.f32.mrf.mxu0
        %v1379 = vadd.f32 0.0, %v1378
        %v1380 = vpop.f32.mrf.mxu0
        %v1381 = vadd.f32 0.0, %v1380
        %v1382 = vpop.f32.mrf.mxu0
        %v1383 = vadd.f32 0.0, %v1382
        %1384 = vmatprep.mubr.bf16.mxu0 0
        %1385 = vmatmul.mubr.bf16.gmra.mxu0 %v471
        %v1386 = vpop.f32.mrf.mxu0
        %v1387 = vadd.f32 0.0, %v1386
        %v1388 = vpop.f32.mrf.mxu0
        %v1389 = vadd.f32 0.0, %v1388
        %v1390 = vpop.f32.mrf.mxu0
        %v1391 = vadd.f32 0.0, %v1390
        %v1392 = vpop.f32.mrf.mxu0
        %v1393 = vadd.f32 0.0, %v1392
        %1394 = vmatprep.mubr.bf16.mxu0 0
        %1395 = vmatmul.mubr.bf16.gmra.mxu0 %v472
        %v1396 = vpop.f32.mrf.mxu0
        %v1397 = vadd.f32 0.0, %v1396
        %v1398 = vpop.f32.mrf.mxu0
        %v1399 = vadd.f32 0.0, %v1398
        %v1400 = vpop.f32.mrf.mxu0
        %v1401 = vadd.f32 0.0, %v1400
        %v1402 = vpop.f32.mrf.mxu0
        %v1403 = vadd.f32 0.0, %v1402
        %1404 = vmatprep.mubr.bf16.mxu0 0
        %1405 = vmatmul.mubr.bf16.gmra.mxu0 %v473
        %v1406 = vpop.f32.mrf.mxu0
        %v1407 = vadd.f32 0.0, %v1406
        %v1408 = vpop.f32.mrf.mxu0
        %v1409 = vadd.f32 0.0, %v1408
        %v1410 = vpop.f32.mrf.mxu0
        %v1411 = vadd.f32 0.0, %v1410
        %v1412 = vpop.f32.mrf.mxu0
        %v1413 = vadd.f32 0.0, %v1412
        %1414 = vmatprep.mubr.bf16.mxu0 0
        %1415 = vmatmul.mubr.bf16.gmra.mxu0 %v474
        %v1416 = vpop.f32.mrf.mxu0
        %v1417 = vadd.f32 0.0, %v1416
        %v1418 = vpop.f32.mrf.mxu0
        %v1419 = vadd.f32 0.0, %v1418
        %v1420 = vpop.f32.mrf.mxu0
        %v1421 = vadd.f32 0.0, %v1420
        %v1422 = vpop.f32.mrf.mxu0
        %v1423 = vadd.f32 0.0, %v1422
        %1424 = vmatprep.mubr.bf16.mxu0 0
        %1425 = vmatmul.mubr.bf16.gmra.mxu0 %v475
        %v1426 = vpop.f32.mrf.mxu0
        %v1427 = vadd.f32 0.0, %v1426
        %v1428 = vpop.f32.mrf.mxu0
        %v1429 = vadd.f32 0.0, %v1428
        %v1430 = vpop.f32.mrf.mxu0
        %v1431 = vadd.f32 0.0, %v1430
        %v1432 = vpop.f32.mrf.mxu0
        %v1433 = vadd.f32 0.0, %v1432
        %1434 = vmatprep.mubr.bf16.mxu0 0
        %1435 = vmatmul.mubr.bf16.gmra.mxu0 %v476
        %v1436 = vpop.f32.mrf.mxu0
        %v1437 = vadd.f32 0.0, %v1436
        %v1438 = vpop.f32.mrf.mxu0
        %v1439 = vadd.f32 0.0, %v1438
        %v1440 = vpop.f32.mrf.mxu0
        %v1441 = vadd.f32 0.0, %v1440
        %v1442 = vpop.f32.mrf.mxu0
        %v1443 = vadd.f32 0.0, %v1442
        %1444 = vmatprep.mubr.bf16.mxu0 0
        %1445 = vmatmul.mubr.bf16.gmra.mxu0 %v477
        %v1446 = vpop.f32.mrf.mxu0
        %v1447 = vadd.f32 0.0, %v1446
        %v1448 = vpop.f32.mrf.mxu0
        %v1449 = vadd.f32 0.0, %v1448
        %v1450 = vpop.f32.mrf.mxu0
        %v1451 = vadd.f32 0.0, %v1450
        %v1452 = vpop.f32.mrf.mxu0
        %v1453 = vadd.f32 0.0, %v1452
        %1454 = vmatprep.mubr.bf16.mxu0 0
        %1455 = vmatmul.mubr.bf16.gmra.mxu0 %v478
        %v1456 = vpop.f32.mrf.mxu0
        %v1457 = vadd.f32 0.0, %v1456
        %v1458 = vpop.f32.mrf.mxu0
        %v1459 = vadd.f32 0.0, %v1458
        %v1460 = vpop.f32.mrf.mxu0
        %v1461 = vadd.f32 0.0, %v1460
        %v1462 = vpop.f32.mrf.mxu0
        %v1463 = vadd.f32 0.0, %v1462
        %1464 = vmatprep.mubr.bf16.mxu0 0
        %1465 = vmatmul.mubr.bf16.gmra.mxu0 %v479
        %v1466 = vpop.f32.mrf.mxu0
        %v1467 = vadd.f32 0.0, %v1466
        %v1468 = vpop.f32.mrf.mxu0
        %v1469 = vadd.f32 0.0, %v1468
        %v1470 = vpop.f32.mrf.mxu0
        %v1471 = vadd.f32 0.0, %v1470
        %v1472 = vpop.f32.mrf.mxu0
        %v1473 = vadd.f32 0.0, %v1472
        %1474 = vdwg.mxu0
        %1475 = vmatprep.subr.bf16.mxu0 %v813
        %1476 = vmatpush1.bf16.msra.mxu0 %v812
        %1477 = vmatprep.subr.bf16.mxu0 %v803
        %1478 = vmatpush1.bf16.msra.mxu0 %v802
        %1479 = vmatprep.subr.bf16.mxu0 %v793
        %1480 = vmatpush1.bf16.msra.mxu0 %v792
        %1481 = vmatprep.subr.bf16.mxu0 %v783
        %1482 = vmatpush1.bf16.msra.mxu0 %v782
        %1483 = vmatprep.subr.bf16.mxu0 %v773
        %1484 = vmatpush1.bf16.msra.mxu0 %v772
        %1485 = vmatprep.subr.bf16.mxu0 %v763
        %1486 = vmatpush1.bf16.msra.mxu0 %v762
        %1487 = vmatprep.subr.bf16.mxu0 %v753
        %1488 = vmatpush1.bf16.msra.mxu0 %v752
        %1489 = vmatprep.subr.bf16.mxu0 %v743
        %1490 = vmatpush1.bf16.msra.mxu0 %v742
        %1491 = vmatprep.subr.bf16.mxu0 0
        %1492 = vmatpush2.bf16.msra.mxu0 0
        %1493 = vmatprep.subr.bf16.mxu0 0
        %1494 = vmatpush2.bf16.msra.mxu0 0
        %1495 = vmatprep.subr.bf16.mxu0 0
        %1496 = vmatpush2.bf16.msra.mxu0 0
        %1497 = vmatprep.subr.bf16.mxu0 0
        %1498 = vmatpush2.bf16.msra.mxu0 0
        %1499 = vmatprep.subr.bf16.mxu0 0
        %1500 = vmatpush2.bf16.msra.mxu0 0
        %1501 = vmatprep.subr.bf16.mxu0 0
        %1502 = vmatpush2.bf16.msra.mxu0 0
        %1503 = vmatprep.subr.bf16.mxu0 0
        %1504 = vmatpush2.bf16.msra.mxu0 0
        %1505 = vmatprep.subr.bf16.mxu0 0
        %1506 = vmatpush2.bf16.msra.mxu0 0
        %1507 = vmatprep.mubr.bf16.mxu0 0
        %1508 = vmatmul.mubr.bf16.gmra.mxu0 %v464
        %v1509 = vpop.f32.mrf.mxu0
        %v1510 = vadd.f32 0.0, %v1509
        %v1511 = vpop.f32.mrf.mxu0
        %v1512 = vadd.f32 0.0, %v1511
        %v1513 = vpop.f32.mrf.mxu0
        %v1514 = vadd.f32 0.0, %v1513
        %v1515 = vpop.f32.mrf.mxu0
        %v1516 = vadd.f32 0.0, %v1515
        %1517 = vmatprep.mubr.bf16.mxu0 0
        %1518 = vmatmul.mubr.bf16.gmra.mxu0 %v465
        %v1519 = vpop.f32.mrf.mxu0
        %v1520 = vadd.f32 0.0, %v1519
        %v1521 = vpop.f32.mrf.mxu0
        %v1522 = vadd.f32 0.0, %v1521
        %v1523 = vpop.f32.mrf.mxu0
        %v1524 = vadd.f32 0.0, %v1523
        %v1525 = vpop.f32.mrf.mxu0
        %v1526 = vadd.f32 0.0, %v1525
        %1527 = vmatprep.mubr.bf16.mxu0 0
        %1528 = vmatmul.mubr.bf16.gmra.mxu0 %v466
        %v1529 = vpop.f32.mrf.mxu0
        %v1530 = vadd.f32 0.0, %v1529
        %v1531 = vpop.f32.mrf.mxu0
        %v1532 = vadd.f32 0.0, %v1531
        %v1533 = vpop.f32.mrf.mxu0
        %v1534 = vadd.f32 0.0, %v1533
        %v1535 = vpop.f32.mrf.mxu0
        %v1536 = vadd.f32 0.0, %v1535
        %1537 = vmatprep.mubr.bf16.mxu0 0
        %1538 = vmatmul.mubr.bf16.gmra.mxu0 %v467
        %v1539 = vpop.f32.mrf.mxu0
        %v1540 = vadd.f32 0.0, %v1539
        %v1541 = vpop.f32.mrf.mxu0
        %v1542 = vadd.f32 0.0, %v1541
        %v1543 = vpop.f32.mrf.mxu0
        %v1544 = vadd.f32 0.0, %v1543
        %v1545 = vpop.f32.mrf.mxu0
        %v1546 = vadd.f32 0.0, %v1545
        %1547 = vmatprep.mubr.bf16.mxu0 0
        %1548 = vmatmul.mubr.bf16.gmra.mxu0 %v468
        %v1549 = vpop.f32.mrf.mxu0
        %v1550 = vadd.f32 0.0, %v1549
        %v1551 = vpop.f32.mrf.mxu0
        %v1552 = vadd.f32 0.0, %v1551
        %v1553 = vpop.f32.mrf.mxu0
        %v1554 = vadd.f32 0.0, %v1553
        %v1555 = vpop.f32.mrf.mxu0
        %v1556 = vadd.f32 0.0, %v1555
        %1557 = vmatprep.mubr.bf16.mxu0 0
        %1558 = vmatmul.mubr.bf16.gmra.mxu0 %v469
        %v1559 = vpop.f32.mrf.mxu0
        %v1560 = vadd.f32 0.0, %v1559
        %v1561 = vpop.f32.mrf.mxu0
        %v1562 = vadd.f32 0.0, %v1561
        %v1563 = vpop.f32.mrf.mxu0
        %v1564 = vadd.f32 0.0, %v1563
        %v1565 = vpop.f32.mrf.mxu0
        %v1566 = vadd.f32 0.0, %v1565
        %1567 = vmatprep.mubr.bf16.mxu0 0
        %1568 = vmatmul.mubr.bf16.gmra.mxu0 %v470
        %v1569 = vpop.f32.mrf.mxu0
        %v1570 = vadd.f32 0.0, %v1569
        %v1571 = vpop.f32.mrf.mxu0
        %v1572 = vadd.f32 0.0, %v1571
        %v1573 = vpop.f32.mrf.mxu0
        %v1574 = vadd.f32 0.0, %v1573
        %v1575 = vpop.f32.mrf.mxu0
        %v1576 = vadd.f32 0.0, %v1575
        %1577 = vmatprep.mubr.bf16.mxu0 0
        %1578 = vmatmul.mubr.bf16.gmra.mxu0 %v471
        %v1579 = vpop.f32.mrf.mxu0
        %v1580 = vadd.f32 0.0, %v1579
        %v1581 = vpop.f32.mrf.mxu0
        %v1582 = vadd.f32 0.0, %v1581
        %v1583 = vpop.f32.mrf.mxu0
        %v1584 = vadd.f32 0.0, %v1583
        %v1585 = vpop.f32.mrf.mxu0
        %v1586 = vadd.f32 0.0, %v1585
        %1587 = vmatprep.mubr.bf16.mxu0 0
        %1588 = vmatmul.mubr.bf16.gmra.mxu0 %v472
        %v1589 = vpop.f32.mrf.mxu0
        %v1590 = vadd.f32 0.0, %v1589
        %v1591 = vpop.f32.mrf.mxu0
        %v1592 = vadd.f32 0.0, %v1591
        %v1593 = vpop.f32.mrf.mxu0
        %v1594 = vadd.f32 0.0, %v1593
        %v1595 = vpop.f32.mrf.mxu0
        %v1596 = vadd.f32 0.0, %v1595
        %1597 = vmatprep.mubr.bf16.mxu0 0
        %1598 = vmatmul.mubr.bf16.gmra.mxu0 %v473
        %v1599 = vpop.f32.mrf.mxu0
        %v1600 = vadd.f32 0.0, %v1599
        %v1601 = vpop.f32.mrf.mxu0
        %v1602 = vadd.f32 0.0, %v1601
        %v1603 = vpop.f32.mrf.mxu0
        %v1604 = vadd.f32 0.0, %v1603
        %v1605 = vpop.f32.mrf.mxu0
        %v1606 = vadd.f32 0.0, %v1605
        %1607 = vmatprep.mubr.bf16.mxu0 0
        %1608 = vmatmul.mubr.bf16.gmra.mxu0 %v474
        %v1609 = vpop.f32.mrf.mxu0
        %v1610 = vadd.f32 0.0, %v1609
        %v1611 = vpop.f32.mrf.mxu0
        %v1612 = vadd.f32 0.0, %v1611
        %v1613 = vpop.f32.mrf.mxu0
        %v1614 = vadd.f32 0.0, %v1613
        %v1615 = vpop.f32.mrf.mxu0
        %v1616 = vadd.f32 0.0, %v1615
        %1617 = vmatprep.mubr.bf16.mxu0 0
        %1618 = vmatmul.mubr.bf16.gmra.mxu0 %v475
        %v1619 = vpop.f32.mrf.mxu0
        %v1620 = vadd.f32 0.0, %v1619
        %v1621 = vpop.f32.mrf.mxu0
        %v1622 = vadd.f32 0.0, %v1621
        %v1623 = vpop.f32.mrf.mxu0
        %v1624 = vadd.f32 0.0, %v1623
        %v1625 = vpop.f32.mrf.mxu0
        %v1626 = vadd.f32 0.0, %v1625
        %1627 = vmatprep.mubr.bf16.mxu0 0
        %1628 = vmatmul.mubr.bf16.gmra.mxu0 %v476
        %v1629 = vpop.f32.mrf.mxu0
        %v1630 = vadd.f32 0.0, %v1629
        %v1631 = vpop.f32.mrf.mxu0
        %v1632 = vadd.f32 0.0, %v1631
        %v1633 = vpop.f32.mrf.mxu0
        %v1634 = vadd.f32 0.0, %v1633
        %v1635 = vpop.f32.mrf.mxu0
        %v1636 = vadd.f32 0.0, %v1635
        %1637 = vmatprep.mubr.bf16.mxu0 0
        %1638 = vmatmul.mubr.bf16.gmra.mxu0 %v477
        %v1639 = vpop.f32.mrf.mxu0
        %v1640 = vadd.f32 0.0, %v1639
        %v1641 = vpop.f32.mrf.mxu0
        %v1642 = vadd.f32 0.0, %v1641
        %v1643 = vpop.f32.mrf.mxu0
        %v1644 = vadd.f32 0.0, %v1643
        %v1645 = vpop.f32.mrf.mxu0
        %v1646 = vadd.f32 0.0, %v1645
        %1647 = vmatprep.mubr.bf16.mxu0 0
        %1648 = vmatmul.mubr.bf16.gmra.mxu0 %v478
        %v1649 = vpop.f32.mrf.mxu0
        %v1650 = vadd.f32 0.0, %v1649
        %v1651 = vpop.f32.mrf.mxu0
        %v1652 = vadd.f32 0.0, %v1651
        %v1653 = vpop.f32.mrf.mxu0
        %v1654 = vadd.f32 0.0, %v1653
        %v1655 = vpop.f32.mrf.mxu0
        %v1656 = vadd.f32 0.0, %v1655
        %1657 = vmatprep.mubr.bf16.mxu0 0
        %1658 = vmatmul.mubr.bf16.gmra.mxu0 %v479
        %v1659 = vpop.f32.mrf.mxu0
        %v1660 = vadd.f32 0.0, %v1659
        %v1661 = vpop.f32.mrf.mxu0
        %v1662 = vadd.f32 0.0, %v1661
        %v1663 = vpop.f32.mrf.mxu0
        %v1664 = vadd.f32 0.0, %v1663
        %v1665 = vpop.f32.mrf.mxu0
        %v1666 = vadd.f32 0.0, %v1665
        %1667 = vdwg.mxu0
        %1668 = vmatprep.subr.bf16.mxu0 %v815
        %1669 = vmatpush1.bf16.msra.mxu0 %v814
        %1670 = vmatprep.subr.bf16.mxu0 %v805
        %1671 = vmatpush1.bf16.msra.mxu0 %v804
        %1672 = vmatprep.subr.bf16.mxu0 %v795
        %1673 = vmatpush1.bf16.msra.mxu0 %v794
        %1674 = vmatprep.subr.bf16.mxu0 %v785
        %1675 = vmatpush1.bf16.msra.mxu0 %v784
        %1676 = vmatprep.subr.bf16.mxu0 %v775
        %1677 = vmatpush1.bf16.msra.mxu0 %v774
        %1678 = vmatprep.subr.bf16.mxu0 %v765
        %1679 = vmatpush1.bf16.msra.mxu0 %v764
        %1680 = vmatprep.subr.bf16.mxu0 %v755
        %1681 = vmatpush1.bf16.msra.mxu0 %v754
        %1682 = vmatprep.subr.bf16.mxu0 %v745
        %1683 = vmatpush1.bf16.msra.mxu0 %v744
        %1684 = vmatprep.subr.bf16.mxu0 0
        %1685 = vmatpush2.bf16.msra.mxu0 0
        %1686 = vmatprep.subr.bf16.mxu0 0
        %1687 = vmatpush2.bf16.msra.mxu0 0
        %1688 = vmatprep.subr.bf16.mxu0 0
        %1689 = vmatpush2.bf16.msra.mxu0 0
        %1690 = vmatprep.subr.bf16.mxu0 0
        %1691 = vmatpush2.bf16.msra.mxu0 0
        %1692 = vmatprep.subr.bf16.mxu0 0
        %1693 = vmatpush2.bf16.msra.mxu0 0
        %1694 = vmatprep.subr.bf16.mxu0 0
        %1695 = vmatpush2.bf16.msra.mxu0 0
        %1696 = vmatprep.subr.bf16.mxu0 0
        %1697 = vmatpush2.bf16.msra.mxu0 0
        %1698 = vmatprep.subr.bf16.mxu0 0
        %1699 = vmatpush2.bf16.msra.mxu0 0
        %1700 = vmatprep.mubr.bf16.mxu0 0
        %1701 = vmatmul.mubr.bf16.gmra.mxu0 %v464
        %v1702 = vpop.f32.mrf.mxu0
        %v1703 = vadd.f32 0.0, %v1702
        %v1704 = vpop.f32.mrf.mxu0
        %v1705 = vadd.f32 0.0, %v1704
        %v1706 = vpop.f32.mrf.mxu0
        %v1707 = vadd.f32 0.0, %v1706
        %v1708 = vpop.f32.mrf.mxu0
        %v1709 = vadd.f32 0.0, %v1708
        %1710 = vmatprep.mubr.bf16.mxu0 0
        %1711 = vmatmul.mubr.bf16.gmra.mxu0 %v465
        %v1712 = vpop.f32.mrf.mxu0
        %v1713 = vadd.f32 0.0, %v1712
        %v1714 = vpop.f32.mrf.mxu0
        %v1715 = vadd.f32 0.0, %v1714
        %v1716 = vpop.f32.mrf.mxu0
        %v1717 = vadd.f32 0.0, %v1716
        %v1718 = vpop.f32.mrf.mxu0
        %v1719 = vadd.f32 0.0, %v1718
        %1720 = vmatprep.mubr.bf16.mxu0 0
        %1721 = vmatmul.mubr.bf16.gmra.mxu0 %v466
        %v1722 = vpop.f32.mrf.mxu0
        %v1723 = vadd.f32 0.0, %v1722
        %v1724 = vpop.f32.mrf.mxu0
        %v1725 = vadd.f32 0.0, %v1724
        %v1726 = vpop.f32.mrf.mxu0
        %v1727 = vadd.f32 0.0, %v1726
        %v1728 = vpop.f32.mrf.mxu0
        %v1729 = vadd.f32 0.0, %v1728
        %1730 = vmatprep.mubr.bf16.mxu0 0
        %1731 = vmatmul.mubr.bf16.gmra.mxu0 %v467
        %v1732 = vpop.f32.mrf.mxu0
        %v1733 = vadd.f32 0.0, %v1732
        %v1734 = vpop.f32.mrf.mxu0
        %v1735 = vadd.f32 0.0, %v1734
        %v1736 = vpop.f32.mrf.mxu0
        %v1737 = vadd.f32 0.0, %v1736
        %v1738 = vpop.f32.mrf.mxu0
        %v1739 = vadd.f32 0.0, %v1738
        %1740 = vmatprep.mubr.bf16.mxu0 0
        %1741 = vmatmul.mubr.bf16.gmra.mxu0 %v468
        %v1742 = vpop.f32.mrf.mxu0
        %v1743 = vadd.f32 0.0, %v1742
        %v1744 = vpop.f32.mrf.mxu0
        %v1745 = vadd.f32 0.0, %v1744
        %v1746 = vpop.f32.mrf.mxu0
        %v1747 = vadd.f32 0.0, %v1746
        %v1748 = vpop.f32.mrf.mxu0
        %v1749 = vadd.f32 0.0, %v1748
        %1750 = vmatprep.mubr.bf16.mxu0 0
        %1751 = vmatmul.mubr.bf16.gmra.mxu0 %v469
        %v1752 = vpop.f32.mrf.mxu0
        %v1753 = vadd.f32 0.0, %v1752
        %v1754 = vpop.f32.mrf.mxu0
        %v1755 = vadd.f32 0.0, %v1754
        %v1756 = vpop.f32.mrf.mxu0
        %v1757 = vadd.f32 0.0, %v1756
        %v1758 = vpop.f32.mrf.mxu0
        %v1759 = vadd.f32 0.0, %v1758
        %1760 = vmatprep.mubr.bf16.mxu0 0
        %1761 = vmatmul.mubr.bf16.gmra.mxu0 %v470
        %v1762 = vpop.f32.mrf.mxu0
        %v1763 = vadd.f32 0.0, %v1762
        %v1764 = vpop.f32.mrf.mxu0
        %v1765 = vadd.f32 0.0, %v1764
        %v1766 = vpop.f32.mrf.mxu0
        %v1767 = vadd.f32 0.0, %v1766
        %v1768 = vpop.f32.mrf.mxu0
        %v1769 = vadd.f32 0.0, %v1768
        %1770 = vmatprep.mubr.bf16.mxu0 0
        %1771 = vmatmul.mubr.bf16.gmra.mxu0 %v471
        %v1772 = vpop.f32.mrf.mxu0
        %v1773 = vadd.f32 0.0, %v1772
        %v1774 = vpop.f32.mrf.mxu0
        %v1775 = vadd.f32 0.0, %v1774
        %v1776 = vpop.f32.mrf.mxu0
        %v1777 = vadd.f32 0.0, %v1776
        %v1778 = vpop.f32.mrf.mxu0
        %v1779 = vadd.f32 0.0, %v1778
        %1780 = vmatprep.mubr.bf16.mxu0 0
        %1781 = vmatmul.mubr.bf16.gmra.mxu0 %v472
        %v1782 = vpop.f32.mrf.mxu0
        %v1783 = vadd.f32 0.0, %v1782
        %v1784 = vpop.f32.mrf.mxu0
        %v1785 = vadd.f32 0.0, %v1784
        %v1786 = vpop.f32.mrf.mxu0
        %v1787 = vadd.f32 0.0, %v1786
        %v1788 = vpop.f32.mrf.mxu0
        %v1789 = vadd.f32 0.0, %v1788
        %1790 = vmatprep.mubr.bf16.mxu0 0
        %1791 = vmatmul.mubr.bf16.gmra.mxu0 %v473
        %v1792 = vpop.f32.mrf.mxu0
        %v1793 = vadd.f32 0.0, %v1792
        %v1794 = vpop.f32.mrf.mxu0
        %v1795 = vadd.f32 0.0, %v1794
        %v1796 = vpop.f32.mrf.mxu0
        %v1797 = vadd.f32 0.0, %v1796
        %v1798 = vpop.f32.mrf.mxu0
        %v1799 = vadd.f32 0.0, %v1798
        %1800 = vmatprep.mubr.bf16.mxu0 0
        %1801 = vmatmul.mubr.bf16.gmra.mxu0 %v474
        %v1802 = vpop.f32.mrf.mxu0
        %v1803 = vadd.f32 0.0, %v1802
        %v1804 = vpop.f32.mrf.mxu0
        %v1805 = vadd.f32 0.0, %v1804
        %v1806 = vpop.f32.mrf.mxu0
        %v1807 = vadd.f32 0.0, %v1806
        %v1808 = vpop.f32.mrf.mxu0
        %v1809 = vadd.f32 0.0, %v1808
        %1810 = vmatprep.mubr.bf16.mxu0 0
        %1811 = vmatmul.mubr.bf16.gmra.mxu0 %v475
        %v1812 = vpop.f32.mrf.mxu0
        %v1813 = vadd.f32 0.0, %v1812
        %v1814 = vpop.f32.mrf.mxu0
        %v1815 = vadd.f32 0.0, %v1814
        %v1816 = vpop.f32.mrf.mxu0
        %v1817 = vadd.f32 0.0, %v1816
        %v1818 = vpop.f32.mrf.mxu0
        %v1819 = vadd.f32 0.0, %v1818
        %1820 = vmatprep.mubr.bf16.mxu0 0
        %1821 = vmatmul.mubr.bf16.gmra.mxu0 %v476
        %v1822 = vpop.f32.mrf.mxu0
        %v1823 = vadd.f32 0.0, %v1822
        %v1824 = vpop.f32.mrf.mxu0
        %v1825 = vadd.f32 0.0, %v1824
        %v1826 = vpop.f32.mrf.mxu0
        %v1827 = vadd.f32 0.0, %v1826
        %v1828 = vpop.f32.mrf.mxu0
        %v1829 = vadd.f32 0.0, %v1828
        %1830 = vmatprep.mubr.bf16.mxu0 0
        %1831 = vmatmul.mubr.bf16.gmra.mxu0 %v477
        %v1832 = vpop.f32.mrf.mxu0
        %v1833 = vadd.f32 0.0, %v1832
        %v1834 = vpop.f32.mrf.mxu0
        %v1835 = vadd.f32 0.0, %v1834
        %v1836 = vpop.f32.mrf.mxu0
        %v1837 = vadd.f32 0.0, %v1836
        %v1838 = vpop.f32.mrf.mxu0
        %v1839 = vadd.f32 0.0, %v1838
        %1840 = vmatprep.mubr.bf16.mxu0 0
        %1841 = vmatmul.mubr.bf16.gmra.mxu0 %v478
        %v1842 = vpop.f32.mrf.mxu0
        %v1843 = vadd.f32 0.0, %v1842
        %v1844 = vpop.f32.mrf.mxu0
        %v1845 = vadd.f32 0.0, %v1844
        %v1846 = vpop.f32.mrf.mxu0
        %v1847 = vadd.f32 0.0, %v1846
        %v1848 = vpop.f32.mrf.mxu0
        %v1849 = vadd.f32 0.0, %v1848
        %1850 = vmatprep.mubr.bf16.mxu0 0
        %1851 = vmatmul.mubr.bf16.gmra.mxu0 %v479
        %v1852 = vpop.f32.mrf.mxu0
        %v1853 = vadd.f32 0.0, %v1852
        %v1854 = vpop.f32.mrf.mxu0
        %v1855 = vadd.f32 0.0, %v1854
        %v1856 = vpop.f32.mrf.mxu0
        %v1857 = vadd.f32 0.0, %v1856
        %v1858 = vpop.f32.mrf.mxu0
        %v1859 = vadd.f32 0.0, %v1858
        %1860 = vdwg.mxu0
        %v1861 = vld [vmem:[%s2] sm:$0xff]
        %v1862 = vld [vmem:[%s2 + $0x8] sm:$0x3]
        %v1865 = vlaneseq
        %v1866 = vshrl.u32 %v1865, 7
        %v1867 = vsub.s32 0, %v1866
        %v1868 = vrot.slane %v1861, %v1867
        %v1869 = vlaneseq
        %v1870 = vshrl.u32 %v1869, 7
        %v1871 = vsub.s32 1, %v1870
        %v1872 = vrot.slane %v1861, %v1871
        %v1873 = vlaneseq
        %v1874 = vshrl.u32 %v1873, 7
        %v1875 = vsub.s32 2, %v1874
        %v1876 = vrot.slane %v1861, %v1875
        %v1877 = vlaneseq
        %v1878 = vshrl.u32 %v1877, 7
        %v1879 = vsub.s32 3, %v1878
        %v1880 = vrot.slane %v1861, %v1879
        %v1881 = vlaneseq
        %v1882 = vshrl.u32 %v1881, 7
        %v1883 = vsub.s32 4, %v1882
        %v1884 = vrot.slane %v1861, %v1883
        %v1885 = vlaneseq
        %v1886 = vshrl.u32 %v1885, 7
        %v1887 = vsub.s32 5, %v1886
        %v1888 = vrot.slane %v1861, %v1887
        %v1889 = vlaneseq
        %v1890 = vshrl.u32 %v1889, 7
        %v1891 = vsub.s32 6, %v1890
        %v1892 = vrot.slane %v1861, %v1891
        %v1893 = vlaneseq
        %v1894 = vshrl.u32 %v1893, 7
        %v1895 = vsub.s32 7, %v1894
        %v1896 = vrot.slane %v1861, %v1895
        %v1897 = vlaneseq
        %v1898 = vshrl.u32 %v1897, 7
        %v1899 = vsub.s32 0, %v1898
        %v1900 = vrot.slane %v1862, %v1899
        %v1901 = vlaneseq
        %v1902 = vshrl.u32 %v1901, 7
        %v1903 = vsub.s32 1, %v1902
        %v1904 = vrot.slane %v1862, %v1903
        %v1915 = vmul.f32 %v931, %v1868
        %v1916 = vmul.f32 %v933, %v1872
        %v1917 = vmul.f32 %v1124, %v1876
        %v1918 = vmul.f32 %v1126, %v1880
        %v1919 = vmul.f32 %v1317, %v1884
        %v1920 = vmul.f32 %v1319, %v1888
        %v1921 = vmul.f32 %v1510, %v1892
        %v1922 = vmul.f32 %v1512, %v1896
        %v1923 = vmul.f32 %v1703, %v1900
        %v1924 = vmul.f32 %v1705, %v1904
        %v1925 = vmul.f32 %v935, %v1868
        %v1926 = vmul.f32 %v937, %v1872
        %v1927 = vmul.f32 %v1128, %v1876
        %v1928 = vmul.f32 %v1130, %v1880
        %v1929 = vmul.f32 %v1321, %v1884
        %v1930 = vmul.f32 %v1323, %v1888
        %v1931 = vmul.f32 %v1514, %v1892
        %v1932 = vmul.f32 %v1516, %v1896
        %v1933 = vmul.f32 %v1707, %v1900
        %v1934 = vmul.f32 %v1709, %v1904
        %v1935 = vmul.f32 %v941, %v1868
        %v1936 = vmul.f32 %v943, %v1872
        %v1937 = vmul.f32 %v1134, %v1876
        %v1938 = vmul.f32 %v1136, %v1880
        %v1939 = vmul.f32 %v1327, %v1884
        %v1940 = vmul.f32 %v1329, %v1888
        %v1941 = vmul.f32 %v1520, %v1892
        %v1942 = vmul.f32 %v1522, %v1896
        %v1943 = vmul.f32 %v1713, %v1900
        %v1944 = vmul.f32 %v1715, %v1904
        %v1945 = vmul.f32 %v945, %v1868
        %v1946 = vmul.f32 %v947, %v1872
        %v1947 = vmul.f32 %v1138, %v1876
        %v1948 = vmul.f32 %v1140, %v1880
        %v1949 = vmul.f32 %v1331, %v1884
        %v1950 = vmul.f32 %v1333, %v1888
        %v1951 = vmul.f32 %v1524, %v1892
        %v1952 = vmul.f32 %v1526, %v1896
        %v1953 = vmul.f32 %v1717, %v1900
        %v1954 = vmul.f32 %v1719, %v1904
        %v1955 = vmul.f32 %v951, %v1868
        %v1956 = vmul.f32 %v953, %v1872
        %v1957 = vmul.f32 %v1144, %v1876
        %v1958 = vmul.f32 %v1146, %v1880
        %v1959 = vmul.f32 %v1337, %v1884
        %v1960 = vmul.f32 %v1339, %v1888
        %v1961 = vmul.f32 %v1530, %v1892
        %v1962 = vmul.f32 %v1532, %v1896
        %v1963 = vmul.f32 %v1723, %v1900
        %v1964 = vmul.f32 %v1725, %v1904
        %v1965 = vmul.f32 %v955, %v1868
        %v1966 = vmul.f32 %v957, %v1872
        %v1967 = vmul.f32 %v1148, %v1876
        %v1968 = vmul.f32 %v1150, %v1880
        %v1969 = vmul.f32 %v1341, %v1884
        %v1970 = vmul.f32 %v1343, %v1888
        %v1971 = vmul.f32 %v1534, %v1892
        %v1972 = vmul.f32 %v1536, %v1896
        %v1973 = vmul.f32 %v1727, %v1900
        %v1974 = vmul.f32 %v1729, %v1904
        %v1975 = vmul.f32 %v961, %v1868
        %v1976 = vmul.f32 %v963, %v1872
        %v1977 = vmul.f32 %v1154, %v1876
        %v1978 = vmul.f32 %v1156, %v1880
        %v1979 = vmul.f32 %v1347, %v1884
        %v1980 = vmul.f32 %v1349, %v1888
        %v1981 = vmul.f32 %v1540, %v1892
        %v1982 = vmul.f32 %v1542, %v1896
        %v1983 = vmul.f32 %v1733, %v1900
        %v1984 = vmul.f32 %v1735, %v1904
        %v1985 = vmul.f32 %v965, %v1868
        %v1986 = vmul.f32 %v967, %v1872
        %v1987 = vmul.f32 %v1158, %v1876
        %v1988 = vmul.f32 %v1160, %v1880
        %v1989 = vmul.f32 %v1351, %v1884
        %v1990 = vmul.f32 %v1353, %v1888
        %v1991 = vmul.f32 %v1544, %v1892
        %v1992 = vmul.f32 %v1546, %v1896
        %v1993 = vmul.f32 %v1737, %v1900
        %v1994 = vmul.f32 %v1739, %v1904
        %v1995 = vmul.f32 %v971, %v1868
        %v1996 = vmul.f32 %v973, %v1872
        %v1997 = vmul.f32 %v1164, %v1876
        %v1998 = vmul.f32 %v1166, %v1880
        %v1999 = vmul.f32 %v1357, %v1884
        %v2000 = vmul.f32 %v1359, %v1888
        %v2001 = vmul.f32 %v1550, %v1892
        %v2002 = vmul.f32 %v1552, %v1896
        %v2003 = vmul.f32 %v1743, %v1900
        %v2004 = vmul.f32 %v1745, %v1904
        %v2005 = vmul.f32 %v975, %v1868
        %v2006 = vmul.f32 %v977, %v1872
        %v2007 = vmul.f32 %v1168, %v1876
        %v2008 = vmul.f32 %v1170, %v1880
        %v2009 = vmul.f32 %v1361, %v1884
        %v2010 = vmul.f32 %v1363, %v1888
        %v2011 = vmul.f32 %v1554, %v1892
        %v2012 = vmul.f32 %v1556, %v1896
        %v2013 = vmul.f32 %v1747, %v1900
        %v2014 = vmul.f32 %v1749, %v1904
        %v2015 = vmul.f32 %v981, %v1868
        %v2016 = vmul.f32 %v983, %v1872
        %v2017 = vmul.f32 %v1174, %v1876
        %v2018 = vmul.f32 %v1176, %v1880
        %v2019 = vmul.f32 %v1367, %v1884
        %v2020 = vmul.f32 %v1369, %v1888
        %v2021 = vmul.f32 %v1560, %v1892
        %v2022 = vmul.f32 %v1562, %v1896
        %v2023 = vmul.f32 %v1753, %v1900
        %v2024 = vmul.f32 %v1755, %v1904
        %v2025 = vmul.f32 %v985, %v1868
        %v2026 = vmul.f32 %v987, %v1872
        %v2027 = vmul.f32 %v1178, %v1876
        %v2028 = vmul.f32 %v1180, %v1880
        %v2029 = vmul.f32 %v1371, %v1884
        %v2030 = vmul.f32 %v1373, %v1888
        %v2031 = vmul.f32 %v1564, %v1892
        %v2032 = vmul.f32 %v1566, %v1896
        %v2033 = vmul.f32 %v1757, %v1900
        %v2034 = vmul.f32 %v1759, %v1904
        %v2035 = vmul.f32 %v991, %v1868
        %v2036 = vmul.f32 %v993, %v1872
        %v2037 = vmul.f32 %v1184, %v1876
        %v2038 = vmul.f32 %v1186, %v1880
        %v2039 = vmul.f32 %v1377, %v1884
        %v2040 = vmul.f32 %v1379, %v1888
        %v2041 = vmul.f32 %v1570, %v1892
        %v2042 = vmul.f32 %v1572, %v1896
        %v2043 = vmul.f32 %v1763, %v1900
        %v2044 = vmul.f32 %v1765, %v1904
        %v2045 = vmul.f32 %v995, %v1868
        %v2046 = vmul.f32 %v997, %v1872
        %v2047 = vmul.f32 %v1188, %v1876
        %v2048 = vmul.f32 %v1190, %v1880
        %v2049 = vmul.f32 %v1381, %v1884
        %v2050 = vmul.f32 %v1383, %v1888
        %v2051 = vmul.f32 %v1574, %v1892
        %v2052 = vmul.f32 %v1576, %v1896
        %v2053 = vmul.f32 %v1767, %v1900
        %v2054 = vmul.f32 %v1769, %v1904
        %v2055 = vmul.f32 %v1001, %v1868
        %v2056 = vmul.f32 %v1003, %v1872
        %v2057 = vmul.f32 %v1194, %v1876
        %v2058 = vmul.f32 %v1196, %v1880
        %v2059 = vmul.f32 %v1387, %v1884
        %v2060 = vmul.f32 %v1389, %v1888
        %v2061 = vmul.f32 %v1580, %v1892
        %v2062 = vmul.f32 %v1582, %v1896
        %v2063 = vmul.f32 %v1773, %v1900
        %v2064 = vmul.f32 %v1775, %v1904
        %v2065 = vmul.f32 %v1005, %v1868
        %v2066 = vmul.f32 %v1007, %v1872
        %v2067 = vmul.f32 %v1198, %v1876
        %v2068 = vmul.f32 %v1200, %v1880
        %v2069 = vmul.f32 %v1391, %v1884
        %v2070 = vmul.f32 %v1393, %v1888
        %v2071 = vmul.f32 %v1584, %v1892
        %v2072 = vmul.f32 %v1586, %v1896
        %v2073 = vmul.f32 %v1777, %v1900
        %v2074 = vmul.f32 %v1779, %v1904
        %v2075 = vmul.f32 %v1011, %v1868
        %v2076 = vmul.f32 %v1013, %v1872
        %v2077 = vmul.f32 %v1204, %v1876
        %v2078 = vmul.f32 %v1206, %v1880
        %v2079 = vmul.f32 %v1397, %v1884
        %v2080 = vmul.f32 %v1399, %v1888
        %v2081 = vmul.f32 %v1590, %v1892
        %v2082 = vmul.f32 %v1592, %v1896
        %v2083 = vmul.f32 %v1783, %v1900
        %v2084 = vmul.f32 %v1785, %v1904
        %v2085 = vmul.f32 %v1015, %v1868
        %v2086 = vmul.f32 %v1017, %v1872
        %v2087 = vmul.f32 %v1208, %v1876
        %v2088 = vmul.f32 %v1210, %v1880
        %v2089 = vmul.f32 %v1401, %v1884
        %v2090 = vmul.f32 %v1403, %v1888
        %v2091 = vmul.f32 %v1594, %v1892
        %v2092 = vmul.f32 %v1596, %v1896
        %v2093 = vmul.f32 %v1787, %v1900
        %v2094 = vmul.f32 %v1789, %v1904
        %v2095 = vmul.f32 %v1021, %v1868
        %v2096 = vmul.f32 %v1023, %v1872
        %v2097 = vmul.f32 %v1214, %v1876
        %v2098 = vmul.f32 %v1216, %v1880
        %v2099 = vmul.f32 %v1407, %v1884
        %v2100 = vmul.f32 %v1409, %v1888
        %v2101 = vmul.f32 %v1600, %v1892
        %v2102 = vmul.f32 %v1602, %v1896
        %v2103 = vmul.f32 %v1793, %v1900
        %v2104 = vmul.f32 %v1795, %v1904
        %v2105 = vmul.f32 %v1025, %v1868
        %v2106 = vmul.f32 %v1027, %v1872
        %v2107 = vmul.f32 %v1218, %v1876
        %v2108 = vmul.f32 %v1220, %v1880
        %v2109 = vmul.f32 %v1411, %v1884
        %v2110 = vmul.f32 %v1413, %v1888
        %v2111 = vmul.f32 %v1604, %v1892
        %v2112 = vmul.f32 %v1606, %v1896
        %v2113 = vmul.f32 %v1797, %v1900
        %v2114 = vmul.f32 %v1799, %v1904
        %v2115 = vmul.f32 %v1031, %v1868
        %v2116 = vmul.f32 %v1033, %v1872
        %v2117 = vmul.f32 %v1224, %v1876
        %v2118 = vmul.f32 %v1226, %v1880
        %v2119 = vmul.f32 %v1417, %v1884
        %v2120 = vmul.f32 %v1419, %v1888
        %v2121 = vmul.f32 %v1610, %v1892
        %v2122 = vmul.f32 %v1612, %v1896
        %v2123 = vmul.f32 %v1803, %v1900
        %v2124 = vmul.f32 %v1805, %v1904
        %v2125 = vmul.f32 %v1035, %v1868
        %v2126 = vmul.f32 %v1037, %v1872
        %v2127 = vmul.f32 %v1228, %v1876
        %v2128 = vmul.f32 %v1230, %v1880
        %v2129 = vmul.f32 %v1421, %v1884
        %v2130 = vmul.f32 %v1423, %v1888
        %v2131 = vmul.f32 %v1614, %v1892
        %v2132 = vmul.f32 %v1616, %v1896
        %v2133 = vmul.f32 %v1807, %v1900
        %v2134 = vmul.f32 %v1809, %v1904
        %v2135 = vmul.f32 %v1041, %v1868
        %v2136 = vmul.f32 %v1043, %v1872
        %v2137 = vmul.f32 %v1234, %v1876
        %v2138 = vmul.f32 %v1236, %v1880
        %v2139 = vmul.f32 %v1427, %v1884
        %v2140 = vmul.f32 %v1429, %v1888
        %v2141 = vmul.f32 %v1620, %v1892
        %v2142 = vmul.f32 %v1622, %v1896
        %v2143 = vmul.f32 %v1813, %v1900
        %v2144 = vmul.f32 %v1815, %v1904
        %v2145 = vmul.f32 %v1045, %v1868
        %v2146 = vmul.f32 %v1047, %v1872
        %v2147 = vmul.f32 %v1238, %v1876
        %v2148 = vmul.f32 %v1240, %v1880
        %v2149 = vmul.f32 %v1431, %v1884
        %v2150 = vmul.f32 %v1433, %v1888
        %v2151 = vmul.f32 %v1624, %v1892
        %v2152 = vmul.f32 %v1626, %v1896
        %v2153 = vmul.f32 %v1817, %v1900
        %v2154 = vmul.f32 %v1819, %v1904
        %v2155 = vmul.f32 %v1051, %v1868
        %v2156 = vmul.f32 %v1053, %v1872
        %v2157 = vmul.f32 %v1244, %v1876
        %v2158 = vmul.f32 %v1246, %v1880
        %v2159 = vmul.f32 %v1437, %v1884
        %v2160 = vmul.f32 %v1439, %v1888
        %v2161 = vmul.f32 %v1630, %v1892
        %v2162 = vmul.f32 %v1632, %v1896
        %v2163 = vmul.f32 %v1823, %v1900
        %v2164 = vmul.f32 %v1825, %v1904
        %v2165 = vmul.f32 %v1055, %v1868
        %v2166 = vmul.f32 %v1057, %v1872
        %v2167 = vmul.f32 %v1248, %v1876
        %v2168 = vmul.f32 %v1250, %v1880
        %v2169 = vmul.f32 %v1441, %v1884
        %v2170 = vmul.f32 %v1443, %v1888
        %v2171 = vmul.f32 %v1634, %v1892
        %v2172 = vmul.f32 %v1636, %v1896
        %v2173 = vmul.f32 %v1827, %v1900
        %v2174 = vmul.f32 %v1829, %v1904
        %v2175 = vmul.f32 %v1061, %v1868
        %v2176 = vmul.f32 %v1063, %v1872
        %v2177 = vmul.f32 %v1254, %v1876
        %v2178 = vmul.f32 %v1256, %v1880
        %v2179 = vmul.f32 %v1447, %v1884
        %v2180 = vmul.f32 %v1449, %v1888
        %v2181 = vmul.f32 %v1640, %v1892
        %v2182 = vmul.f32 %v1642, %v1896
        %v2183 = vmul.f32 %v1833, %v1900
        %v2184 = vmul.f32 %v1835, %v1904
        %v2185 = vmul.f32 %v1065, %v1868
        %v2186 = vmul.f32 %v1067, %v1872
        %v2187 = vmul.f32 %v1258, %v1876
        %v2188 = vmul.f32 %v1260, %v1880
        %v2189 = vmul.f32 %v1451, %v1884
        %v2190 = vmul.f32 %v1453, %v1888
        %v2191 = vmul.f32 %v1644, %v1892
        %v2192 = vmul.f32 %v1646, %v1896
        %v2193 = vmul.f32 %v1837, %v1900
        %v2194 = vmul.f32 %v1839, %v1904
        %v2195 = vmul.f32 %v1071, %v1868
        %v2196 = vmul.f32 %v1073, %v1872
        %v2197 = vmul.f32 %v1264, %v1876
        %v2198 = vmul.f32 %v1266, %v1880
        %v2199 = vmul.f32 %v1457, %v1884
        %v2200 = vmul.f32 %v1459, %v1888
        %v2201 = vmul.f32 %v1650, %v1892
        %v2202 = vmul.f32 %v1652, %v1896
        %v2203 = vmul.f32 %v1843, %v1900
        %v2204 = vmul.f32 %v1845, %v1904
        %v2205 = vmul.f32 %v1075, %v1868
        %v2206 = vmul.f32 %v1077, %v1872
        %v2207 = vmul.f32 %v1268, %v1876
        %v2208 = vmul.f32 %v1270, %v1880
        %v2209 = vmul.f32 %v1461, %v1884
        %v2210 = vmul.f32 %v1463, %v1888
        %v2211 = vmul.f32 %v1654, %v1892
        %v2212 = vmul.f32 %v1656, %v1896
        %v2213 = vmul.f32 %v1847, %v1900
        %v2214 = vmul.f32 %v1849, %v1904
        %v2215 = vmul.f32 %v1081, %v1868
        %v2216 = vmul.f32 %v1083, %v1872
        %v2217 = vmul.f32 %v1274, %v1876
        %v2218 = vmul.f32 %v1276, %v1880
        %v2219 = vmul.f32 %v1467, %v1884
        %v2220 = vmul.f32 %v1469, %v1888
        %v2221 = vmul.f32 %v1660, %v1892
        %v2222 = vmul.f32 %v1662, %v1896
        %v2223 = vmul.f32 %v1853, %v1900
        %v2224 = vmul.f32 %v1855, %v1904
        %v2225 = vmul.f32 %v1085, %v1868
        %v2226 = vmul.f32 %v1087, %v1872
        %v2227 = vmul.f32 %v1278, %v1876
        %v2228 = vmul.f32 %v1280, %v1880
        %v2229 = vmul.f32 %v1471, %v1884
        %v2230 = vmul.f32 %v1473, %v1888
        %v2231 = vmul.f32 %v1664, %v1892
        %v2232 = vmul.f32 %v1666, %v1896
        %v2233 = vmul.f32 %v1857, %v1900
        %v2234 = vmul.f32 %v1859, %v1904
        %v2235 = vld [vmem:[%s3] sm:$0xff]
        %v2236 = vld [vmem:[%s3 + $0x8] sm:$0x3]
        %v2239 = vlaneseq
        %v2240 = vshrl.u32 %v2239, 7
        %v2241 = vsub.s32 0, %v2240
        %v2242 = vrot.slane %v2235, %v2241
        %v2243 = vlaneseq
        %v2244 = vshrl.u32 %v2243, 7
        %v2245 = vsub.s32 1, %v2244
        %v2246 = vrot.slane %v2235, %v2245
        %v2247 = vlaneseq
        %v2248 = vshrl.u32 %v2247, 7
        %v2249 = vsub.s32 2, %v2248
        %v2250 = vrot.slane %v2235, %v2249
        %v2251 = vlaneseq
        %v2252 = vshrl.u32 %v2251, 7
        %v2253 = vsub.s32 3, %v2252
        %v2254 = vrot.slane %v2235, %v2253
        %v2255 = vlaneseq
        %v2256 = vshrl.u32 %v2255, 7
        %v2257 = vsub.s32 4, %v2256
        %v2258 = vrot.slane %v2235, %v2257
        %v2259 = vlaneseq
        %v2260 = vshrl.u32 %v2259, 7
        %v2261 = vsub.s32 5, %v2260
        %v2262 = vrot.slane %v2235, %v2261
        %v2263 = vlaneseq
        %v2264 = vshrl.u32 %v2263, 7
        %v2265 = vsub.s32 6, %v2264
        %v2266 = vrot.slane %v2235, %v2265
        %v2267 = vlaneseq
        %v2268 = vshrl.u32 %v2267, 7
        %v2269 = vsub.s32 7, %v2268
        %v2270 = vrot.slane %v2235, %v2269
        %v2271 = vlaneseq
        %v2272 = vshrl.u32 %v2271, 7
        %v2273 = vsub.s32 0, %v2272
        %v2274 = vrot.slane %v2236, %v2273
        %v2275 = vlaneseq
        %v2276 = vshrl.u32 %v2275, 7
        %v2277 = vsub.s32 1, %v2276
        %v2278 = vrot.slane %v2236, %v2277
        %v2289 = vadd.f32 %v1915, %v2242
        %v2290 = vadd.f32 %v1916, %v2246
        %v2291 = vadd.f32 %v1917, %v2250
        %v2292 = vadd.f32 %v1918, %v2254
        %v2293 = vadd.f32 %v1919, %v2258
        %v2294 = vadd.f32 %v1920, %v2262
        %v2295 = vadd.f32 %v1921, %v2266
        %v2296 = vadd.f32 %v1922, %v2270
        %v2297 = vadd.f32 %v1923, %v2274
        %v2298 = vadd.f32 %v1924, %v2278
        %v2299 = vadd.f32 %v1925, %v2242
        %v2300 = vadd.f32 %v1926, %v2246
        %v2301 = vadd.f32 %v1927, %v2250
        %v2302 = vadd.f32 %v1928, %v2254
        %v2303 = vadd.f32 %v1929, %v2258
        %v2304 = vadd.f32 %v1930, %v2262
        %v2305 = vadd.f32 %v1931, %v2266
        %v2306 = vadd.f32 %v1932, %v2270
        %v2307 = vadd.f32 %v1933, %v2274
        %v2308 = vadd.f32 %v1934, %v2278
        %v2309 = vadd.f32 %v1935, %v2242
        %v2310 = vadd.f32 %v1936, %v2246
        %v2311 = vadd.f32 %v1937, %v2250
        %v2312 = vadd.f32 %v1938, %v2254
        %v2313 = vadd.f32 %v1939, %v2258
        %v2314 = vadd.f32 %v1940, %v2262
        %v2315 = vadd.f32 %v1941, %v2266
        %v2316 = vadd.f32 %v1942, %v2270
        %v2317 = vadd.f32 %v1943, %v2274
        %v2318 = vadd.f32 %v1944, %v2278
        %v2319 = vadd.f32 %v1945, %v2242
        %v2320 = vadd.f32 %v1946, %v2246
        %v2321 = vadd.f32 %v1947, %v2250
        %v2322 = vadd.f32 %v1948, %v2254
        %v2323 = vadd.f32 %v1949, %v2258
        %v2324 = vadd.f32 %v1950, %v2262
        %v2325 = vadd.f32 %v1951, %v2266
        %v2326 = vadd.f32 %v1952, %v2270
        %v2327 = vadd.f32 %v1953, %v2274
        %v2328 = vadd.f32 %v1954, %v2278
        %v2329 = vadd.f32 %v1955, %v2242
        %v2330 = vadd.f32 %v1956, %v2246
        %v2331 = vadd.f32 %v1957, %v2250
        %v2332 = vadd.f32 %v1958, %v2254
        %v2333 = vadd.f32 %v1959, %v2258
        %v2334 = vadd.f32 %v1960, %v2262
        %v2335 = vadd.f32 %v1961, %v2266
        %v2336 = vadd.f32 %v1962, %v2270
        %v2337 = vadd.f32 %v1963, %v2274
        %v2338 = vadd.f32 %v1964, %v2278
        %v2339 = vadd.f32 %v1965, %v2242
        %v2340 = vadd.f32 %v1966, %v2246
        %v2341 = vadd.f32 %v1967, %v2250
        %v2342 = vadd.f32 %v1968, %v2254
        %v2343 = vadd.f32 %v1969, %v2258
        %v2344 = vadd.f32 %v1970, %v2262
        %v2345 = vadd.f32 %v1971, %v2266
        %v2346 = vadd.f32 %v1972, %v2270
        %v2347 = vadd.f32 %v1973, %v2274
        %v2348 = vadd.f32 %v1974, %v2278
        %v2349 = vadd.f32 %v1975, %v2242
        %v2350 = vadd.f32 %v1976, %v2246
        %v2351 = vadd.f32 %v1977, %v2250
        %v2352 = vadd.f32 %v1978, %v2254
        %v2353 = vadd.f32 %v1979, %v2258
        %v2354 = vadd.f32 %v1980, %v2262
        %v2355 = vadd.f32 %v1981, %v2266
        %v2356 = vadd.f32 %v1982, %v2270
        %v2357 = vadd.f32 %v1983, %v2274
        %v2358 = vadd.f32 %v1984, %v2278
        %v2359 = vadd.f32 %v1985, %v2242
        %v2360 = vadd.f32 %v1986, %v2246
        %v2361 = vadd.f32 %v1987, %v2250
        %v2362 = vadd.f32 %v1988, %v2254
        %v2363 = vadd.f32 %v1989, %v2258
        %v2364 = vadd.f32 %v1990, %v2262
        %v2365 = vadd.f32 %v1991, %v2266
        %v2366 = vadd.f32 %v1992, %v2270
        %v2367 = vadd.f32 %v1993, %v2274
        %v2368 = vadd.f32 %v1994, %v2278
        %v2369 = vadd.f32 %v1995, %v2242
        %v2370 = vadd.f32 %v1996, %v2246
        %v2371 = vadd.f32 %v1997, %v2250
        %v2372 = vadd.f32 %v1998, %v2254
        %v2373 = vadd.f32 %v1999, %v2258
        %v2374 = vadd.f32 %v2000, %v2262
        %v2375 = vadd.f32 %v2001, %v2266
        %v2376 = vadd.f32 %v2002, %v2270
        %v2377 = vadd.f32 %v2003, %v2274
        %v2378 = vadd.f32 %v2004, %v2278
        %v2379 = vadd.f32 %v2005, %v2242
        %v2380 = vadd.f32 %v2006, %v2246
        %v2381 = vadd.f32 %v2007, %v2250
        %v2382 = vadd.f32 %v2008, %v2254
        %v2383 = vadd.f32 %v2009, %v2258
        %v2384 = vadd.f32 %v2010, %v2262
        %v2385 = vadd.f32 %v2011, %v2266
        %v2386 = vadd.f32 %v2012, %v2270
        %v2387 = vadd.f32 %v2013, %v2274
        %v2388 = vadd.f32 %v2014, %v2278
        %v2389 = vadd.f32 %v2015, %v2242
        %v2390 = vadd.f32 %v2016, %v2246
        %v2391 = vadd.f32 %v2017, %v2250
        %v2392 = vadd.f32 %v2018, %v2254
        %v2393 = vadd.f32 %v2019, %v2258
        %v2394 = vadd.f32 %v2020, %v2262
        %v2395 = vadd.f32 %v2021, %v2266
        %v2396 = vadd.f32 %v2022, %v2270
        %v2397 = vadd.f32 %v2023, %v2274
        %v2398 = vadd.f32 %v2024, %v2278
        %v2399 = vadd.f32 %v2025, %v2242
        %v2400 = vadd.f32 %v2026, %v2246
        %v2401 = vadd.f32 %v2027, %v2250
        %v2402 = vadd.f32 %v2028, %v2254
        %v2403 = vadd.f32 %v2029, %v2258
        %v2404 = vadd.f32 %v2030, %v2262
        %v2405 = vadd.f32 %v2031, %v2266
        %v2406 = vadd.f32 %v2032, %v2270
        %v2407 = vadd.f32 %v2033, %v2274
        %v2408 = vadd.f32 %v2034, %v2278
        %v2409 = vadd.f32 %v2035, %v2242
        %v2410 = vadd.f32 %v2036, %v2246
        %v2411 = vadd.f32 %v2037, %v2250
        %v2412 = vadd.f32 %v2038, %v2254
        %v2413 = vadd.f32 %v2039, %v2258
        %v2414 = vadd.f32 %v2040, %v2262
        %v2415 = vadd.f32 %v2041, %v2266
        %v2416 = vadd.f32 %v2042, %v2270
        %v2417 = vadd.f32 %v2043, %v2274
        %v2418 = vadd.f32 %v2044, %v2278
        %v2419 = vadd.f32 %v2045, %v2242
        %v2420 = vadd.f32 %v2046, %v2246
        %v2421 = vadd.f32 %v2047, %v2250
        %v2422 = vadd.f32 %v2048, %v2254
        %v2423 = vadd.f32 %v2049, %v2258
        %v2424 = vadd.f32 %v2050, %v2262
        %v2425 = vadd.f32 %v2051, %v2266
        %v2426 = vadd.f32 %v2052, %v2270
        %v2427 = vadd.f32 %v2053, %v2274
        %v2428 = vadd.f32 %v2054, %v2278
        %v2429 = vadd.f32 %v2055, %v2242
        %v2430 = vadd.f32 %v2056, %v2246
        %v2431 = vadd.f32 %v2057, %v2250
        %v2432 = vadd.f32 %v2058, %v2254
        %v2433 = vadd.f32 %v2059, %v2258
        %v2434 = vadd.f32 %v2060, %v2262
        %v2435 = vadd.f32 %v2061, %v2266
        %v2436 = vadd.f32 %v2062, %v2270
        %v2437 = vadd.f32 %v2063, %v2274
        %v2438 = vadd.f32 %v2064, %v2278
        %v2439 = vadd.f32 %v2065, %v2242
        %v2440 = vadd.f32 %v2066, %v2246
        %v2441 = vadd.f32 %v2067, %v2250
        %v2442 = vadd.f32 %v2068, %v2254
        %v2443 = vadd.f32 %v2069, %v2258
        %v2444 = vadd.f32 %v2070, %v2262
        %v2445 = vadd.f32 %v2071, %v2266
        %v2446 = vadd.f32 %v2072, %v2270
        %v2447 = vadd.f32 %v2073, %v2274
        %v2448 = vadd.f32 %v2074, %v2278
        %v2449 = vadd.f32 %v2075, %v2242
        %v2450 = vadd.f32 %v2076, %v2246
        %v2451 = vadd.f32 %v2077, %v2250
        %v2452 = vadd.f32 %v2078, %v2254
        %v2453 = vadd.f32 %v2079, %v2258
        %v2454 = vadd.f32 %v2080, %v2262
        %v2455 = vadd.f32 %v2081, %v2266
        %v2456 = vadd.f32 %v2082, %v2270
        %v2457 = vadd.f32 %v2083, %v2274
        %v2458 = vadd.f32 %v2084, %v2278
        %v2459 = vadd.f32 %v2085, %v2242
        %v2460 = vadd.f32 %v2086, %v2246
        %v2461 = vadd.f32 %v2087, %v2250
        %v2462 = vadd.f32 %v2088, %v2254
        %v2463 = vadd.f32 %v2089, %v2258
        %v2464 = vadd.f32 %v2090, %v2262
        %v2465 = vadd.f32 %v2091, %v2266
        %v2466 = vadd.f32 %v2092, %v2270
        %v2467 = vadd.f32 %v2093, %v2274
        %v2468 = vadd.f32 %v2094, %v2278
        %v2469 = vadd.f32 %v2095, %v2242
        %v2470 = vadd.f32 %v2096, %v2246
        %v2471 = vadd.f32 %v2097, %v2250
        %v2472 = vadd.f32 %v2098, %v2254
        %v2473 = vadd.f32 %v2099, %v2258
        %v2474 = vadd.f32 %v2100, %v2262
        %v2475 = vadd.f32 %v2101, %v2266
        %v2476 = vadd.f32 %v2102, %v2270
        %v2477 = vadd.f32 %v2103, %v2274
        %v2478 = vadd.f32 %v2104, %v2278
        %v2479 = vadd.f32 %v2105, %v2242
        %v2480 = vadd.f32 %v2106, %v2246
        %v2481 = vadd.f32 %v2107, %v2250
        %v2482 = vadd.f32 %v2108, %v2254
        %v2483 = vadd.f32 %v2109, %v2258
        %v2484 = vadd.f32 %v2110, %v2262
        %v2485 = vadd.f32 %v2111, %v2266
        %v2486 = vadd.f32 %v2112, %v2270
        %v2487 = vadd.f32 %v2113, %v2274
        %v2488 = vadd.f32 %v2114, %v2278
        %v2489 = vadd.f32 %v2115, %v2242
        %v2490 = vadd.f32 %v2116, %v2246
        %v2491 = vadd.f32 %v2117, %v2250
        %v2492 = vadd.f32 %v2118, %v2254
        %v2493 = vadd.f32 %v2119, %v2258
        %v2494 = vadd.f32 %v2120, %v2262
        %v2495 = vadd.f32 %v2121, %v2266
        %v2496 = vadd.f32 %v2122, %v2270
        %v2497 = vadd.f32 %v2123, %v2274
        %v2498 = vadd.f32 %v2124, %v2278
        %v2499 = vadd.f32 %v2125, %v2242
        %v2500 = vadd.f32 %v2126, %v2246
        %v2501 = vadd.f32 %v2127, %v2250
        %v2502 = vadd.f32 %v2128, %v2254
        %v2503 = vadd.f32 %v2129, %v2258
        %v2504 = vadd.f32 %v2130, %v2262
        %v2505 = vadd.f32 %v2131, %v2266
        %v2506 = vadd.f32 %v2132, %v2270
        %v2507 = vadd.f32 %v2133, %v2274
        %v2508 = vadd.f32 %v2134, %v2278
        %v2509 = vadd.f32 %v2135, %v2242
        %v2510 = vadd.f32 %v2136, %v2246
        %v2511 = vadd.f32 %v2137, %v2250
        %v2512 = vadd.f32 %v2138, %v2254
        %v2513 = vadd.f32 %v2139, %v2258
        %v2514 = vadd.f32 %v2140, %v2262
        %v2515 = vadd.f32 %v2141, %v2266
        %v2516 = vadd.f32 %v2142, %v2270
        %v2517 = vadd.f32 %v2143, %v2274
        %v2518 = vadd.f32 %v2144, %v2278
        %v2519 = vadd.f32 %v2145, %v2242
        %v2520 = vadd.f32 %v2146, %v2246
        %v2521 = vadd.f32 %v2147, %v2250
        %v2522 = vadd.f32 %v2148, %v2254
        %v2523 = vadd.f32 %v2149, %v2258
        %v2524 = vadd.f32 %v2150, %v2262
        %v2525 = vadd.f32 %v2151, %v2266
        %v2526 = vadd.f32 %v2152, %v2270
        %v2527 = vadd.f32 %v2153, %v2274
        %v2528 = vadd.f32 %v2154, %v2278
        %v2529 = vadd.f32 %v2155, %v2242
        %v2530 = vadd.f32 %v2156, %v2246
        %v2531 = vadd.f32 %v2157, %v2250
        %v2532 = vadd.f32 %v2158, %v2254
        %v2533 = vadd.f32 %v2159, %v2258
        %v2534 = vadd.f32 %v2160, %v2262
        %v2535 = vadd.f32 %v2161, %v2266
        %v2536 = vadd.f32 %v2162, %v2270
        %v2537 = vadd.f32 %v2163, %v2274
        %v2538 = vadd.f32 %v2164, %v2278
        %v2539 = vadd.f32 %v2165, %v2242
        %v2540 = vadd.f32 %v2166, %v2246
        %v2541 = vadd.f32 %v2167, %v2250
        %v2542 = vadd.f32 %v2168, %v2254
        %v2543 = vadd.f32 %v2169, %v2258
        %v2544 = vadd.f32 %v2170, %v2262
        %v2545 = vadd.f32 %v2171, %v2266
        %v2546 = vadd.f32 %v2172, %v2270
        %v2547 = vadd.f32 %v2173, %v2274
        %v2548 = vadd.f32 %v2174, %v2278
        %v2549 = vadd.f32 %v2175, %v2242
        %v2550 = vadd.f32 %v2176, %v2246
        %v2551 = vadd.f32 %v2177, %v2250
        %v2552 = vadd.f32 %v2178, %v2254
        %v2553 = vadd.f32 %v2179, %v2258
        %v2554 = vadd.f32 %v2180, %v2262
        %v2555 = vadd.f32 %v2181, %v2266
        %v2556 = vadd.f32 %v2182, %v2270
        %v2557 = vadd.f32 %v2183, %v2274
        %v2558 = vadd.f32 %v2184, %v2278
        %v2559 = vadd.f32 %v2185, %v2242
        %v2560 = vadd.f32 %v2186, %v2246
        %v2561 = vadd.f32 %v2187, %v2250
        %v2562 = vadd.f32 %v2188, %v2254
        %v2563 = vadd.f32 %v2189, %v2258
        %v2564 = vadd.f32 %v2190, %v2262
        %v2565 = vadd.f32 %v2191, %v2266
        %v2566 = vadd.f32 %v2192, %v2270
        %v2567 = vadd.f32 %v2193, %v2274
        %v2568 = vadd.f32 %v2194, %v2278
        %v2569 = vadd.f32 %v2195, %v2242
        %v2570 = vadd.f32 %v2196, %v2246
        %v2571 = vadd.f32 %v2197, %v2250
        %v2572 = vadd.f32 %v2198, %v2254
        %v2573 = vadd.f32 %v2199, %v2258
        %v2574 = vadd.f32 %v2200, %v2262
        %v2575 = vadd.f32 %v2201, %v2266
        %v2576 = vadd.f32 %v2202, %v2270
        %v2577 = vadd.f32 %v2203, %v2274
        %v2578 = vadd.f32 %v2204, %v2278
        %v2579 = vadd.f32 %v2205, %v2242
        %v2580 = vadd.f32 %v2206, %v2246
        %v2581 = vadd.f32 %v2207, %v2250
        %v2582 = vadd.f32 %v2208, %v2254
        %v2583 = vadd.f32 %v2209, %v2258
        %v2584 = vadd.f32 %v2210, %v2262
        %v2585 = vadd.f32 %v2211, %v2266
        %v2586 = vadd.f32 %v2212, %v2270
        %v2587 = vadd.f32 %v2213, %v2274
        %v2588 = vadd.f32 %v2214, %v2278
        %v2589 = vadd.f32 %v2215, %v2242
        %v2590 = vadd.f32 %v2216, %v2246
        %v2591 = vadd.f32 %v2217, %v2250
        %v2592 = vadd.f32 %v2218, %v2254
        %v2593 = vadd.f32 %v2219, %v2258
        %v2594 = vadd.f32 %v2220, %v2262
        %v2595 = vadd.f32 %v2221, %v2266
        %v2596 = vadd.f32 %v2222, %v2270
        %v2597 = vadd.f32 %v2223, %v2274
        %v2598 = vadd.f32 %v2224, %v2278
        %v2599 = vadd.f32 %v2225, %v2242
        %v2600 = vadd.f32 %v2226, %v2246
        %v2601 = vadd.f32 %v2227, %v2250
        %v2602 = vadd.f32 %v2228, %v2254
        %v2603 = vadd.f32 %v2229, %v2258
        %v2604 = vadd.f32 %v2230, %v2262
        %v2605 = vadd.f32 %v2231, %v2266
        %v2606 = vadd.f32 %v2232, %v2270
        %v2607 = vadd.f32 %v2233, %v2274
        %v2608 = vadd.f32 %v2234, %v2278
        %v2609 = vxor.u32 %v2289, 2147483648
        %v2610 = vxor.u32 %v2290, 2147483648
        %v2611 = vxor.u32 %v2291, 2147483648
        %v2612 = vxor.u32 %v2292, 2147483648
        %v2613 = vxor.u32 %v2293, 2147483648
        %v2614 = vxor.u32 %v2294, 2147483648
        %v2615 = vxor.u32 %v2295, 2147483648
        %v2616 = vxor.u32 %v2296, 2147483648
        %v2617 = vxor.u32 %v2297, 2147483648
        %v2618 = vxor.u32 %v2298, 2147483648
        %v2619 = vxor.u32 %v2299, 2147483648
        %v2620 = vxor.u32 %v2300, 2147483648
        %v2621 = vxor.u32 %v2301, 2147483648
        %v2622 = vxor.u32 %v2302, 2147483648
        %v2623 = vxor.u32 %v2303, 2147483648
        %v2624 = vxor.u32 %v2304, 2147483648
        %v2625 = vxor.u32 %v2305, 2147483648
        %v2626 = vxor.u32 %v2306, 2147483648
        %v2627 = vxor.u32 %v2307, 2147483648
        %v2628 = vxor.u32 %v2308, 2147483648
        %v2629 = vxor.u32 %v2309, 2147483648
        %v2630 = vxor.u32 %v2310, 2147483648
        %v2631 = vxor.u32 %v2311, 2147483648
        %v2632 = vxor.u32 %v2312, 2147483648
        %v2633 = vxor.u32 %v2313, 2147483648
        %v2634 = vxor.u32 %v2314, 2147483648
        %v2635 = vxor.u32 %v2315, 2147483648
        %v2636 = vxor.u32 %v2316, 2147483648
        %v2637 = vxor.u32 %v2317, 2147483648
        %v2638 = vxor.u32 %v2318, 2147483648
        %v2639 = vxor.u32 %v2319, 2147483648
        %v2640 = vxor.u32 %v2320, 2147483648
        %v2641 = vxor.u32 %v2321, 2147483648
        %v2642 = vxor.u32 %v2322, 2147483648
        %v2643 = vxor.u32 %v2323, 2147483648
        %v2644 = vxor.u32 %v2324, 2147483648
        %v2645 = vxor.u32 %v2325, 2147483648
        %v2646 = vxor.u32 %v2326, 2147483648
        %v2647 = vxor.u32 %v2327, 2147483648
        %v2648 = vxor.u32 %v2328, 2147483648
        %v2649 = vxor.u32 %v2329, 2147483648
        %v2650 = vxor.u32 %v2330, 2147483648
        %v2651 = vxor.u32 %v2331, 2147483648
        %v2652 = vxor.u32 %v2332, 2147483648
        %v2653 = vxor.u32 %v2333, 2147483648
        %v2654 = vxor.u32 %v2334, 2147483648
        %v2655 = vxor.u32 %v2335, 2147483648
        %v2656 = vxor.u32 %v2336, 2147483648
        %v2657 = vxor.u32 %v2337, 2147483648
        %v2658 = vxor.u32 %v2338, 2147483648
        %v2659 = vxor.u32 %v2339, 2147483648
        %v2660 = vxor.u32 %v2340, 2147483648
        %v2661 = vxor.u32 %v2341, 2147483648
        %v2662 = vxor.u32 %v2342, 2147483648
        %v2663 = vxor.u32 %v2343, 2147483648
        %v2664 = vxor.u32 %v2344, 2147483648
        %v2665 = vxor.u32 %v2345, 2147483648
        %v2666 = vxor.u32 %v2346, 2147483648
        %v2667 = vxor.u32 %v2347, 2147483648
        %v2668 = vxor.u32 %v2348, 2147483648
        %v2669 = vxor.u32 %v2349, 2147483648
        %v2670 = vxor.u32 %v2350, 2147483648
        %v2671 = vxor.u32 %v2351, 2147483648
        %v2672 = vxor.u32 %v2352, 2147483648
        %v2673 = vxor.u32 %v2353, 2147483648
        %v2674 = vxor.u32 %v2354, 2147483648
        %v2675 = vxor.u32 %v2355, 2147483648
        %v2676 = vxor.u32 %v2356, 2147483648
        %v2677 = vxor.u32 %v2357, 2147483648
        %v2678 = vxor.u32 %v2358, 2147483648
        %v2679 = vxor.u32 %v2359, 2147483648
        %v2680 = vxor.u32 %v2360, 2147483648
        %v2681 = vxor.u32 %v2361, 2147483648
        %v2682 = vxor.u32 %v2362, 2147483648
        %v2683 = vxor.u32 %v2363, 2147483648
        %v2684 = vxor.u32 %v2364, 2147483648
        %v2685 = vxor.u32 %v2365, 2147483648
        %v2686 = vxor.u32 %v2366, 2147483648
        %v2687 = vxor.u32 %v2367, 2147483648
        %v2688 = vxor.u32 %v2368, 2147483648
        %v2689 = vxor.u32 %v2369, 2147483648
        %v2690 = vxor.u32 %v2370, 2147483648
        %v2691 = vxor.u32 %v2371, 2147483648
        %v2692 = vxor.u32 %v2372, 2147483648
        %v2693 = vxor.u32 %v2373, 2147483648
        %v2694 = vxor.u32 %v2374, 2147483648
        %v2695 = vxor.u32 %v2375, 2147483648
        %v2696 = vxor.u32 %v2376, 2147483648
        %v2697 = vxor.u32 %v2377, 2147483648
        %v2698 = vxor.u32 %v2378, 2147483648
        %v2699 = vxor.u32 %v2379, 2147483648
        %v2700 = vxor.u32 %v2380, 2147483648
        %v2701 = vxor.u32 %v2381, 2147483648
        %v2702 = vxor.u32 %v2382, 2147483648
        %v2703 = vxor.u32 %v2383, 2147483648
        %v2704 = vxor.u32 %v2384, 2147483648
        %v2705 = vxor.u32 %v2385, 2147483648
        %v2706 = vxor.u32 %v2386, 2147483648
        %v2707 = vxor.u32 %v2387, 2147483648
        %v2708 = vxor.u32 %v2388, 2147483648
        %v2709 = vxor.u32 %v2389, 2147483648
        %v2710 = vxor.u32 %v2390, 2147483648
        %v2711 = vxor.u32 %v2391, 2147483648
        %v2712 = vxor.u32 %v2392, 2147483648
        %v2713 = vxor.u32 %v2393, 2147483648
        %v2714 = vxor.u32 %v2394, 2147483648
        %v2715 = vxor.u32 %v2395, 2147483648
        %v2716 = vxor.u32 %v2396, 2147483648
        %v2717 = vxor.u32 %v2397, 2147483648
        %v2718 = vxor.u32 %v2398, 2147483648
        %v2719 = vxor.u32 %v2399, 2147483648
        %v2720 = vxor.u32 %v2400, 2147483648
        %v2721 = vxor.u32 %v2401, 2147483648
        %v2722 = vxor.u32 %v2402, 2147483648
        %v2723 = vxor.u32 %v2403, 2147483648
        %v2724 = vxor.u32 %v2404, 2147483648
        %v2725 = vxor.u32 %v2405, 2147483648
        %v2726 = vxor.u32 %v2406, 2147483648
        %v2727 = vxor.u32 %v2407, 2147483648
        %v2728 = vxor.u32 %v2408, 2147483648
        %v2729 = vxor.u32 %v2409, 2147483648
        %v2730 = vxor.u32 %v2410, 2147483648
        %v2731 = vxor.u32 %v2411, 2147483648
        %v2732 = vxor.u32 %v2412, 2147483648
        %v2733 = vxor.u32 %v2413, 2147483648
        %v2734 = vxor.u32 %v2414, 2147483648
        %v2735 = vxor.u32 %v2415, 2147483648
        %v2736 = vxor.u32 %v2416, 2147483648
        %v2737 = vxor.u32 %v2417, 2147483648
        %v2738 = vxor.u32 %v2418, 2147483648
        %v2739 = vxor.u32 %v2419, 2147483648
        %v2740 = vxor.u32 %v2420, 2147483648
        %v2741 = vxor.u32 %v2421, 2147483648
        %v2742 = vxor.u32 %v2422, 2147483648
        %v2743 = vxor.u32 %v2423, 2147483648
        %v2744 = vxor.u32 %v2424, 2147483648
        %v2745 = vxor.u32 %v2425, 2147483648
        %v2746 = vxor.u32 %v2426, 2147483648
        %v2747 = vxor.u32 %v2427, 2147483648
        %v2748 = vxor.u32 %v2428, 2147483648
        %v2749 = vxor.u32 %v2429, 2147483648
        %v2750 = vxor.u32 %v2430, 2147483648
        %v2751 = vxor.u32 %v2431, 2147483648
        %v2752 = vxor.u32 %v2432, 2147483648
        %v2753 = vxor.u32 %v2433, 2147483648
        %v2754 = vxor.u32 %v2434, 2147483648
        %v2755 = vxor.u32 %v2435, 2147483648
        %v2756 = vxor.u32 %v2436, 2147483648
        %v2757 = vxor.u32 %v2437, 2147483648
        %v2758 = vxor.u32 %v2438, 2147483648
        %v2759 = vxor.u32 %v2439, 2147483648
        %v2760 = vxor.u32 %v2440, 2147483648
        %v2761 = vxor.u32 %v2441, 2147483648
        %v2762 = vxor.u32 %v2442, 2147483648
        %v2763 = vxor.u32 %v2443, 2147483648
        %v2764 = vxor.u32 %v2444, 2147483648
        %v2765 = vxor.u32 %v2445, 2147483648
        %v2766 = vxor.u32 %v2446, 2147483648
        %v2767 = vxor.u32 %v2447, 2147483648
        %v2768 = vxor.u32 %v2448, 2147483648
        %v2769 = vxor.u32 %v2449, 2147483648
        %v2770 = vxor.u32 %v2450, 2147483648
        %v2771 = vxor.u32 %v2451, 2147483648
        %v2772 = vxor.u32 %v2452, 2147483648
        %v2773 = vxor.u32 %v2453, 2147483648
        %v2774 = vxor.u32 %v2454, 2147483648
        %v2775 = vxor.u32 %v2455, 2147483648
        %v2776 = vxor.u32 %v2456, 2147483648
        %v2777 = vxor.u32 %v2457, 2147483648
        %v2778 = vxor.u32 %v2458, 2147483648
        %v2779 = vxor.u32 %v2459, 2147483648
        %v2780 = vxor.u32 %v2460, 2147483648
        %v2781 = vxor.u32 %v2461, 2147483648
        %v2782 = vxor.u32 %v2462, 2147483648
        %v2783 = vxor.u32 %v2463, 2147483648
        %v2784 = vxor.u32 %v2464, 2147483648
        %v2785 = vxor.u32 %v2465, 2147483648
        %v2786 = vxor.u32 %v2466, 2147483648
        %v2787 = vxor.u32 %v2467, 2147483648
        %v2788 = vxor.u32 %v2468, 2147483648
        %v2789 = vxor.u32 %v2469, 2147483648
        %v2790 = vxor.u32 %v2470, 2147483648
        %v2791 = vxor.u32 %v2471, 2147483648
        %v2792 = vxor.u32 %v2472, 2147483648
        %v2793 = vxor.u32 %v2473, 2147483648
        %v2794 = vxor.u32 %v2474, 2147483648
        %v2795 = vxor.u32 %v2475, 2147483648
        %v2796 = vxor.u32 %v2476, 2147483648
        %v2797 = vxor.u32 %v2477, 2147483648
        %v2798 = vxor.u32 %v2478, 2147483648
        %v2799 = vxor.u32 %v2479, 2147483648
        %v2800 = vxor.u32 %v2480, 2147483648
        %v2801 = vxor.u32 %v2481, 2147483648
        %v2802 = vxor.u32 %v2482, 2147483648
        %v2803 = vxor.u32 %v2483, 2147483648
        %v2804 = vxor.u32 %v2484, 2147483648
        %v2805 = vxor.u32 %v2485, 2147483648
        %v2806 = vxor.u32 %v2486, 2147483648
        %v2807 = vxor.u32 %v2487, 2147483648
        %v2808 = vxor.u32 %v2488, 2147483648
        %v2809 = vxor.u32 %v2489, 2147483648
        %v2810 = vxor.u32 %v2490, 2147483648
        %v2811 = vxor.u32 %v2491, 2147483648
        %v2812 = vxor.u32 %v2492, 2147483648
        %v2813 = vxor.u32 %v2493, 2147483648
        %v2814 = vxor.u32 %v2494, 2147483648
        %v2815 = vxor.u32 %v2495, 2147483648
        %v2816 = vxor.u32 %v2496, 2147483648
        %v2817 = vxor.u32 %v2497, 2147483648
        %v2818 = vxor.u32 %v2498, 2147483648
        %v2819 = vxor.u32 %v2499, 2147483648
        %v2820 = vxor.u32 %v2500, 2147483648
        %v2821 = vxor.u32 %v2501, 2147483648
        %v2822 = vxor.u32 %v2502, 2147483648
        %v2823 = vxor.u32 %v2503, 2147483648
        %v2824 = vxor.u32 %v2504, 2147483648
        %v2825 = vxor.u32 %v2505, 2147483648
        %v2826 = vxor.u32 %v2506, 2147483648
        %v2827 = vxor.u32 %v2507, 2147483648
        %v2828 = vxor.u32 %v2508, 2147483648
        %v2829 = vxor.u32 %v2509, 2147483648
        %v2830 = vxor.u32 %v2510, 2147483648
        %v2831 = vxor.u32 %v2511, 2147483648
        %v2832 = vxor.u32 %v2512, 2147483648
        %v2833 = vxor.u32 %v2513, 2147483648
        %v2834 = vxor.u32 %v2514, 2147483648
        %v2835 = vxor.u32 %v2515, 2147483648
        %v2836 = vxor.u32 %v2516, 2147483648
        %v2837 = vxor.u32 %v2517, 2147483648
        %v2838 = vxor.u32 %v2518, 2147483648
        %v2839 = vxor.u32 %v2519, 2147483648
        %v2840 = vxor.u32 %v2520, 2147483648
        %v2841 = vxor.u32 %v2521, 2147483648
        %v2842 = vxor.u32 %v2522, 2147483648
        %v2843 = vxor.u32 %v2523, 2147483648
        %v2844 = vxor.u32 %v2524, 2147483648
        %v2845 = vxor.u32 %v2525, 2147483648
        %v2846 = vxor.u32 %v2526, 2147483648
        %v2847 = vxor.u32 %v2527, 2147483648
        %v2848 = vxor.u32 %v2528, 2147483648
        %v2849 = vxor.u32 %v2529, 2147483648
        %v2850 = vxor.u32 %v2530, 2147483648
        %v2851 = vxor.u32 %v2531, 2147483648
        %v2852 = vxor.u32 %v2532, 2147483648
        %v2853 = vxor.u32 %v2533, 2147483648
        %v2854 = vxor.u32 %v2534, 2147483648
        %v2855 = vxor.u32 %v2535, 2147483648
        %v2856 = vxor.u32 %v2536, 2147483648
        %v2857 = vxor.u32 %v2537, 2147483648
        %v2858 = vxor.u32 %v2538, 2147483648
        %v2859 = vxor.u32 %v2539, 2147483648
        %v2860 = vxor.u32 %v2540, 2147483648
        %v2861 = vxor.u32 %v2541, 2147483648
        %v2862 = vxor.u32 %v2542, 2147483648
        %v2863 = vxor.u32 %v2543, 2147483648
        %v2864 = vxor.u32 %v2544, 2147483648
        %v2865 = vxor.u32 %v2545, 2147483648
        %v2866 = vxor.u32 %v2546, 2147483648
        %v2867 = vxor.u32 %v2547, 2147483648
        %v2868 = vxor.u32 %v2548, 2147483648
        %v2869 = vxor.u32 %v2549, 2147483648
        %v2870 = vxor.u32 %v2550, 2147483648
        %v2871 = vxor.u32 %v2551, 2147483648
        %v2872 = vxor.u32 %v2552, 2147483648
        %v2873 = vxor.u32 %v2553, 2147483648
        %v2874 = vxor.u32 %v2554, 2147483648
        %v2875 = vxor.u32 %v2555, 2147483648
        %v2876 = vxor.u32 %v2556, 2147483648
        %v2877 = vxor.u32 %v2557, 2147483648
        %v2878 = vxor.u32 %v2558, 2147483648
        %v2879 = vxor.u32 %v2559, 2147483648
        %v2880 = vxor.u32 %v2560, 2147483648
        %v2881 = vxor.u32 %v2561, 2147483648
        %v2882 = vxor.u32 %v2562, 2147483648
        %v2883 = vxor.u32 %v2563, 2147483648
        %v2884 = vxor.u32 %v2564, 2147483648
        %v2885 = vxor.u32 %v2565, 2147483648
        %v2886 = vxor.u32 %v2566, 2147483648
        %v2887 = vxor.u32 %v2567, 2147483648
        %v2888 = vxor.u32 %v2568, 2147483648
        %v2889 = vxor.u32 %v2569, 2147483648
        %v2890 = vxor.u32 %v2570, 2147483648
        %v2891 = vxor.u32 %v2571, 2147483648
        %v2892 = vxor.u32 %v2572, 2147483648
        %v2893 = vxor.u32 %v2573, 2147483648
        %v2894 = vxor.u32 %v2574, 2147483648
        %v2895 = vxor.u32 %v2575, 2147483648
        %v2896 = vxor.u32 %v2576, 2147483648
        %v2897 = vxor.u32 %v2577, 2147483648
        %v2898 = vxor.u32 %v2578, 2147483648
        %v2899 = vxor.u32 %v2579, 2147483648
        %v2900 = vxor.u32 %v2580, 2147483648
        %v2901 = vxor.u32 %v2581, 2147483648
        %v2902 = vxor.u32 %v2582, 2147483648
        %v2903 = vxor.u32 %v2583, 2147483648
        %v2904 = vxor.u32 %v2584, 2147483648
        %v2905 = vxor.u32 %v2585, 2147483648
        %v2906 = vxor.u32 %v2586, 2147483648
        %v2907 = vxor.u32 %v2587, 2147483648
        %v2908 = vxor.u32 %v2588, 2147483648
        %v2909 = vxor.u32 %v2589, 2147483648
        %v2910 = vxor.u32 %v2590, 2147483648
        %v2911 = vxor.u32 %v2591, 2147483648
        %v2912 = vxor.u32 %v2592, 2147483648
        %v2913 = vxor.u32 %v2593, 2147483648
        %v2914 = vxor.u32 %v2594, 2147483648
        %v2915 = vxor.u32 %v2595, 2147483648
        %v2916 = vxor.u32 %v2596, 2147483648
        %v2917 = vxor.u32 %v2597, 2147483648
        %v2918 = vxor.u32 %v2598, 2147483648
        %v2919 = vxor.u32 %v2599, 2147483648
        %v2920 = vxor.u32 %v2600, 2147483648
        %v2921 = vxor.u32 %v2601, 2147483648
        %v2922 = vxor.u32 %v2602, 2147483648
        %v2923 = vxor.u32 %v2603, 2147483648
        %v2924 = vxor.u32 %v2604, 2147483648
        %v2925 = vxor.u32 %v2605, 2147483648
        %v2926 = vxor.u32 %v2606, 2147483648
        %v2927 = vxor.u32 %v2607, 2147483648
        %v2928 = vxor.u32 %v2608, 2147483648
        %v2929 = vmul.f32 %v2609, 1.442695
        %v2930 = vpow.pop %v2929
        %v2931 = vmul.f32 %v2610, 1.442695
        %v2932 = vpow.pop %v2931
        %v2933 = vmul.f32 %v2611, 1.442695
        %v2934 = vpow.pop %v2933
        %v2935 = vmul.f32 %v2612, 1.442695
        %v2936 = vpow.pop %v2935
        %v2937 = vmul.f32 %v2613, 1.442695
        %v2938 = vpow.pop %v2937
        %v2939 = vmul.f32 %v2614, 1.442695
        %v2940 = vpow.pop %v2939
        %v2941 = vmul.f32 %v2615, 1.442695
        %v2942 = vpow.pop %v2941
        %v2943 = vmul.f32 %v2616, 1.442695
        %v2944 = vpow.pop %v2943
        %v2945 = vmul.f32 %v2617, 1.442695
        %v2946 = vpow.pop %v2945
        %v2947 = vmul.f32 %v2618, 1.442695
        %v2948 = vpow.pop %v2947
        %v2949 = vmul.f32 %v2619, 1.442695
        %v2950 = vpow.pop %v2949
        %v2951 = vmul.f32 %v2620, 1.442695
        %v2952 = vpow.pop %v2951
        %v2953 = vmul.f32 %v2621, 1.442695
        %v2954 = vpow.pop %v2953
        %v2955 = vmul.f32 %v2622, 1.442695
        %v2956 = vpow.pop %v2955
        %v2957 = vmul.f32 %v2623, 1.442695
        %v2958 = vpow.pop %v2957
        %v2959 = vmul.f32 %v2624, 1.442695
        %v2960 = vpow.pop %v2959
        %v2961 = vmul.f32 %v2625, 1.442695
        %v2962 = vpow.pop %v2961
        %v2963 = vmul.f32 %v2626, 1.442695
        %v2964 = vpow.pop %v2963
        %v2965 = vmul.f32 %v2627, 1.442695
        %v2966 = vpow.pop %v2965
        %v2967 = vmul.f32 %v2628, 1.442695
        %v2968 = vpow.pop %v2967
        %v2969 = vmul.f32 %v2629, 1.442695
        %v2970 = vpow.pop %v2969
        %v2971 = vmul.f32 %v2630, 1.442695
        %v2972 = vpow.pop %v2971
        %v2973 = vmul.f32 %v2631, 1.442695
        %v2974 = vpow.pop %v2973
        %v2975 = vmul.f32 %v2632, 1.442695
        %v2976 = vpow.pop %v2975
        %v2977 = vmul.f32 %v2633, 1.442695
        %v2978 = vpow.pop %v2977
        %v2979 = vmul.f32 %v2634, 1.442695
        %v2980 = vpow.pop %v2979
        %v2981 = vmul.f32 %v2635, 1.442695
        %v2982 = vpow.pop %v2981
        %v2983 = vmul.f32 %v2636, 1.442695
        %v2984 = vpow.pop %v2983
        %v2985 = vmul.f32 %v2637, 1.442695
        %v2986 = vpow.pop %v2985
        %v2987 = vmul.f32 %v2638, 1.442695
        %v2988 = vpow.pop %v2987
        %v2989 = vmul.f32 %v2639, 1.442695
        %v2990 = vpow.pop %v2989
        %v2991 = vmul.f32 %v2640, 1.442695
        %v2992 = vpow.pop %v2991
        %v2993 = vmul.f32 %v2641, 1.442695
        %v2994 = vpow.pop %v2993
        %v2995 = vmul.f32 %v2642, 1.442695
        %v2996 = vpow.pop %v2995
        %v2997 = vmul.f32 %v2643, 1.442695
        %v2998 = vpow.pop %v2997
        %v2999 = vmul.f32 %v2644, 1.442695
        %v3000 = vpow.pop %v2999
        %v3001 = vmul.f32 %v2645, 1.442695
        %v3002 = vpow.pop %v3001
        %v3003 = vmul.f32 %v2646, 1.442695
        %v3004 = vpow.pop %v3003
        %v3005 = vmul.f32 %v2647, 1.442695
        %v3006 = vpow.pop %v3005
        %v3007 = vmul.f32 %v2648, 1.442695
        %v3008 = vpow.pop %v3007
        %v3009 = vmul.f32 %v2649, 1.442695
        %v3010 = vpow.pop %v3009
        %v3011 = vmul.f32 %v2650, 1.442695
        %v3012 = vpow.pop %v3011
        %v3013 = vmul.f32 %v2651, 1.442695
        %v3014 = vpow.pop %v3013
        %v3015 = vmul.f32 %v2652, 1.442695
        %v3016 = vpow.pop %v3015
        %v3017 = vmul.f32 %v2653, 1.442695
        %v3018 = vpow.pop %v3017
        %v3019 = vmul.f32 %v2654, 1.442695
        %v3020 = vpow.pop %v3019
        %v3021 = vmul.f32 %v2655, 1.442695
        %v3022 = vpow.pop %v3021
        %v3023 = vmul.f32 %v2656, 1.442695
        %v3024 = vpow.pop %v3023
        %v3025 = vmul.f32 %v2657, 1.442695
        %v3026 = vpow.pop %v3025
        %v3027 = vmul.f32 %v2658, 1.442695
        %v3028 = vpow.pop %v3027
        %v3029 = vmul.f32 %v2659, 1.442695
        %v3030 = vpow.pop %v3029
        %v3031 = vmul.f32 %v2660, 1.442695
        %v3032 = vpow.pop %v3031
        %v3033 = vmul.f32 %v2661, 1.442695
        %v3034 = vpow.pop %v3033
        %v3035 = vmul.f32 %v2662, 1.442695
        %v3036 = vpow.pop %v3035
        %v3037 = vmul.f32 %v2663, 1.442695
        %v3038 = vpow.pop %v3037
        %v3039 = vmul.f32 %v2664, 1.442695
        %v3040 = vpow.pop %v3039
        %v3041 = vmul.f32 %v2665, 1.442695
        %v3042 = vpow.pop %v3041
        %v3043 = vmul.f32 %v2666, 1.442695
        %v3044 = vpow.pop %v3043
        %v3045 = vmul.f32 %v2667, 1.442695
        %v3046 = vpow.pop %v3045
        %v3047 = vmul.f32 %v2668, 1.442695
        %v3048 = vpow.pop %v3047
        %v3049 = vmul.f32 %v2669, 1.442695
        %v3050 = vpow.pop %v3049
        %v3051 = vmul.f32 %v2670, 1.442695
        %v3052 = vpow.pop %v3051
        %v3053 = vmul.f32 %v2671, 1.442695
        %v3054 = vpow.pop %v3053
        %v3055 = vmul.f32 %v2672, 1.442695
        %v3056 = vpow.pop %v3055
        %v3057 = vmul.f32 %v2673, 1.442695
        %v3058 = vpow.pop %v3057
        %v3059 = vmul.f32 %v2674, 1.442695
        %v3060 = vpow.pop %v3059
        %v3061 = vmul.f32 %v2675, 1.442695
        %v3062 = vpow.pop %v3061
        %v3063 = vmul.f32 %v2676, 1.442695
        %v3064 = vpow.pop %v3063
        %v3065 = vmul.f32 %v2677, 1.442695
        %v3066 = vpow.pop %v3065
        %v3067 = vmul.f32 %v2678, 1.442695
        %v3068 = vpow.pop %v3067
        %v3069 = vmul.f32 %v2679, 1.442695
        %v3070 = vpow.pop %v3069
        %v3071 = vmul.f32 %v2680, 1.442695
        %v3072 = vpow.pop %v3071
        %v3073 = vmul.f32 %v2681, 1.442695
        %v3074 = vpow.pop %v3073
        %v3075 = vmul.f32 %v2682, 1.442695
        %v3076 = vpow.pop %v3075
        %v3077 = vmul.f32 %v2683, 1.442695
        %v3078 = vpow.pop %v3077
        %v3079 = vmul.f32 %v2684, 1.442695
        %v3080 = vpow.pop %v3079
        %v3081 = vmul.f32 %v2685, 1.442695
        %v3082 = vpow.pop %v3081
        %v3083 = vmul.f32 %v2686, 1.442695
        %v3084 = vpow.pop %v3083
        %v3085 = vmul.f32 %v2687, 1.442695
        %v3086 = vpow.pop %v3085
        %v3087 = vmul.f32 %v2688, 1.442695
        %v3088 = vpow.pop %v3087
        %v3089 = vmul.f32 %v2689, 1.442695
        %v3090 = vpow.pop %v3089
        %v3091 = vmul.f32 %v2690, 1.442695
        %v3092 = vpow.pop %v3091
        %v3093 = vmul.f32 %v2691, 1.442695
        %v3094 = vpow.pop %v3093
        %v3095 = vmul.f32 %v2692, 1.442695
        %v3096 = vpow.pop %v3095
        %v3097 = vmul.f32 %v2693, 1.442695
        %v3098 = vpow.pop %v3097
        %v3099 = vmul.f32 %v2694, 1.442695
        %v3100 = vpow.pop %v3099
        %v3101 = vmul.f32 %v2695, 1.442695
        %v3102 = vpow.pop %v3101
        %v3103 = vmul.f32 %v2696, 1.442695
        %v3104 = vpow.pop %v3103
        %v3105 = vmul.f32 %v2697, 1.442695
        %v3106 = vpow.pop %v3105
        %v3107 = vmul.f32 %v2698, 1.442695
        %v3108 = vpow.pop %v3107
        %v3109 = vmul.f32 %v2699, 1.442695
        %v3110 = vpow.pop %v3109
        %v3111 = vmul.f32 %v2700, 1.442695
        %v3112 = vpow.pop %v3111
        %v3113 = vmul.f32 %v2701, 1.442695
        %v3114 = vpow.pop %v3113
        %v3115 = vmul.f32 %v2702, 1.442695
        %v3116 = vpow.pop %v3115
        %v3117 = vmul.f32 %v2703, 1.442695
        %v3118 = vpow.pop %v3117
        %v3119 = vmul.f32 %v2704, 1.442695
        %v3120 = vpow.pop %v3119
        %v3121 = vmul.f32 %v2705, 1.442695
        %v3122 = vpow.pop %v3121
        %v3123 = vmul.f32 %v2706, 1.442695
        %v3124 = vpow.pop %v3123
        %v3125 = vmul.f32 %v2707, 1.442695
        %v3126 = vpow.pop %v3125
        %v3127 = vmul.f32 %v2708, 1.442695
        %v3128 = vpow.pop %v3127
        %v3129 = vmul.f32 %v2709, 1.442695
        %v3130 = vpow.pop %v3129
        %v3131 = vmul.f32 %v2710, 1.442695
        %v3132 = vpow.pop %v3131
        %v3133 = vmul.f32 %v2711, 1.442695
        %v3134 = vpow.pop %v3133
        %v3135 = vmul.f32 %v2712, 1.442695
        %v3136 = vpow.pop %v3135
        %v3137 = vmul.f32 %v2713, 1.442695
        %v3138 = vpow.pop %v3137
        %v3139 = vmul.f32 %v2714, 1.442695
        %v3140 = vpow.pop %v3139
        %v3141 = vmul.f32 %v2715, 1.442695
        %v3142 = vpow.pop %v3141
        %v3143 = vmul.f32 %v2716, 1.442695
        %v3144 = vpow.pop %v3143
        %v3145 = vmul.f32 %v2717, 1.442695
        %v3146 = vpow.pop %v3145
        %v3147 = vmul.f32 %v2718, 1.442695
        %v3148 = vpow.pop %v3147
        %v3149 = vmul.f32 %v2719, 1.442695
        %v3150 = vpow.pop %v3149
        %v3151 = vmul.f32 %v2720, 1.442695
        %v3152 = vpow.pop %v3151
        %v3153 = vmul.f32 %v2721, 1.442695
        %v3154 = vpow.pop %v3153
        %v3155 = vmul.f32 %v2722, 1.442695
        %v3156 = vpow.pop %v3155
        %v3157 = vmul.f32 %v2723, 1.442695
        %v3158 = vpow.pop %v3157
        %v3159 = vmul.f32 %v2724, 1.442695
        %v3160 = vpow.pop %v3159
        %v3161 = vmul.f32 %v2725, 1.442695
        %v3162 = vpow.pop %v3161
        %v3163 = vmul.f32 %v2726, 1.442695
        %v3164 = vpow.pop %v3163
        %v3165 = vmul.f32 %v2727, 1.442695
        %v3166 = vpow.pop %v3165
        %v3167 = vmul.f32 %v2728, 1.442695
        %v3168 = vpow.pop %v3167
        %v3169 = vmul.f32 %v2729, 1.442695
        %v3170 = vpow.pop %v3169
        %v3171 = vmul.f32 %v2730, 1.442695
        %v3172 = vpow.pop %v3171
        %v3173 = vmul.f32 %v2731, 1.442695
        %v3174 = vpow.pop %v3173
        %v3175 = vmul.f32 %v2732, 1.442695
        %v3176 = vpow.pop %v3175
        %v3177 = vmul.f32 %v2733, 1.442695
        %v3178 = vpow.pop %v3177
        %v3179 = vmul.f32 %v2734, 1.442695
        %v3180 = vpow.pop %v3179
        %v3181 = vmul.f32 %v2735, 1.442695
        %v3182 = vpow.pop %v3181
        %v3183 = vmul.f32 %v2736, 1.442695
        %v3184 = vpow.pop %v3183
        %v3185 = vmul.f32 %v2737, 1.442695
        %v3186 = vpow.pop %v3185
        %v3187 = vmul.f32 %v2738, 1.442695
        %v3188 = vpow.pop %v3187
        %v3189 = vmul.f32 %v2739, 1.442695
        %v3190 = vpow.pop %v3189
        %v3191 = vmul.f32 %v2740, 1.442695
        %v3192 = vpow.pop %v3191
        %v3193 = vmul.f32 %v2741, 1.442695
        %v3194 = vpow.pop %v3193
        %v3195 = vmul.f32 %v2742, 1.442695
        %v3196 = vpow.pop %v3195
        %v3197 = vmul.f32 %v2743, 1.442695
        %v3198 = vpow.pop %v3197
        %v3199 = vmul.f32 %v2744, 1.442695
        %v3200 = vpow.pop %v3199
        %v3201 = vmul.f32 %v2745, 1.442695
        %v3202 = vpow.pop %v3201
        %v3203 = vmul.f32 %v2746, 1.442695
        %v3204 = vpow.pop %v3203
        %v3205 = vmul.f32 %v2747, 1.442695
        %v3206 = vpow.pop %v3205
        %v3207 = vmul.f32 %v2748, 1.442695
        %v3208 = vpow.pop %v3207
        %v3209 = vmul.f32 %v2749, 1.442695
        %v3210 = vpow.pop %v3209
        %v3211 = vmul.f32 %v2750, 1.442695
        %v3212 = vpow.pop %v3211
        %v3213 = vmul.f32 %v2751, 1.442695
        %v3214 = vpow.pop %v3213
        %v3215 = vmul.f32 %v2752, 1.442695
        %v3216 = vpow.pop %v3215
        %v3217 = vmul.f32 %v2753, 1.442695
        %v3218 = vpow.pop %v3217
        %v3219 = vmul.f32 %v2754, 1.442695
        %v3220 = vpow.pop %v3219
        %v3221 = vmul.f32 %v2755, 1.442695
        %v3222 = vpow.pop %v3221
        %v3223 = vmul.f32 %v2756, 1.442695
        %v3224 = vpow.pop %v3223
        %v3225 = vmul.f32 %v2757, 1.442695
        %v3226 = vpow.pop %v3225
        %v3227 = vmul.f32 %v2758, 1.442695
        %v3228 = vpow.pop %v3227
        %v3229 = vmul.f32 %v2759, 1.442695
        %v3230 = vpow.pop %v3229
        %v3231 = vmul.f32 %v2760, 1.442695
        %v3232 = vpow.pop %v3231
        %v3233 = vmul.f32 %v2761, 1.442695
        %v3234 = vpow.pop %v3233
        %v3235 = vmul.f32 %v2762, 1.442695
        %v3236 = vpow.pop %v3235
        %v3237 = vmul.f32 %v2763, 1.442695
        %v3238 = vpow.pop %v3237
        %v3239 = vmul.f32 %v2764, 1.442695
        %v3240 = vpow.pop %v3239
        %v3241 = vmul.f32 %v2765, 1.442695
        %v3242 = vpow.pop %v3241
        %v3243 = vmul.f32 %v2766, 1.442695
        %v3244 = vpow.pop %v3243
        %v3245 = vmul.f32 %v2767, 1.442695
        %v3246 = vpow.pop %v3245
        %v3247 = vmul.f32 %v2768, 1.442695
        %v3248 = vpow.pop %v3247
        %v3249 = vmul.f32 %v2769, 1.442695
        %v3250 = vpow.pop %v3249
        %v3251 = vmul.f32 %v2770, 1.442695
        %v3252 = vpow.pop %v3251
        %v3253 = vmul.f32 %v2771, 1.442695
        %v3254 = vpow.pop %v3253
        %v3255 = vmul.f32 %v2772, 1.442695
        %v3256 = vpow.pop %v3255
        %v3257 = vmul.f32 %v2773, 1.442695
        %v3258 = vpow.pop %v3257
        %v3259 = vmul.f32 %v2774, 1.442695
        %v3260 = vpow.pop %v3259
        %v3261 = vmul.f32 %v2775, 1.442695
        %v3262 = vpow.pop %v3261
        %v3263 = vmul.f32 %v2776, 1.442695
        %v3264 = vpow.pop %v3263
        %v3265 = vmul.f32 %v2777, 1.442695
        %v3266 = vpow.pop %v3265
        %v3267 = vmul.f32 %v2778, 1.442695
        %v3268 = vpow.pop %v3267
        %v3269 = vmul.f32 %v2779, 1.442695
        %v3270 = vpow.pop %v3269
        %v3271 = vmul.f32 %v2780, 1.442695
        %v3272 = vpow.pop %v3271
        %v3273 = vmul.f32 %v2781, 1.442695
        %v3274 = vpow.pop %v3273
        %v3275 = vmul.f32 %v2782, 1.442695
        %v3276 = vpow.pop %v3275
        %v3277 = vmul.f32 %v2783, 1.442695
        %v3278 = vpow.pop %v3277
        %v3279 = vmul.f32 %v2784, 1.442695
        %v3280 = vpow.pop %v3279
        %v3281 = vmul.f32 %v2785, 1.442695
        %v3282 = vpow.pop %v3281
        %v3283 = vmul.f32 %v2786, 1.442695
        %v3284 = vpow.pop %v3283
        %v3285 = vmul.f32 %v2787, 1.442695
        %v3286 = vpow.pop %v3285
        %v3287 = vmul.f32 %v2788, 1.442695
        %v3288 = vpow.pop %v3287
        %v3289 = vmul.f32 %v2789, 1.442695
        %v3290 = vpow.pop %v3289
        %v3291 = vmul.f32 %v2790, 1.442695
        %v3292 = vpow.pop %v3291
        %v3293 = vmul.f32 %v2791, 1.442695
        %v3294 = vpow.pop %v3293
        %v3295 = vmul.f32 %v2792, 1.442695
        %v3296 = vpow.pop %v3295
        %v3297 = vmul.f32 %v2793, 1.442695
        %v3298 = vpow.pop %v3297
        %v3299 = vmul.f32 %v2794, 1.442695
        %v3300 = vpow.pop %v3299
        %v3301 = vmul.f32 %v2795, 1.442695
        %v3302 = vpow.pop %v3301
        %v3303 = vmul.f32 %v2796, 1.442695
        %v3304 = vpow.pop %v3303
        %v3305 = vmul.f32 %v2797, 1.442695
        %v3306 = vpow.pop %v3305
        %v3307 = vmul.f32 %v2798, 1.442695
        %v3308 = vpow.pop %v3307
        %v3309 = vmul.f32 %v2799, 1.442695
        %v3310 = vpow.pop %v3309
        %v3311 = vmul.f32 %v2800, 1.442695
        %v3312 = vpow.pop %v3311
        %v3313 = vmul.f32 %v2801, 1.442695
        %v3314 = vpow.pop %v3313
        %v3315 = vmul.f32 %v2802, 1.442695
        %v3316 = vpow.pop %v3315
        %v3317 = vmul.f32 %v2803, 1.442695
        %v3318 = vpow.pop %v3317
        %v3319 = vmul.f32 %v2804, 1.442695
        %v3320 = vpow.pop %v3319
        %v3321 = vmul.f32 %v2805, 1.442695
        %v3322 = vpow.pop %v3321
        %v3323 = vmul.f32 %v2806, 1.442695
        %v3324 = vpow.pop %v3323
        %v3325 = vmul.f32 %v2807, 1.442695
        %v3326 = vpow.pop %v3325
        %v3327 = vmul.f32 %v2808, 1.442695
        %v3328 = vpow.pop %v3327
        %v3329 = vmul.f32 %v2809, 1.442695
        %v3330 = vpow.pop %v3329
        %v3331 = vmul.f32 %v2810, 1.442695
        %v3332 = vpow.pop %v3331
        %v3333 = vmul.f32 %v2811, 1.442695
        %v3334 = vpow.pop %v3333
        %v3335 = vmul.f32 %v2812, 1.442695
        %v3336 = vpow.pop %v3335
        %v3337 = vmul.f32 %v2813, 1.442695
        %v3338 = vpow.pop %v3337
        %v3339 = vmul.f32 %v2814, 1.442695
        %v3340 = vpow.pop %v3339
        %v3341 = vmul.f32 %v2815, 1.442695
        %v3342 = vpow.pop %v3341
        %v3343 = vmul.f32 %v2816, 1.442695
        %v3344 = vpow.pop %v3343
        %v3345 = vmul.f32 %v2817, 1.442695
        %v3346 = vpow.pop %v3345
        %v3347 = vmul.f32 %v2818, 1.442695
        %v3348 = vpow.pop %v3347
        %v3349 = vmul.f32 %v2819, 1.442695
        %v3350 = vpow.pop %v3349
        %v3351 = vmul.f32 %v2820, 1.442695
        %v3352 = vpow.pop %v3351
        %v3353 = vmul.f32 %v2821, 1.442695
        %v3354 = vpow.pop %v3353
        %v3355 = vmul.f32 %v2822, 1.442695
        %v3356 = vpow.pop %v3355
        %v3357 = vmul.f32 %v2823, 1.442695
        %v3358 = vpow.pop %v3357
        %v3359 = vmul.f32 %v2824, 1.442695
        %v3360 = vpow.pop %v3359
        %v3361 = vmul.f32 %v2825, 1.442695
        %v3362 = vpow.pop %v3361
        %v3363 = vmul.f32 %v2826, 1.442695
        %v3364 = vpow.pop %v3363
        %v3365 = vmul.f32 %v2827, 1.442695
        %v3366 = vpow.pop %v3365
        %v3367 = vmul.f32 %v2828, 1.442695
        %v3368 = vpow.pop %v3367
        %v3369 = vmul.f32 %v2829, 1.442695
        %v3370 = vpow.pop %v3369
        %v3371 = vmul.f32 %v2830, 1.442695
        %v3372 = vpow.pop %v3371
        %v3373 = vmul.f32 %v2831, 1.442695
        %v3374 = vpow.pop %v3373
        %v3375 = vmul.f32 %v2832, 1.442695
        %v3376 = vpow.pop %v3375
        %v3377 = vmul.f32 %v2833, 1.442695
        %v3378 = vpow.pop %v3377
        %v3379 = vmul.f32 %v2834, 1.442695
        %v3380 = vpow.pop %v3379
        %v3381 = vmul.f32 %v2835, 1.442695
        %v3382 = vpow.pop %v3381
        %v3383 = vmul.f32 %v2836, 1.442695
        %v3384 = vpow.pop %v3383
        %v3385 = vmul.f32 %v2837, 1.442695
        %v3386 = vpow.pop %v3385
        %v3387 = vmul.f32 %v2838, 1.442695
        %v3388 = vpow.pop %v3387
        %v3389 = vmul.f32 %v2839, 1.442695
        %v3390 = vpow.pop %v3389
        %v3391 = vmul.f32 %v2840, 1.442695
        %v3392 = vpow.pop %v3391
        %v3393 = vmul.f32 %v2841, 1.442695
        %v3394 = vpow.pop %v3393
        %v3395 = vmul.f32 %v2842, 1.442695
        %v3396 = vpow.pop %v3395
        %v3397 = vmul.f32 %v2843, 1.442695
        %v3398 = vpow.pop %v3397
        %v3399 = vmul.f32 %v2844, 1.442695
        %v3400 = vpow.pop %v3399
        %v3401 = vmul.f32 %v2845, 1.442695
        %v3402 = vpow.pop %v3401
        %v3403 = vmul.f32 %v2846, 1.442695
        %v3404 = vpow.pop %v3403
        %v3405 = vmul.f32 %v2847, 1.442695
        %v3406 = vpow.pop %v3405
        %v3407 = vmul.f32 %v2848, 1.442695
        %v3408 = vpow.pop %v3407
        %v3409 = vmul.f32 %v2849, 1.442695
        %v3410 = vpow.pop %v3409
        %v3411 = vmul.f32 %v2850, 1.442695
        %v3412 = vpow.pop %v3411
        %v3413 = vmul.f32 %v2851, 1.442695
        %v3414 = vpow.pop %v3413
        %v3415 = vmul.f32 %v2852, 1.442695
        %v3416 = vpow.pop %v3415
        %v3417 = vmul.f32 %v2853, 1.442695
        %v3418 = vpow.pop %v3417
        %v3419 = vmul.f32 %v2854, 1.442695
        %v3420 = vpow.pop %v3419
        %v3421 = vmul.f32 %v2855, 1.442695
        %v3422 = vpow.pop %v3421
        %v3423 = vmul.f32 %v2856, 1.442695
        %v3424 = vpow.pop %v3423
        %v3425 = vmul.f32 %v2857, 1.442695
        %v3426 = vpow.pop %v3425
        %v3427 = vmul.f32 %v2858, 1.442695
        %v3428 = vpow.pop %v3427
        %v3429 = vmul.f32 %v2859, 1.442695
        %v3430 = vpow.pop %v3429
        %v3431 = vmul.f32 %v2860, 1.442695
        %v3432 = vpow.pop %v3431
        %v3433 = vmul.f32 %v2861, 1.442695
        %v3434 = vpow.pop %v3433
        %v3435 = vmul.f32 %v2862, 1.442695
        %v3436 = vpow.pop %v3435
        %v3437 = vmul.f32 %v2863, 1.442695
        %v3438 = vpow.pop %v3437
        %v3439 = vmul.f32 %v2864, 1.442695
        %v3440 = vpow.pop %v3439
        %v3441 = vmul.f32 %v2865, 1.442695
        %v3442 = vpow.pop %v3441
        %v3443 = vmul.f32 %v2866, 1.442695
        %v3444 = vpow.pop %v3443
        %v3445 = vmul.f32 %v2867, 1.442695
        %v3446 = vpow.pop %v3445
        %v3447 = vmul.f32 %v2868, 1.442695
        %v3448 = vpow.pop %v3447
        %v3449 = vmul.f32 %v2869, 1.442695
        %v3450 = vpow.pop %v3449
        %v3451 = vmul.f32 %v2870, 1.442695
        %v3452 = vpow.pop %v3451
        %v3453 = vmul.f32 %v2871, 1.442695
        %v3454 = vpow.pop %v3453
        %v3455 = vmul.f32 %v2872, 1.442695
        %v3456 = vpow.pop %v3455
        %v3457 = vmul.f32 %v2873, 1.442695
        %v3458 = vpow.pop %v3457
        %v3459 = vmul.f32 %v2874, 1.442695
        %v3460 = vpow.pop %v3459
        %v3461 = vmul.f32 %v2875, 1.442695
        %v3462 = vpow.pop %v3461
        %v3463 = vmul.f32 %v2876, 1.442695
        %v3464 = vpow.pop %v3463
        %v3465 = vmul.f32 %v2877, 1.442695
        %v3466 = vpow.pop %v3465
        %v3467 = vmul.f32 %v2878, 1.442695
        %v3468 = vpow.pop %v3467
        %v3469 = vmul.f32 %v2879, 1.442695
        %v3470 = vpow.pop %v3469
        %v3471 = vmul.f32 %v2880, 1.442695
        %v3472 = vpow.pop %v3471
        %v3473 = vmul.f32 %v2881, 1.442695
        %v3474 = vpow.pop %v3473
        %v3475 = vmul.f32 %v2882, 1.442695
        %v3476 = vpow.pop %v3475
        %v3477 = vmul.f32 %v2883, 1.442695
        %v3478 = vpow.pop %v3477
        %v3479 = vmul.f32 %v2884, 1.442695
        %v3480 = vpow.pop %v3479
        %v3481 = vmul.f32 %v2885, 1.442695
        %v3482 = vpow.pop %v3481
        %v3483 = vmul.f32 %v2886, 1.442695
        %v3484 = vpow.pop %v3483
        %v3485 = vmul.f32 %v2887, 1.442695
        %v3486 = vpow.pop %v3485
        %v3487 = vmul.f32 %v2888, 1.442695
        %v3488 = vpow.pop %v3487
        %v3489 = vmul.f32 %v2889, 1.442695
        %v3490 = vpow.pop %v3489
        %v3491 = vmul.f32 %v2890, 1.442695
        %v3492 = vpow.pop %v3491
        %v3493 = vmul.f32 %v2891, 1.442695
        %v3494 = vpow.pop %v3493
        %v3495 = vmul.f32 %v2892, 1.442695
        %v3496 = vpow.pop %v3495
        %v3497 = vmul.f32 %v2893, 1.442695
        %v3498 = vpow.pop %v3497
        %v3499 = vmul.f32 %v2894, 1.442695
        %v3500 = vpow.pop %v3499
        %v3501 = vmul.f32 %v2895, 1.442695
        %v3502 = vpow.pop %v3501
        %v3503 = vmul.f32 %v2896, 1.442695
        %v3504 = vpow.pop %v3503
        %v3505 = vmul.f32 %v2897, 1.442695
        %v3506 = vpow.pop %v3505
        %v3507 = vmul.f32 %v2898, 1.442695
        %v3508 = vpow.pop %v3507
        %v3509 = vmul.f32 %v2899, 1.442695
        %v3510 = vpow.pop %v3509
        %v3511 = vmul.f32 %v2900, 1.442695
        %v3512 = vpow.pop %v3511
        %v3513 = vmul.f32 %v2901, 1.442695
        %v3514 = vpow.pop %v3513
        %v3515 = vmul.f32 %v2902, 1.442695
        %v3516 = vpow.pop %v3515
        %v3517 = vmul.f32 %v2903, 1.442695
        %v3518 = vpow.pop %v3517
        %v3519 = vmul.f32 %v2904, 1.442695
        %v3520 = vpow.pop %v3519
        %v3521 = vmul.f32 %v2905, 1.442695
        %v3522 = vpow.pop %v3521
        %v3523 = vmul.f32 %v2906, 1.442695
        %v3524 = vpow.pop %v3523
        %v3525 = vmul.f32 %v2907, 1.442695
        %v3526 = vpow.pop %v3525
        %v3527 = vmul.f32 %v2908, 1.442695
        %v3528 = vpow.pop %v3527
        %v3529 = vmul.f32 %v2909, 1.442695
        %v3530 = vpow.pop %v3529
        %v3531 = vmul.f32 %v2910, 1.442695
        %v3532 = vpow.pop %v3531
        %v3533 = vmul.f32 %v2911, 1.442695
        %v3534 = vpow.pop %v3533
        %v3535 = vmul.f32 %v2912, 1.442695
        %v3536 = vpow.pop %v3535
        %v3537 = vmul.f32 %v2913, 1.442695
        %v3538 = vpow.pop %v3537
        %v3539 = vmul.f32 %v2914, 1.442695
        %v3540 = vpow.pop %v3539
        %v3541 = vmul.f32 %v2915, 1.442695
        %v3542 = vpow.pop %v3541
        %v3543 = vmul.f32 %v2916, 1.442695
        %v3544 = vpow.pop %v3543
        %v3545 = vmul.f32 %v2917, 1.442695
        %v3546 = vpow.pop %v3545
        %v3547 = vmul.f32 %v2918, 1.442695
        %v3548 = vpow.pop %v3547
        %v3549 = vmul.f32 %v2919, 1.442695
        %v3550 = vpow.pop %v3549
        %v3551 = vmul.f32 %v2920, 1.442695
        %v3552 = vpow.pop %v3551
        %v3553 = vmul.f32 %v2921, 1.442695
        %v3554 = vpow.pop %v3553
        %v3555 = vmul.f32 %v2922, 1.442695
        %v3556 = vpow.pop %v3555
        %v3557 = vmul.f32 %v2923, 1.442695
        %v3558 = vpow.pop %v3557
        %v3559 = vmul.f32 %v2924, 1.442695
        %v3560 = vpow.pop %v3559
        %v3561 = vmul.f32 %v2925, 1.442695
        %v3562 = vpow.pop %v3561
        %v3563 = vmul.f32 %v2926, 1.442695
        %v3564 = vpow.pop %v3563
        %v3565 = vmul.f32 %v2927, 1.442695
        %v3566 = vpow.pop %v3565
        %v3567 = vmul.f32 %v2928, 1.442695
        %v3568 = vpow.pop %v3567
        %v3569 = vadd.f32 %v2930, 1.0
        %v3570 = vadd.f32 %v2932, 1.0
        %v3571 = vadd.f32 %v2934, 1.0
        %v3572 = vadd.f32 %v2936, 1.0
        %v3573 = vadd.f32 %v2938, 1.0
        %v3574 = vadd.f32 %v2940, 1.0
        %v3575 = vadd.f32 %v2942, 1.0
        %v3576 = vadd.f32 %v2944, 1.0
        %v3577 = vadd.f32 %v2946, 1.0
        %v3578 = vadd.f32 %v2948, 1.0
        %v3579 = vadd.f32 %v2950, 1.0
        %v3580 = vadd.f32 %v2952, 1.0
        %v3581 = vadd.f32 %v2954, 1.0
        %v3582 = vadd.f32 %v2956, 1.0
        %v3583 = vadd.f32 %v2958, 1.0
        %v3584 = vadd.f32 %v2960, 1.0
        %v3585 = vadd.f32 %v2962, 1.0
        %v3586 = vadd.f32 %v2964, 1.0
        %v3587 = vadd.f32 %v2966, 1.0
        %v3588 = vadd.f32 %v2968, 1.0
        %v3589 = vadd.f32 %v2970, 1.0
        %v3590 = vadd.f32 %v2972, 1.0
        %v3591 = vadd.f32 %v2974, 1.0
        %v3592 = vadd.f32 %v2976, 1.0
        %v3593 = vadd.f32 %v2978, 1.0
        %v3594 = vadd.f32 %v2980, 1.0
        %v3595 = vadd.f32 %v2982, 1.0
        %v3596 = vadd.f32 %v2984, 1.0
        %v3597 = vadd.f32 %v2986, 1.0
        %v3598 = vadd.f32 %v2988, 1.0
        %v3599 = vadd.f32 %v2990, 1.0
        %v3600 = vadd.f32 %v2992, 1.0
        %v3601 = vadd.f32 %v2994, 1.0
        %v3602 = vadd.f32 %v2996, 1.0
        %v3603 = vadd.f32 %v2998, 1.0
        %v3604 = vadd.f32 %v3000, 1.0
        %v3605 = vadd.f32 %v3002, 1.0
        %v3606 = vadd.f32 %v3004, 1.0
        %v3607 = vadd.f32 %v3006, 1.0
        %v3608 = vadd.f32 %v3008, 1.0
        %v3609 = vadd.f32 %v3010, 1.0
        %v3610 = vadd.f32 %v3012, 1.0
        %v3611 = vadd.f32 %v3014, 1.0
        %v3612 = vadd.f32 %v3016, 1.0
        %v3613 = vadd.f32 %v3018, 1.0
        %v3614 = vadd.f32 %v3020, 1.0
        %v3615 = vadd.f32 %v3022, 1.0
        %v3616 = vadd.f32 %v3024, 1.0
        %v3617 = vadd.f32 %v3026, 1.0
        %v3618 = vadd.f32 %v3028, 1.0
        %v3619 = vadd.f32 %v3030, 1.0
        %v3620 = vadd.f32 %v3032, 1.0
        %v3621 = vadd.f32 %v3034, 1.0
        %v3622 = vadd.f32 %v3036, 1.0
        %v3623 = vadd.f32 %v3038, 1.0
        %v3624 = vadd.f32 %v3040, 1.0
        %v3625 = vadd.f32 %v3042, 1.0
        %v3626 = vadd.f32 %v3044, 1.0
        %v3627 = vadd.f32 %v3046, 1.0
        %v3628 = vadd.f32 %v3048, 1.0
        %v3629 = vadd.f32 %v3050, 1.0
        %v3630 = vadd.f32 %v3052, 1.0
        %v3631 = vadd.f32 %v3054, 1.0
        %v3632 = vadd.f32 %v3056, 1.0
        %v3633 = vadd.f32 %v3058, 1.0
        %v3634 = vadd.f32 %v3060, 1.0
        %v3635 = vadd.f32 %v3062, 1.0
        %v3636 = vadd.f32 %v3064, 1.0
        %v3637 = vadd.f32 %v3066, 1.0
        %v3638 = vadd.f32 %v3068, 1.0
        %v3639 = vadd.f32 %v3070, 1.0
        %v3640 = vadd.f32 %v3072, 1.0
        %v3641 = vadd.f32 %v3074, 1.0
        %v3642 = vadd.f32 %v3076, 1.0
        %v3643 = vadd.f32 %v3078, 1.0
        %v3644 = vadd.f32 %v3080, 1.0
        %v3645 = vadd.f32 %v3082, 1.0
        %v3646 = vadd.f32 %v3084, 1.0
        %v3647 = vadd.f32 %v3086, 1.0
        %v3648 = vadd.f32 %v3088, 1.0
        %v3649 = vadd.f32 %v3090, 1.0
        %v3650 = vadd.f32 %v3092, 1.0
        %v3651 = vadd.f32 %v3094, 1.0
        %v3652 = vadd.f32 %v3096, 1.0
        %v3653 = vadd.f32 %v3098, 1.0
        %v3654 = vadd.f32 %v3100, 1.0
        %v3655 = vadd.f32 %v3102, 1.0
        %v3656 = vadd.f32 %v3104, 1.0
        %v3657 = vadd.f32 %v3106, 1.0
        %v3658 = vadd.f32 %v3108, 1.0
        %v3659 = vadd.f32 %v3110, 1.0
        %v3660 = vadd.f32 %v3112, 1.0
        %v3661 = vadd.f32 %v3114, 1.0
        %v3662 = vadd.f32 %v3116, 1.0
        %v3663 = vadd.f32 %v3118, 1.0
        %v3664 = vadd.f32 %v3120, 1.0
        %v3665 = vadd.f32 %v3122, 1.0
        %v3666 = vadd.f32 %v3124, 1.0
        %v3667 = vadd.f32 %v3126, 1.0
        %v3668 = vadd.f32 %v3128, 1.0
        %v3669 = vadd.f32 %v3130, 1.0
        %v3670 = vadd.f32 %v3132, 1.0
        %v3671 = vadd.f32 %v3134, 1.0
        %v3672 = vadd.f32 %v3136, 1.0
        %v3673 = vadd.f32 %v3138, 1.0
        %v3674 = vadd.f32 %v3140, 1.0
        %v3675 = vadd.f32 %v3142, 1.0
        %v3676 = vadd.f32 %v3144, 1.0
        %v3677 = vadd.f32 %v3146, 1.0
        %v3678 = vadd.f32 %v3148, 1.0
        %v3679 = vadd.f32 %v3150, 1.0
        %v3680 = vadd.f32 %v3152, 1.0
        %v3681 = vadd.f32 %v3154, 1.0
        %v3682 = vadd.f32 %v3156, 1.0
        %v3683 = vadd.f32 %v3158, 1.0
        %v3684 = vadd.f32 %v3160, 1.0
        %v3685 = vadd.f32 %v3162, 1.0
        %v3686 = vadd.f32 %v3164, 1.0
        %v3687 = vadd.f32 %v3166, 1.0
        %v3688 = vadd.f32 %v3168, 1.0
        %v3689 = vadd.f32 %v3170, 1.0
        %v3690 = vadd.f32 %v3172, 1.0
        %v3691 = vadd.f32 %v3174, 1.0
        %v3692 = vadd.f32 %v3176, 1.0
        %v3693 = vadd.f32 %v3178, 1.0
        %v3694 = vadd.f32 %v3180, 1.0
        %v3695 = vadd.f32 %v3182, 1.0
        %v3696 = vadd.f32 %v3184, 1.0
        %v3697 = vadd.f32 %v3186, 1.0
        %v3698 = vadd.f32 %v3188, 1.0
        %v3699 = vadd.f32 %v3190, 1.0
        %v3700 = vadd.f32 %v3192, 1.0
        %v3701 = vadd.f32 %v3194, 1.0
        %v3702 = vadd.f32 %v3196, 1.0
        %v3703 = vadd.f32 %v3198, 1.0
        %v3704 = vadd.f32 %v3200, 1.0
        %v3705 = vadd.f32 %v3202, 1.0
        %v3706 = vadd.f32 %v3204, 1.0
        %v3707 = vadd.f32 %v3206, 1.0
        %v3708 = vadd.f32 %v3208, 1.0
        %v3709 = vadd.f32 %v3210, 1.0
        %v3710 = vadd.f32 %v3212, 1.0
        %v3711 = vadd.f32 %v3214, 1.0
        %v3712 = vadd.f32 %v3216, 1.0
        %v3713 = vadd.f32 %v3218, 1.0
        %v3714 = vadd.f32 %v3220, 1.0
        %v3715 = vadd.f32 %v3222, 1.0
        %v3716 = vadd.f32 %v3224, 1.0
        %v3717 = vadd.f32 %v3226, 1.0
        %v3718 = vadd.f32 %v3228, 1.0
        %v3719 = vadd.f32 %v3230, 1.0
        %v3720 = vadd.f32 %v3232, 1.0
        %v3721 = vadd.f32 %v3234, 1.0
        %v3722 = vadd.f32 %v3236, 1.0
        %v3723 = vadd.f32 %v3238, 1.0
        %v3724 = vadd.f32 %v3240, 1.0
        %v3725 = vadd.f32 %v3242, 1.0
        %v3726 = vadd.f32 %v3244, 1.0
        %v3727 = vadd.f32 %v3246, 1.0
        %v3728 = vadd.f32 %v3248, 1.0
        %v3729 = vadd.f32 %v3250, 1.0
        %v3730 = vadd.f32 %v3252, 1.0
        %v3731 = vadd.f32 %v3254, 1.0
        %v3732 = vadd.f32 %v3256, 1.0
        %v3733 = vadd.f32 %v3258, 1.0
        %v3734 = vadd.f32 %v3260, 1.0
        %v3735 = vadd.f32 %v3262, 1.0
        %v3736 = vadd.f32 %v3264, 1.0
        %v3737 = vadd.f32 %v3266, 1.0
        %v3738 = vadd.f32 %v3268, 1.0
        %v3739 = vadd.f32 %v3270, 1.0
        %v3740 = vadd.f32 %v3272, 1.0
        %v3741 = vadd.f32 %v3274, 1.0
        %v3742 = vadd.f32 %v3276, 1.0
        %v3743 = vadd.f32 %v3278, 1.0
        %v3744 = vadd.f32 %v3280, 1.0
        %v3745 = vadd.f32 %v3282, 1.0
        %v3746 = vadd.f32 %v3284, 1.0
        %v3747 = vadd.f32 %v3286, 1.0
        %v3748 = vadd.f32 %v3288, 1.0
        %v3749 = vadd.f32 %v3290, 1.0
        %v3750 = vadd.f32 %v3292, 1.0
        %v3751 = vadd.f32 %v3294, 1.0
        %v3752 = vadd.f32 %v3296, 1.0
        %v3753 = vadd.f32 %v3298, 1.0
        %v3754 = vadd.f32 %v3300, 1.0
        %v3755 = vadd.f32 %v3302, 1.0
        %v3756 = vadd.f32 %v3304, 1.0
        %v3757 = vadd.f32 %v3306, 1.0
        %v3758 = vadd.f32 %v3308, 1.0
        %v3759 = vadd.f32 %v3310, 1.0
        %v3760 = vadd.f32 %v3312, 1.0
        %v3761 = vadd.f32 %v3314, 1.0
        %v3762 = vadd.f32 %v3316, 1.0
        %v3763 = vadd.f32 %v3318, 1.0
        %v3764 = vadd.f32 %v3320, 1.0
        %v3765 = vadd.f32 %v3322, 1.0
        %v3766 = vadd.f32 %v3324, 1.0
        %v3767 = vadd.f32 %v3326, 1.0
        %v3768 = vadd.f32 %v3328, 1.0
        %v3769 = vadd.f32 %v3330, 1.0
        %v3770 = vadd.f32 %v3332, 1.0
        %v3771 = vadd.f32 %v3334, 1.0
        %v3772 = vadd.f32 %v3336, 1.0
        %v3773 = vadd.f32 %v3338, 1.0
        %v3774 = vadd.f32 %v3340, 1.0
        %v3775 = vadd.f32 %v3342, 1.0
        %v3776 = vadd.f32 %v3344, 1.0
        %v3777 = vadd.f32 %v3346, 1.0
        %v3778 = vadd.f32 %v3348, 1.0
        %v3779 = vadd.f32 %v3350, 1.0
        %v3780 = vadd.f32 %v3352, 1.0
        %v3781 = vadd.f32 %v3354, 1.0
        %v3782 = vadd.f32 %v3356, 1.0
        %v3783 = vadd.f32 %v3358, 1.0
        %v3784 = vadd.f32 %v3360, 1.0
        %v3785 = vadd.f32 %v3362, 1.0
        %v3786 = vadd.f32 %v3364, 1.0
        %v3787 = vadd.f32 %v3366, 1.0
        %v3788 = vadd.f32 %v3368, 1.0
        %v3789 = vadd.f32 %v3370, 1.0
        %v3790 = vadd.f32 %v3372, 1.0
        %v3791 = vadd.f32 %v3374, 1.0
        %v3792 = vadd.f32 %v3376, 1.0
        %v3793 = vadd.f32 %v3378, 1.0
        %v3794 = vadd.f32 %v3380, 1.0
        %v3795 = vadd.f32 %v3382, 1.0
        %v3796 = vadd.f32 %v3384, 1.0
        %v3797 = vadd.f32 %v3386, 1.0
        %v3798 = vadd.f32 %v3388, 1.0
        %v3799 = vadd.f32 %v3390, 1.0
        %v3800 = vadd.f32 %v3392, 1.0
        %v3801 = vadd.f32 %v3394, 1.0
        %v3802 = vadd.f32 %v3396, 1.0
        %v3803 = vadd.f32 %v3398, 1.0
        %v3804 = vadd.f32 %v3400, 1.0
        %v3805 = vadd.f32 %v3402, 1.0
        %v3806 = vadd.f32 %v3404, 1.0
        %v3807 = vadd.f32 %v3406, 1.0
        %v3808 = vadd.f32 %v3408, 1.0
        %v3809 = vadd.f32 %v3410, 1.0
        %v3810 = vadd.f32 %v3412, 1.0
        %v3811 = vadd.f32 %v3414, 1.0
        %v3812 = vadd.f32 %v3416, 1.0
        %v3813 = vadd.f32 %v3418, 1.0
        %v3814 = vadd.f32 %v3420, 1.0
        %v3815 = vadd.f32 %v3422, 1.0
        %v3816 = vadd.f32 %v3424, 1.0
        %v3817 = vadd.f32 %v3426, 1.0
        %v3818 = vadd.f32 %v3428, 1.0
        %v3819 = vadd.f32 %v3430, 1.0
        %v3820 = vadd.f32 %v3432, 1.0
        %v3821 = vadd.f32 %v3434, 1.0
        %v3822 = vadd.f32 %v3436, 1.0
        %v3823 = vadd.f32 %v3438, 1.0
        %v3824 = vadd.f32 %v3440, 1.0
        %v3825 = vadd.f32 %v3442, 1.0
        %v3826 = vadd.f32 %v3444, 1.0
        %v3827 = vadd.f32 %v3446, 1.0
        %v3828 = vadd.f32 %v3448, 1.0
        %v3829 = vadd.f32 %v3450, 1.0
        %v3830 = vadd.f32 %v3452, 1.0
        %v3831 = vadd.f32 %v3454, 1.0
        %v3832 = vadd.f32 %v3456, 1.0
        %v3833 = vadd.f32 %v3458, 1.0
        %v3834 = vadd.f32 %v3460, 1.0
        %v3835 = vadd.f32 %v3462, 1.0
        %v3836 = vadd.f32 %v3464, 1.0
        %v3837 = vadd.f32 %v3466, 1.0
        %v3838 = vadd.f32 %v3468, 1.0
        %v3839 = vadd.f32 %v3470, 1.0
        %v3840 = vadd.f32 %v3472, 1.0
        %v3841 = vadd.f32 %v3474, 1.0
        %v3842 = vadd.f32 %v3476, 1.0
        %v3843 = vadd.f32 %v3478, 1.0
        %v3844 = vadd.f32 %v3480, 1.0
        %v3845 = vadd.f32 %v3482, 1.0
        %v3846 = vadd.f32 %v3484, 1.0
        %v3847 = vadd.f32 %v3486, 1.0
        %v3848 = vadd.f32 %v3488, 1.0
        %v3849 = vadd.f32 %v3490, 1.0
        %v3850 = vadd.f32 %v3492, 1.0
        %v3851 = vadd.f32 %v3494, 1.0
        %v3852 = vadd.f32 %v3496, 1.0
        %v3853 = vadd.f32 %v3498, 1.0
        %v3854 = vadd.f32 %v3500, 1.0
        %v3855 = vadd.f32 %v3502, 1.0
        %v3856 = vadd.f32 %v3504, 1.0
        %v3857 = vadd.f32 %v3506, 1.0
        %v3858 = vadd.f32 %v3508, 1.0
        %v3859 = vadd.f32 %v3510, 1.0
        %v3860 = vadd.f32 %v3512, 1.0
        %v3861 = vadd.f32 %v3514, 1.0
        %v3862 = vadd.f32 %v3516, 1.0
        %v3863 = vadd.f32 %v3518, 1.0
        %v3864 = vadd.f32 %v3520, 1.0
        %v3865 = vadd.f32 %v3522, 1.0
        %v3866 = vadd.f32 %v3524, 1.0
        %v3867 = vadd.f32 %v3526, 1.0
        %v3868 = vadd.f32 %v3528, 1.0
        %v3869 = vadd.f32 %v3530, 1.0
        %v3870 = vadd.f32 %v3532, 1.0
        %v3871 = vadd.f32 %v3534, 1.0
        %v3872 = vadd.f32 %v3536, 1.0
        %v3873 = vadd.f32 %v3538, 1.0
        %v3874 = vadd.f32 %v3540, 1.0
        %v3875 = vadd.f32 %v3542, 1.0
        %v3876 = vadd.f32 %v3544, 1.0
        %v3877 = vadd.f32 %v3546, 1.0
        %v3878 = vadd.f32 %v3548, 1.0
        %v3879 = vadd.f32 %v3550, 1.0
        %v3880 = vadd.f32 %v3552, 1.0
        %v3881 = vadd.f32 %v3554, 1.0
        %v3882 = vadd.f32 %v3556, 1.0
        %v3883 = vadd.f32 %v3558, 1.0
        %v3884 = vadd.f32 %v3560, 1.0
        %v3885 = vadd.f32 %v3562, 1.0
        %v3886 = vadd.f32 %v3564, 1.0
        %v3887 = vadd.f32 %v3566, 1.0
        %v3888 = vadd.f32 %v3568, 1.0
        %v3889 = vrcp.pop %v3569
        %v3890 = vmul.f32 1.0, %v3889
        %v3891 = vrcp.pop %v3570
        %v3892 = vmul.f32 1.0, %v3891
        %v3893 = vrcp.pop %v3571
        %v3894 = vmul.f32 1.0, %v3893
        %v3895 = vrcp.pop %v3572
        %v3896 = vmul.f32 1.0, %v3895
        %v3897 = vrcp.pop %v3573
        %v3898 = vmul.f32 1.0, %v3897
        %v3899 = vrcp.pop %v3574
        %v3900 = vmul.f32 1.0, %v3899
        %v3901 = vrcp.pop %v3575
        %v3902 = vmul.f32 1.0, %v3901
        %v3903 = vrcp.pop %v3576
        %v3904 = vmul.f32 1.0, %v3903
        %v3905 = vrcp.pop %v3577
        %v3906 = vmul.f32 1.0, %v3905
        %v3907 = vrcp.pop %v3578
        %v3908 = vmul.f32 1.0, %v3907
        %v3909 = vrcp.pop %v3579
        %v3910 = vmul.f32 1.0, %v3909
        %v3911 = vrcp.pop %v3580
        %v3912 = vmul.f32 1.0, %v3911
        %v3913 = vrcp.pop %v3581
        %v3914 = vmul.f32 1.0, %v3913
        %v3915 = vrcp.pop %v3582
        %v3916 = vmul.f32 1.0, %v3915
        %v3917 = vrcp.pop %v3583
        %v3918 = vmul.f32 1.0, %v3917
        %v3919 = vrcp.pop %v3584
        %v3920 = vmul.f32 1.0, %v3919
        %v3921 = vrcp.pop %v3585
        %v3922 = vmul.f32 1.0, %v3921
        %v3923 = vrcp.pop %v3586
        %v3924 = vmul.f32 1.0, %v3923
        %v3925 = vrcp.pop %v3587
        %v3926 = vmul.f32 1.0, %v3925
        %v3927 = vrcp.pop %v3588
        %v3928 = vmul.f32 1.0, %v3927
        %v3929 = vrcp.pop %v3589
        %v3930 = vmul.f32 1.0, %v3929
        %v3931 = vrcp.pop %v3590
        %v3932 = vmul.f32 1.0, %v3931
        %v3933 = vrcp.pop %v3591
        %v3934 = vmul.f32 1.0, %v3933
        %v3935 = vrcp.pop %v3592
        %v3936 = vmul.f32 1.0, %v3935
        %v3937 = vrcp.pop %v3593
        %v3938 = vmul.f32 1.0, %v3937
        %v3939 = vrcp.pop %v3594
        %v3940 = vmul.f32 1.0, %v3939
        %v3941 = vrcp.pop %v3595
        %v3942 = vmul.f32 1.0, %v3941
        %v3943 = vrcp.pop %v3596
        %v3944 = vmul.f32 1.0, %v3943
        %v3945 = vrcp.pop %v3597
        %v3946 = vmul.f32 1.0, %v3945
        %v3947 = vrcp.pop %v3598
        %v3948 = vmul.f32 1.0, %v3947
        %v3949 = vrcp.pop %v3599
        %v3950 = vmul.f32 1.0, %v3949
        %v3951 = vrcp.pop %v3600
        %v3952 = vmul.f32 1.0, %v3951
        %v3953 = vrcp.pop %v3601
        %v3954 = vmul.f32 1.0, %v3953
        %v3955 = vrcp.pop %v3602
        %v3956 = vmul.f32 1.0, %v3955
        %v3957 = vrcp.pop %v3603
        %v3958 = vmul.f32 1.0, %v3957
        %v3959 = vrcp.pop %v3604
        %v3960 = vmul.f32 1.0, %v3959
        %v3961 = vrcp.pop %v3605
        %v3962 = vmul.f32 1.0, %v3961
        %v3963 = vrcp.pop %v3606
        %v3964 = vmul.f32 1.0, %v3963
        %v3965 = vrcp.pop %v3607
        %v3966 = vmul.f32 1.0, %v3965
        %v3967 = vrcp.pop %v3608
        %v3968 = vmul.f32 1.0, %v3967
        %v3969 = vrcp.pop %v3609
        %v3970 = vmul.f32 1.0, %v3969
        %v3971 = vrcp.pop %v3610
        %v3972 = vmul.f32 1.0, %v3971
        %v3973 = vrcp.pop %v3611
        %v3974 = vmul.f32 1.0, %v3973
        %v3975 = vrcp.pop %v3612
        %v3976 = vmul.f32 1.0, %v3975
        %v3977 = vrcp.pop %v3613
        %v3978 = vmul.f32 1.0, %v3977
        %v3979 = vrcp.pop %v3614
        %v3980 = vmul.f32 1.0, %v3979
        %v3981 = vrcp.pop %v3615
        %v3982 = vmul.f32 1.0, %v3981
        %v3983 = vrcp.pop %v3616
        %v3984 = vmul.f32 1.0, %v3983
        %v3985 = vrcp.pop %v3617
        %v3986 = vmul.f32 1.0, %v3985
        %v3987 = vrcp.pop %v3618
        %v3988 = vmul.f32 1.0, %v3987
        %v3989 = vrcp.pop %v3619
        %v3990 = vmul.f32 1.0, %v3989
        %v3991 = vrcp.pop %v3620
        %v3992 = vmul.f32 1.0, %v3991
        %v3993 = vrcp.pop %v3621
        %v3994 = vmul.f32 1.0, %v3993
        %v3995 = vrcp.pop %v3622
        %v3996 = vmul.f32 1.0, %v3995
        %v3997 = vrcp.pop %v3623
        %v3998 = vmul.f32 1.0, %v3997
        %v3999 = vrcp.pop %v3624
        %v4000 = vmul.f32 1.0, %v3999
        %v4001 = vrcp.pop %v3625
        %v4002 = vmul.f32 1.0, %v4001
        %v4003 = vrcp.pop %v3626
        %v4004 = vmul.f32 1.0, %v4003
        %v4005 = vrcp.pop %v3627
        %v4006 = vmul.f32 1.0, %v4005
        %v4007 = vrcp.pop %v3628
        %v4008 = vmul.f32 1.0, %v4007
        %v4009 = vrcp.pop %v3629
        %v4010 = vmul.f32 1.0, %v4009
        %v4011 = vrcp.pop %v3630
        %v4012 = vmul.f32 1.0, %v4011
        %v4013 = vrcp.pop %v3631
        %v4014 = vmul.f32 1.0, %v4013
        %v4015 = vrcp.pop %v3632
        %v4016 = vmul.f32 1.0, %v4015
        %v4017 = vrcp.pop %v3633
        %v4018 = vmul.f32 1.0, %v4017
        %v4019 = vrcp.pop %v3634
        %v4020 = vmul.f32 1.0, %v4019
        %v4021 = vrcp.pop %v3635
        %v4022 = vmul.f32 1.0, %v4021
        %v4023 = vrcp.pop %v3636
        %v4024 = vmul.f32 1.0, %v4023
        %v4025 = vrcp.pop %v3637
        %v4026 = vmul.f32 1.0, %v4025
        %v4027 = vrcp.pop %v3638
        %v4028 = vmul.f32 1.0, %v4027
        %v4029 = vrcp.pop %v3639
        %v4030 = vmul.f32 1.0, %v4029
        %v4031 = vrcp.pop %v3640
        %v4032 = vmul.f32 1.0, %v4031
        %v4033 = vrcp.pop %v3641
        %v4034 = vmul.f32 1.0, %v4033
        %v4035 = vrcp.pop %v3642
        %v4036 = vmul.f32 1.0, %v4035
        %v4037 = vrcp.pop %v3643
        %v4038 = vmul.f32 1.0, %v4037
        %v4039 = vrcp.pop %v3644
        %v4040 = vmul.f32 1.0, %v4039
        %v4041 = vrcp.pop %v3645
        %v4042 = vmul.f32 1.0, %v4041
        %v4043 = vrcp.pop %v3646
        %v4044 = vmul.f32 1.0, %v4043
        %v4045 = vrcp.pop %v3647
        %v4046 = vmul.f32 1.0, %v4045
        %v4047 = vrcp.pop %v3648
        %v4048 = vmul.f32 1.0, %v4047
        %v4049 = vrcp.pop %v3649
        %v4050 = vmul.f32 1.0, %v4049
        %v4051 = vrcp.pop %v3650
        %v4052 = vmul.f32 1.0, %v4051
        %v4053 = vrcp.pop %v3651
        %v4054 = vmul.f32 1.0, %v4053
        %v4055 = vrcp.pop %v3652
        %v4056 = vmul.f32 1.0, %v4055
        %v4057 = vrcp.pop %v3653
        %v4058 = vmul.f32 1.0, %v4057
        %v4059 = vrcp.pop %v3654
        %v4060 = vmul.f32 1.0, %v4059
        %v4061 = vrcp.pop %v3655
        %v4062 = vmul.f32 1.0, %v4061
        %v4063 = vrcp.pop %v3656
        %v4064 = vmul.f32 1.0, %v4063
        %v4065 = vrcp.pop %v3657
        %v4066 = vmul.f32 1.0, %v4065
        %v4067 = vrcp.pop %v3658
        %v4068 = vmul.f32 1.0, %v4067
        %v4069 = vrcp.pop %v3659
        %v4070 = vmul.f32 1.0, %v4069
        %v4071 = vrcp.pop %v3660
        %v4072 = vmul.f32 1.0, %v4071
        %v4073 = vrcp.pop %v3661
        %v4074 = vmul.f32 1.0, %v4073
        %v4075 = vrcp.pop %v3662
        %v4076 = vmul.f32 1.0, %v4075
        %v4077 = vrcp.pop %v3663
        %v4078 = vmul.f32 1.0, %v4077
        %v4079 = vrcp.pop %v3664
        %v4080 = vmul.f32 1.0, %v4079
        %v4081 = vrcp.pop %v3665
        %v4082 = vmul.f32 1.0, %v4081
        %v4083 = vrcp.pop %v3666
        %v4084 = vmul.f32 1.0, %v4083
        %v4085 = vrcp.pop %v3667
        %v4086 = vmul.f32 1.0, %v4085
        %v4087 = vrcp.pop %v3668
        %v4088 = vmul.f32 1.0, %v4087
        %v4089 = vrcp.pop %v3669
        %v4090 = vmul.f32 1.0, %v4089
        %v4091 = vrcp.pop %v3670
        %v4092 = vmul.f32 1.0, %v4091
        %v4093 = vrcp.pop %v3671
        %v4094 = vmul.f32 1.0, %v4093
        %v4095 = vrcp.pop %v3672
        %v4096 = vmul.f32 1.0, %v4095
        %v4097 = vrcp.pop %v3673
        %v4098 = vmul.f32 1.0, %v4097
        %v4099 = vrcp.pop %v3674
        %v4100 = vmul.f32 1.0, %v4099
        %v4101 = vrcp.pop %v3675
        %v4102 = vmul.f32 1.0, %v4101
        %v4103 = vrcp.pop %v3676
        %v4104 = vmul.f32 1.0, %v4103
        %v4105 = vrcp.pop %v3677
        %v4106 = vmul.f32 1.0, %v4105
        %v4107 = vrcp.pop %v3678
        %v4108 = vmul.f32 1.0, %v4107
        %v4109 = vrcp.pop %v3679
        %v4110 = vmul.f32 1.0, %v4109
        %v4111 = vrcp.pop %v3680
        %v4112 = vmul.f32 1.0, %v4111
        %v4113 = vrcp.pop %v3681
        %v4114 = vmul.f32 1.0, %v4113
        %v4115 = vrcp.pop %v3682
        %v4116 = vmul.f32 1.0, %v4115
        %v4117 = vrcp.pop %v3683
        %v4118 = vmul.f32 1.0, %v4117
        %v4119 = vrcp.pop %v3684
        %v4120 = vmul.f32 1.0, %v4119
        %v4121 = vrcp.pop %v3685
        %v4122 = vmul.f32 1.0, %v4121
        %v4123 = vrcp.pop %v3686
        %v4124 = vmul.f32 1.0, %v4123
        %v4125 = vrcp.pop %v3687
        %v4126 = vmul.f32 1.0, %v4125
        %v4127 = vrcp.pop %v3688
        %v4128 = vmul.f32 1.0, %v4127
        %v4129 = vrcp.pop %v3689
        %v4130 = vmul.f32 1.0, %v4129
        %v4131 = vrcp.pop %v3690
        %v4132 = vmul.f32 1.0, %v4131
        %v4133 = vrcp.pop %v3691
        %v4134 = vmul.f32 1.0, %v4133
        %v4135 = vrcp.pop %v3692
        %v4136 = vmul.f32 1.0, %v4135
        %v4137 = vrcp.pop %v3693
        %v4138 = vmul.f32 1.0, %v4137
        %v4139 = vrcp.pop %v3694
        %v4140 = vmul.f32 1.0, %v4139
        %v4141 = vrcp.pop %v3695
        %v4142 = vmul.f32 1.0, %v4141
        %v4143 = vrcp.pop %v3696
        %v4144 = vmul.f32 1.0, %v4143
        %v4145 = vrcp.pop %v3697
        %v4146 = vmul.f32 1.0, %v4145
        %v4147 = vrcp.pop %v3698
        %v4148 = vmul.f32 1.0, %v4147
        %v4149 = vrcp.pop %v3699
        %v4150 = vmul.f32 1.0, %v4149
        %v4151 = vrcp.pop %v3700
        %v4152 = vmul.f32 1.0, %v4151
        %v4153 = vrcp.pop %v3701
        %v4154 = vmul.f32 1.0, %v4153
        %v4155 = vrcp.pop %v3702
        %v4156 = vmul.f32 1.0, %v4155
        %v4157 = vrcp.pop %v3703
        %v4158 = vmul.f32 1.0, %v4157
        %v4159 = vrcp.pop %v3704
        %v4160 = vmul.f32 1.0, %v4159
        %v4161 = vrcp.pop %v3705
        %v4162 = vmul.f32 1.0, %v4161
        %v4163 = vrcp.pop %v3706
        %v4164 = vmul.f32 1.0, %v4163
        %v4165 = vrcp.pop %v3707
        %v4166 = vmul.f32 1.0, %v4165
        %v4167 = vrcp.pop %v3708
        %v4168 = vmul.f32 1.0, %v4167
        %v4169 = vrcp.pop %v3709
        %v4170 = vmul.f32 1.0, %v4169
        %v4171 = vrcp.pop %v3710
        %v4172 = vmul.f32 1.0, %v4171
        %v4173 = vrcp.pop %v3711
        %v4174 = vmul.f32 1.0, %v4173
        %v4175 = vrcp.pop %v3712
        %v4176 = vmul.f32 1.0, %v4175
        %v4177 = vrcp.pop %v3713
        %v4178 = vmul.f32 1.0, %v4177
        %v4179 = vrcp.pop %v3714
        %v4180 = vmul.f32 1.0, %v4179
        %v4181 = vrcp.pop %v3715
        %v4182 = vmul.f32 1.0, %v4181
        %v4183 = vrcp.pop %v3716
        %v4184 = vmul.f32 1.0, %v4183
        %v4185 = vrcp.pop %v3717
        %v4186 = vmul.f32 1.0, %v4185
        %v4187 = vrcp.pop %v3718
        %v4188 = vmul.f32 1.0, %v4187
        %v4189 = vrcp.pop %v3719
        %v4190 = vmul.f32 1.0, %v4189
        %v4191 = vrcp.pop %v3720
        %v4192 = vmul.f32 1.0, %v4191
        %v4193 = vrcp.pop %v3721
        %v4194 = vmul.f32 1.0, %v4193
        %v4195 = vrcp.pop %v3722
        %v4196 = vmul.f32 1.0, %v4195
        %v4197 = vrcp.pop %v3723
        %v4198 = vmul.f32 1.0, %v4197
        %v4199 = vrcp.pop %v3724
        %v4200 = vmul.f32 1.0, %v4199
        %v4201 = vrcp.pop %v3725
        %v4202 = vmul.f32 1.0, %v4201
        %v4203 = vrcp.pop %v3726
        %v4204 = vmul.f32 1.0, %v4203
        %v4205 = vrcp.pop %v3727
        %v4206 = vmul.f32 1.0, %v4205
        %v4207 = vrcp.pop %v3728
        %v4208 = vmul.f32 1.0, %v4207
        %v4209 = vrcp.pop %v3729
        %v4210 = vmul.f32 1.0, %v4209
        %v4211 = vrcp.pop %v3730
        %v4212 = vmul.f32 1.0, %v4211
        %v4213 = vrcp.pop %v3731
        %v4214 = vmul.f32 1.0, %v4213
        %v4215 = vrcp.pop %v3732
        %v4216 = vmul.f32 1.0, %v4215
        %v4217 = vrcp.pop %v3733
        %v4218 = vmul.f32 1.0, %v4217
        %v4219 = vrcp.pop %v3734
        %v4220 = vmul.f32 1.0, %v4219
        %v4221 = vrcp.pop %v3735
        %v4222 = vmul.f32 1.0, %v4221
        %v4223 = vrcp.pop %v3736
        %v4224 = vmul.f32 1.0, %v4223
        %v4225 = vrcp.pop %v3737
        %v4226 = vmul.f32 1.0, %v4225
        %v4227 = vrcp.pop %v3738
        %v4228 = vmul.f32 1.0, %v4227
        %v4229 = vrcp.pop %v3739
        %v4230 = vmul.f32 1.0, %v4229
        %v4231 = vrcp.pop %v3740
        %v4232 = vmul.f32 1.0, %v4231
        %v4233 = vrcp.pop %v3741
        %v4234 = vmul.f32 1.0, %v4233
        %v4235 = vrcp.pop %v3742
        %v4236 = vmul.f32 1.0, %v4235
        %v4237 = vrcp.pop %v3743
        %v4238 = vmul.f32 1.0, %v4237
        %v4239 = vrcp.pop %v3744
        %v4240 = vmul.f32 1.0, %v4239
        %v4241 = vrcp.pop %v3745
        %v4242 = vmul.f32 1.0, %v4241
        %v4243 = vrcp.pop %v3746
        %v4244 = vmul.f32 1.0, %v4243
        %v4245 = vrcp.pop %v3747
        %v4246 = vmul.f32 1.0, %v4245
        %v4247 = vrcp.pop %v3748
        %v4248 = vmul.f32 1.0, %v4247
        %v4249 = vrcp.pop %v3749
        %v4250 = vmul.f32 1.0, %v4249
        %v4251 = vrcp.pop %v3750
        %v4252 = vmul.f32 1.0, %v4251
        %v4253 = vrcp.pop %v3751
        %v4254 = vmul.f32 1.0, %v4253
        %v4255 = vrcp.pop %v3752
        %v4256 = vmul.f32 1.0, %v4255
        %v4257 = vrcp.pop %v3753
        %v4258 = vmul.f32 1.0, %v4257
        %v4259 = vrcp.pop %v3754
        %v4260 = vmul.f32 1.0, %v4259
        %v4261 = vrcp.pop %v3755
        %v4262 = vmul.f32 1.0, %v4261
        %v4263 = vrcp.pop %v3756
        %v4264 = vmul.f32 1.0, %v4263
        %v4265 = vrcp.pop %v3757
        %v4266 = vmul.f32 1.0, %v4265
        %v4267 = vrcp.pop %v3758
        %v4268 = vmul.f32 1.0, %v4267
        %v4269 = vrcp.pop %v3759
        %v4270 = vmul.f32 1.0, %v4269
        %v4271 = vrcp.pop %v3760
        %v4272 = vmul.f32 1.0, %v4271
        %v4273 = vrcp.pop %v3761
        %v4274 = vmul.f32 1.0, %v4273
        %v4275 = vrcp.pop %v3762
        %v4276 = vmul.f32 1.0, %v4275
        %v4277 = vrcp.pop %v3763
        %v4278 = vmul.f32 1.0, %v4277
        %v4279 = vrcp.pop %v3764
        %v4280 = vmul.f32 1.0, %v4279
        %v4281 = vrcp.pop %v3765
        %v4282 = vmul.f32 1.0, %v4281
        %v4283 = vrcp.pop %v3766
        %v4284 = vmul.f32 1.0, %v4283
        %v4285 = vrcp.pop %v3767
        %v4286 = vmul.f32 1.0, %v4285
        %v4287 = vrcp.pop %v3768
        %v4288 = vmul.f32 1.0, %v4287
        %v4289 = vrcp.pop %v3769
        %v4290 = vmul.f32 1.0, %v4289
        %v4291 = vrcp.pop %v3770
        %v4292 = vmul.f32 1.0, %v4291
        %v4293 = vrcp.pop %v3771
        %v4294 = vmul.f32 1.0, %v4293
        %v4295 = vrcp.pop %v3772
        %v4296 = vmul.f32 1.0, %v4295
        %v4297 = vrcp.pop %v3773
        %v4298 = vmul.f32 1.0, %v4297
        %v4299 = vrcp.pop %v3774
        %v4300 = vmul.f32 1.0, %v4299
        %v4301 = vrcp.pop %v3775
        %v4302 = vmul.f32 1.0, %v4301
        %v4303 = vrcp.pop %v3776
        %v4304 = vmul.f32 1.0, %v4303
        %v4305 = vrcp.pop %v3777
        %v4306 = vmul.f32 1.0, %v4305
        %v4307 = vrcp.pop %v3778
        %v4308 = vmul.f32 1.0, %v4307
        %v4309 = vrcp.pop %v3779
        %v4310 = vmul.f32 1.0, %v4309
        %v4311 = vrcp.pop %v3780
        %v4312 = vmul.f32 1.0, %v4311
        %v4313 = vrcp.pop %v3781
        %v4314 = vmul.f32 1.0, %v4313
        %v4315 = vrcp.pop %v3782
        %v4316 = vmul.f32 1.0, %v4315
        %v4317 = vrcp.pop %v3783
        %v4318 = vmul.f32 1.0, %v4317
        %v4319 = vrcp.pop %v3784
        %v4320 = vmul.f32 1.0, %v4319
        %v4321 = vrcp.pop %v3785
        %v4322 = vmul.f32 1.0, %v4321
        %v4323 = vrcp.pop %v3786
        %v4324 = vmul.f32 1.0, %v4323
        %v4325 = vrcp.pop %v3787
        %v4326 = vmul.f32 1.0, %v4325
        %v4327 = vrcp.pop %v3788
        %v4328 = vmul.f32 1.0, %v4327
        %v4329 = vrcp.pop %v3789
        %v4330 = vmul.f32 1.0, %v4329
        %v4331 = vrcp.pop %v3790
        %v4332 = vmul.f32 1.0, %v4331
        %v4333 = vrcp.pop %v3791
        %v4334 = vmul.f32 1.0, %v4333
        %v4335 = vrcp.pop %v3792
        %v4336 = vmul.f32 1.0, %v4335
        %v4337 = vrcp.pop %v3793
        %v4338 = vmul.f32 1.0, %v4337
        %v4339 = vrcp.pop %v3794
        %v4340 = vmul.f32 1.0, %v4339
        %v4341 = vrcp.pop %v3795
        %v4342 = vmul.f32 1.0, %v4341
        %v4343 = vrcp.pop %v3796
        %v4344 = vmul.f32 1.0, %v4343
        %v4345 = vrcp.pop %v3797
        %v4346 = vmul.f32 1.0, %v4345
        %v4347 = vrcp.pop %v3798
        %v4348 = vmul.f32 1.0, %v4347
        %v4349 = vrcp.pop %v3799
        %v4350 = vmul.f32 1.0, %v4349
        %v4351 = vrcp.pop %v3800
        %v4352 = vmul.f32 1.0, %v4351
        %v4353 = vrcp.pop %v3801
        %v4354 = vmul.f32 1.0, %v4353
        %v4355 = vrcp.pop %v3802
        %v4356 = vmul.f32 1.0, %v4355
        %v4357 = vrcp.pop %v3803
        %v4358 = vmul.f32 1.0, %v4357
        %v4359 = vrcp.pop %v3804
        %v4360 = vmul.f32 1.0, %v4359
        %v4361 = vrcp.pop %v3805
        %v4362 = vmul.f32 1.0, %v4361
        %v4363 = vrcp.pop %v3806
        %v4364 = vmul.f32 1.0, %v4363
        %v4365 = vrcp.pop %v3807
        %v4366 = vmul.f32 1.0, %v4365
        %v4367 = vrcp.pop %v3808
        %v4368 = vmul.f32 1.0, %v4367
        %v4369 = vrcp.pop %v3809
        %v4370 = vmul.f32 1.0, %v4369
        %v4371 = vrcp.pop %v3810
        %v4372 = vmul.f32 1.0, %v4371
        %v4373 = vrcp.pop %v3811
        %v4374 = vmul.f32 1.0, %v4373
        %v4375 = vrcp.pop %v3812
        %v4376 = vmul.f32 1.0, %v4375
        %v4377 = vrcp.pop %v3813
        %v4378 = vmul.f32 1.0, %v4377
        %v4379 = vrcp.pop %v3814
        %v4380 = vmul.f32 1.0, %v4379
        %v4381 = vrcp.pop %v3815
        %v4382 = vmul.f32 1.0, %v4381
        %v4383 = vrcp.pop %v3816
        %v4384 = vmul.f32 1.0, %v4383
        %v4385 = vrcp.pop %v3817
        %v4386 = vmul.f32 1.0, %v4385
        %v4387 = vrcp.pop %v3818
        %v4388 = vmul.f32 1.0, %v4387
        %v4389 = vrcp.pop %v3819
        %v4390 = vmul.f32 1.0, %v4389
        %v4391 = vrcp.pop %v3820
        %v4392 = vmul.f32 1.0, %v4391
        %v4393 = vrcp.pop %v3821
        %v4394 = vmul.f32 1.0, %v4393
        %v4395 = vrcp.pop %v3822
        %v4396 = vmul.f32 1.0, %v4395
        %v4397 = vrcp.pop %v3823
        %v4398 = vmul.f32 1.0, %v4397
        %v4399 = vrcp.pop %v3824
        %v4400 = vmul.f32 1.0, %v4399
        %v4401 = vrcp.pop %v3825
        %v4402 = vmul.f32 1.0, %v4401
        %v4403 = vrcp.pop %v3826
        %v4404 = vmul.f32 1.0, %v4403
        %v4405 = vrcp.pop %v3827
        %v4406 = vmul.f32 1.0, %v4405
        %v4407 = vrcp.pop %v3828
        %v4408 = vmul.f32 1.0, %v4407
        %v4409 = vrcp.pop %v3829
        %v4410 = vmul.f32 1.0, %v4409
        %v4411 = vrcp.pop %v3830
        %v4412 = vmul.f32 1.0, %v4411
        %v4413 = vrcp.pop %v3831
        %v4414 = vmul.f32 1.0, %v4413
        %v4415 = vrcp.pop %v3832
        %v4416 = vmul.f32 1.0, %v4415
        %v4417 = vrcp.pop %v3833
        %v4418 = vmul.f32 1.0, %v4417
        %v4419 = vrcp.pop %v3834
        %v4420 = vmul.f32 1.0, %v4419
        %v4421 = vrcp.pop %v3835
        %v4422 = vmul.f32 1.0, %v4421
        %v4423 = vrcp.pop %v3836
        %v4424 = vmul.f32 1.0, %v4423
        %v4425 = vrcp.pop %v3837
        %v4426 = vmul.f32 1.0, %v4425
        %v4427 = vrcp.pop %v3838
        %v4428 = vmul.f32 1.0, %v4427
        %v4429 = vrcp.pop %v3839
        %v4430 = vmul.f32 1.0, %v4429
        %v4431 = vrcp.pop %v3840
        %v4432 = vmul.f32 1.0, %v4431
        %v4433 = vrcp.pop %v3841
        %v4434 = vmul.f32 1.0, %v4433
        %v4435 = vrcp.pop %v3842
        %v4436 = vmul.f32 1.0, %v4435
        %v4437 = vrcp.pop %v3843
        %v4438 = vmul.f32 1.0, %v4437
        %v4439 = vrcp.pop %v3844
        %v4440 = vmul.f32 1.0, %v4439
        %v4441 = vrcp.pop %v3845
        %v4442 = vmul.f32 1.0, %v4441
        %v4443 = vrcp.pop %v3846
        %v4444 = vmul.f32 1.0, %v4443
        %v4445 = vrcp.pop %v3847
        %v4446 = vmul.f32 1.0, %v4445
        %v4447 = vrcp.pop %v3848
        %v4448 = vmul.f32 1.0, %v4447
        %v4449 = vrcp.pop %v3849
        %v4450 = vmul.f32 1.0, %v4449
        %v4451 = vrcp.pop %v3850
        %v4452 = vmul.f32 1.0, %v4451
        %v4453 = vrcp.pop %v3851
        %v4454 = vmul.f32 1.0, %v4453
        %v4455 = vrcp.pop %v3852
        %v4456 = vmul.f32 1.0, %v4455
        %v4457 = vrcp.pop %v3853
        %v4458 = vmul.f32 1.0, %v4457
        %v4459 = vrcp.pop %v3854
        %v4460 = vmul.f32 1.0, %v4459
        %v4461 = vrcp.pop %v3855
        %v4462 = vmul.f32 1.0, %v4461
        %v4463 = vrcp.pop %v3856
        %v4464 = vmul.f32 1.0, %v4463
        %v4465 = vrcp.pop %v3857
        %v4466 = vmul.f32 1.0, %v4465
        %v4467 = vrcp.pop %v3858
        %v4468 = vmul.f32 1.0, %v4467
        %v4469 = vrcp.pop %v3859
        %v4470 = vmul.f32 1.0, %v4469
        %v4471 = vrcp.pop %v3860
        %v4472 = vmul.f32 1.0, %v4471
        %v4473 = vrcp.pop %v3861
        %v4474 = vmul.f32 1.0, %v4473
        %v4475 = vrcp.pop %v3862
        %v4476 = vmul.f32 1.0, %v4475
        %v4477 = vrcp.pop %v3863
        %v4478 = vmul.f32 1.0, %v4477
        %v4479 = vrcp.pop %v3864
        %v4480 = vmul.f32 1.0, %v4479
        %v4481 = vrcp.pop %v3865
        %v4482 = vmul.f32 1.0, %v4481
        %v4483 = vrcp.pop %v3866
        %v4484 = vmul.f32 1.0, %v4483
        %v4485 = vrcp.pop %v3867
        %v4486 = vmul.f32 1.0, %v4485
        %v4487 = vrcp.pop %v3868
        %v4488 = vmul.f32 1.0, %v4487
        %v4489 = vrcp.pop %v3869
        %v4490 = vmul.f32 1.0, %v4489
        %v4491 = vrcp.pop %v3870
        %v4492 = vmul.f32 1.0, %v4491
        %v4493 = vrcp.pop %v3871
        %v4494 = vmul.f32 1.0, %v4493
        %v4495 = vrcp.pop %v3872
        %v4496 = vmul.f32 1.0, %v4495
        %v4497 = vrcp.pop %v3873
        %v4498 = vmul.f32 1.0, %v4497
        %v4499 = vrcp.pop %v3874
        %v4500 = vmul.f32 1.0, %v4499
        %v4501 = vrcp.pop %v3875
        %v4502 = vmul.f32 1.0, %v4501
        %v4503 = vrcp.pop %v3876
        %v4504 = vmul.f32 1.0, %v4503
        %v4505 = vrcp.pop %v3877
        %v4506 = vmul.f32 1.0, %v4505
        %v4507 = vrcp.pop %v3878
        %v4508 = vmul.f32 1.0, %v4507
        %v4509 = vrcp.pop %v3879
        %v4510 = vmul.f32 1.0, %v4509
        %v4511 = vrcp.pop %v3880
        %v4512 = vmul.f32 1.0, %v4511
        %v4513 = vrcp.pop %v3881
        %v4514 = vmul.f32 1.0, %v4513
        %v4515 = vrcp.pop %v3882
        %v4516 = vmul.f32 1.0, %v4515
        %v4517 = vrcp.pop %v3883
        %v4518 = vmul.f32 1.0, %v4517
        %v4519 = vrcp.pop %v3884
        %v4520 = vmul.f32 1.0, %v4519
        %v4521 = vrcp.pop %v3885
        %v4522 = vmul.f32 1.0, %v4521
        %v4523 = vrcp.pop %v3886
        %v4524 = vmul.f32 1.0, %v4523
        %v4525 = vrcp.pop %v3887
        %v4526 = vmul.f32 1.0, %v4525
        %v4527 = vrcp.pop %v3888
        %v4528 = vmul.f32 1.0, %v4527
        %v4529 = vmul.f32 %v2289, %v3890
        %v4530 = vmul.f32 %v2290, %v3892
        %v4531 = vmul.f32 %v2291, %v3894
        %v4532 = vmul.f32 %v2292, %v3896
        %v4533 = vmul.f32 %v2293, %v3898
        %v4534 = vmul.f32 %v2294, %v3900
        %v4535 = vmul.f32 %v2295, %v3902
        %v4536 = vmul.f32 %v2296, %v3904
        %v4537 = vmul.f32 %v2297, %v3906
        %v4538 = vmul.f32 %v2298, %v3908
        %v4539 = vmul.f32 %v2299, %v3910
        %v4540 = vmul.f32 %v2300, %v3912
        %v4541 = vmul.f32 %v2301, %v3914
        %v4542 = vmul.f32 %v2302, %v3916
        %v4543 = vmul.f32 %v2303, %v3918
        %v4544 = vmul.f32 %v2304, %v3920
        %v4545 = vmul.f32 %v2305, %v3922
        %v4546 = vmul.f32 %v2306, %v3924
        %v4547 = vmul.f32 %v2307, %v3926
        %v4548 = vmul.f32 %v2308, %v3928
        %v4549 = vmul.f32 %v2309, %v3930
        %v4550 = vmul.f32 %v2310, %v3932
        %v4551 = vmul.f32 %v2311, %v3934
        %v4552 = vmul.f32 %v2312, %v3936
        %v4553 = vmul.f32 %v2313, %v3938
        %v4554 = vmul.f32 %v2314, %v3940
        %v4555 = vmul.f32 %v2315, %v3942
        %v4556 = vmul.f32 %v2316, %v3944
        %v4557 = vmul.f32 %v2317, %v3946
        %v4558 = vmul.f32 %v2318, %v3948
        %v4559 = vmul.f32 %v2319, %v3950
        %v4560 = vmul.f32 %v2320, %v3952
        %v4561 = vmul.f32 %v2321, %v3954
        %v4562 = vmul.f32 %v2322, %v3956
        %v4563 = vmul.f32 %v2323, %v3958
        %v4564 = vmul.f32 %v2324, %v3960
        %v4565 = vmul.f32 %v2325, %v3962
        %v4566 = vmul.f32 %v2326, %v3964
        %v4567 = vmul.f32 %v2327, %v3966
        %v4568 = vmul.f32 %v2328, %v3968
        %v4569 = vmul.f32 %v2329, %v3970
        %v4570 = vmul.f32 %v2330, %v3972
        %v4571 = vmul.f32 %v2331, %v3974
        %v4572 = vmul.f32 %v2332, %v3976
        %v4573 = vmul.f32 %v2333, %v3978
        %v4574 = vmul.f32 %v2334, %v3980
        %v4575 = vmul.f32 %v2335, %v3982
        %v4576 = vmul.f32 %v2336, %v3984
        %v4577 = vmul.f32 %v2337, %v3986
        %v4578 = vmul.f32 %v2338, %v3988
        %v4579 = vmul.f32 %v2339, %v3990
        %v4580 = vmul.f32 %v2340, %v3992
        %v4581 = vmul.f32 %v2341, %v3994
        %v4582 = vmul.f32 %v2342, %v3996
        %v4583 = vmul.f32 %v2343, %v3998
        %v4584 = vmul.f32 %v2344, %v4000
        %v4585 = vmul.f32 %v2345, %v4002
        %v4586 = vmul.f32 %v2346, %v4004
        %v4587 = vmul.f32 %v2347, %v4006
        %v4588 = vmul.f32 %v2348, %v4008
        %v4589 = vmul.f32 %v2349, %v4010
        %v4590 = vmul.f32 %v2350, %v4012
        %v4591 = vmul.f32 %v2351, %v4014
        %v4592 = vmul.f32 %v2352, %v4016
        %v4593 = vmul.f32 %v2353, %v4018
        %v4594 = vmul.f32 %v2354, %v4020
        %v4595 = vmul.f32 %v2355, %v4022
        %v4596 = vmul.f32 %v2356, %v4024
        %v4597 = vmul.f32 %v2357, %v4026
        %v4598 = vmul.f32 %v2358, %v4028
        %v4599 = vmul.f32 %v2359, %v4030
        %v4600 = vmul.f32 %v2360, %v4032
        %v4601 = vmul.f32 %v2361, %v4034
        %v4602 = vmul.f32 %v2362, %v4036
        %v4603 = vmul.f32 %v2363, %v4038
        %v4604 = vmul.f32 %v2364, %v4040
        %v4605 = vmul.f32 %v2365, %v4042
        %v4606 = vmul.f32 %v2366, %v4044
        %v4607 = vmul.f32 %v2367, %v4046
        %v4608 = vmul.f32 %v2368, %v4048
        %v4609 = vmul.f32 %v2369, %v4050
        %v4610 = vmul.f32 %v2370, %v4052
        %v4611 = vmul.f32 %v2371, %v4054
        %v4612 = vmul.f32 %v2372, %v4056
        %v4613 = vmul.f32 %v2373, %v4058
        %v4614 = vmul.f32 %v2374, %v4060
        %v4615 = vmul.f32 %v2375, %v4062
        %v4616 = vmul.f32 %v2376, %v4064
        %v4617 = vmul.f32 %v2377, %v4066
        %v4618 = vmul.f32 %v2378, %v4068
        %v4619 = vmul.f32 %v2379, %v4070
        %v4620 = vmul.f32 %v2380, %v4072
        %v4621 = vmul.f32 %v2381, %v4074
        %v4622 = vmul.f32 %v2382, %v4076
        %v4623 = vmul.f32 %v2383, %v4078
        %v4624 = vmul.f32 %v2384, %v4080
        %v4625 = vmul.f32 %v2385, %v4082
        %v4626 = vmul.f32 %v2386, %v4084
        %v4627 = vmul.f32 %v2387, %v4086
        %v4628 = vmul.f32 %v2388, %v4088
        %v4629 = vmul.f32 %v2389, %v4090
        %v4630 = vmul.f32 %v2390, %v4092
        %v4631 = vmul.f32 %v2391, %v4094
        %v4632 = vmul.f32 %v2392, %v4096
        %v4633 = vmul.f32 %v2393, %v4098
        %v4634 = vmul.f32 %v2394, %v4100
        %v4635 = vmul.f32 %v2395, %v4102
        %v4636 = vmul.f32 %v2396, %v4104
        %v4637 = vmul.f32 %v2397, %v4106
        %v4638 = vmul.f32 %v2398, %v4108
        %v4639 = vmul.f32 %v2399, %v4110
        %v4640 = vmul.f32 %v2400, %v4112
        %v4641 = vmul.f32 %v2401, %v4114
        %v4642 = vmul.f32 %v2402, %v4116
        %v4643 = vmul.f32 %v2403, %v4118
        %v4644 = vmul.f32 %v2404, %v4120
        %v4645 = vmul.f32 %v2405, %v4122
        %v4646 = vmul.f32 %v2406, %v4124
        %v4647 = vmul.f32 %v2407, %v4126
        %v4648 = vmul.f32 %v2408, %v4128
        %v4649 = vmul.f32 %v2409, %v4130
        %v4650 = vmul.f32 %v2410, %v4132
        %v4651 = vmul.f32 %v2411, %v4134
        %v4652 = vmul.f32 %v2412, %v4136
        %v4653 = vmul.f32 %v2413, %v4138
        %v4654 = vmul.f32 %v2414, %v4140
        %v4655 = vmul.f32 %v2415, %v4142
        %v4656 = vmul.f32 %v2416, %v4144
        %v4657 = vmul.f32 %v2417, %v4146
        %v4658 = vmul.f32 %v2418, %v4148
        %v4659 = vmul.f32 %v2419, %v4150
        %v4660 = vmul.f32 %v2420, %v4152
        %v4661 = vmul.f32 %v2421, %v4154
        %v4662 = vmul.f32 %v2422, %v4156
        %v4663 = vmul.f32 %v2423, %v4158
        %v4664 = vmul.f32 %v2424, %v4160
        %v4665 = vmul.f32 %v2425, %v4162
        %v4666 = vmul.f32 %v2426, %v4164
        %v4667 = vmul.f32 %v2427, %v4166
        %v4668 = vmul.f32 %v2428, %v4168
        %v4669 = vmul.f32 %v2429, %v4170
        %v4670 = vmul.f32 %v2430, %v4172
        %v4671 = vmul.f32 %v2431, %v4174
        %v4672 = vmul.f32 %v2432, %v4176
        %v4673 = vmul.f32 %v2433, %v4178
        %v4674 = vmul.f32 %v2434, %v4180
        %v4675 = vmul.f32 %v2435, %v4182
        %v4676 = vmul.f32 %v2436, %v4184
        %v4677 = vmul.f32 %v2437, %v4186
        %v4678 = vmul.f32 %v2438, %v4188
        %v4679 = vmul.f32 %v2439, %v4190
        %v4680 = vmul.f32 %v2440, %v4192
        %v4681 = vmul.f32 %v2441, %v4194
        %v4682 = vmul.f32 %v2442, %v4196
        %v4683 = vmul.f32 %v2443, %v4198
        %v4684 = vmul.f32 %v2444, %v4200
        %v4685 = vmul.f32 %v2445, %v4202
        %v4686 = vmul.f32 %v2446, %v4204
        %v4687 = vmul.f32 %v2447, %v4206
        %v4688 = vmul.f32 %v2448, %v4208
        %v4689 = vmul.f32 %v2449, %v4210
        %v4690 = vmul.f32 %v2450, %v4212
        %v4691 = vmul.f32 %v2451, %v4214
        %v4692 = vmul.f32 %v2452, %v4216
        %v4693 = vmul.f32 %v2453, %v4218
        %v4694 = vmul.f32 %v2454, %v4220
        %v4695 = vmul.f32 %v2455, %v4222
        %v4696 = vmul.f32 %v2456, %v4224
        %v4697 = vmul.f32 %v2457, %v4226
        %v4698 = vmul.f32 %v2458, %v4228
        %v4699 = vmul.f32 %v2459, %v4230
        %v4700 = vmul.f32 %v2460, %v4232
        %v4701 = vmul.f32 %v2461, %v4234
        %v4702 = vmul.f32 %v2462, %v4236
        %v4703 = vmul.f32 %v2463, %v4238
        %v4704 = vmul.f32 %v2464, %v4240
        %v4705 = vmul.f32 %v2465, %v4242
        %v4706 = vmul.f32 %v2466, %v4244
        %v4707 = vmul.f32 %v2467, %v4246
        %v4708 = vmul.f32 %v2468, %v4248
        %v4709 = vmul.f32 %v2469, %v4250
        %v4710 = vmul.f32 %v2470, %v4252
        %v4711 = vmul.f32 %v2471, %v4254
        %v4712 = vmul.f32 %v2472, %v4256
        %v4713 = vmul.f32 %v2473, %v4258
        %v4714 = vmul.f32 %v2474, %v4260
        %v4715 = vmul.f32 %v2475, %v4262
        %v4716 = vmul.f32 %v2476, %v4264
        %v4717 = vmul.f32 %v2477, %v4266
        %v4718 = vmul.f32 %v2478, %v4268
        %v4719 = vmul.f32 %v2479, %v4270
        %v4720 = vmul.f32 %v2480, %v4272
        %v4721 = vmul.f32 %v2481, %v4274
        %v4722 = vmul.f32 %v2482, %v4276
        %v4723 = vmul.f32 %v2483, %v4278
        %v4724 = vmul.f32 %v2484, %v4280
        %v4725 = vmul.f32 %v2485, %v4282
        %v4726 = vmul.f32 %v2486, %v4284
        %v4727 = vmul.f32 %v2487, %v4286
        %v4728 = vmul.f32 %v2488, %v4288
        %v4729 = vmul.f32 %v2489, %v4290
        %v4730 = vmul.f32 %v2490, %v4292
        %v4731 = vmul.f32 %v2491, %v4294
        %v4732 = vmul.f32 %v2492, %v4296
        %v4733 = vmul.f32 %v2493, %v4298
        %v4734 = vmul.f32 %v2494, %v4300
        %v4735 = vmul.f32 %v2495, %v4302
        %v4736 = vmul.f32 %v2496, %v4304
        %v4737 = vmul.f32 %v2497, %v4306
        %v4738 = vmul.f32 %v2498, %v4308
        %v4739 = vmul.f32 %v2499, %v4310
        %v4740 = vmul.f32 %v2500, %v4312
        %v4741 = vmul.f32 %v2501, %v4314
        %v4742 = vmul.f32 %v2502, %v4316
        %v4743 = vmul.f32 %v2503, %v4318
        %v4744 = vmul.f32 %v2504, %v4320
        %v4745 = vmul.f32 %v2505, %v4322
        %v4746 = vmul.f32 %v2506, %v4324
        %v4747 = vmul.f32 %v2507, %v4326
        %v4748 = vmul.f32 %v2508, %v4328
        %v4749 = vmul.f32 %v2509, %v4330
        %v4750 = vmul.f32 %v2510, %v4332
        %v4751 = vmul.f32 %v2511, %v4334
        %v4752 = vmul.f32 %v2512, %v4336
        %v4753 = vmul.f32 %v2513, %v4338
        %v4754 = vmul.f32 %v2514, %v4340
        %v4755 = vmul.f32 %v2515, %v4342
        %v4756 = vmul.f32 %v2516, %v4344
        %v4757 = vmul.f32 %v2517, %v4346
        %v4758 = vmul.f32 %v2518, %v4348
        %v4759 = vmul.f32 %v2519, %v4350
        %v4760 = vmul.f32 %v2520, %v4352
        %v4761 = vmul.f32 %v2521, %v4354
        %v4762 = vmul.f32 %v2522, %v4356
        %v4763 = vmul.f32 %v2523, %v4358
        %v4764 = vmul.f32 %v2524, %v4360
        %v4765 = vmul.f32 %v2525, %v4362
        %v4766 = vmul.f32 %v2526, %v4364
        %v4767 = vmul.f32 %v2527, %v4366
        %v4768 = vmul.f32 %v2528, %v4368
        %v4769 = vmul.f32 %v2529, %v4370
        %v4770 = vmul.f32 %v2530, %v4372
        %v4771 = vmul.f32 %v2531, %v4374
        %v4772 = vmul.f32 %v2532, %v4376
        %v4773 = vmul.f32 %v2533, %v4378
        %v4774 = vmul.f32 %v2534, %v4380
        %v4775 = vmul.f32 %v2535, %v4382
        %v4776 = vmul.f32 %v2536, %v4384
        %v4777 = vmul.f32 %v2537, %v4386
        %v4778 = vmul.f32 %v2538, %v4388
        %v4779 = vmul.f32 %v2539, %v4390
        %v4780 = vmul.f32 %v2540, %v4392
        %v4781 = vmul.f32 %v2541, %v4394
        %v4782 = vmul.f32 %v2542, %v4396
        %v4783 = vmul.f32 %v2543, %v4398
        %v4784 = vmul.f32 %v2544, %v4400
        %v4785 = vmul.f32 %v2545, %v4402
        %v4786 = vmul.f32 %v2546, %v4404
        %v4787 = vmul.f32 %v2547, %v4406
        %v4788 = vmul.f32 %v2548, %v4408
        %v4789 = vmul.f32 %v2549, %v4410
        %v4790 = vmul.f32 %v2550, %v4412
        %v4791 = vmul.f32 %v2551, %v4414
        %v4792 = vmul.f32 %v2552, %v4416
        %v4793 = vmul.f32 %v2553, %v4418
        %v4794 = vmul.f32 %v2554, %v4420
        %v4795 = vmul.f32 %v2555, %v4422
        %v4796 = vmul.f32 %v2556, %v4424
        %v4797 = vmul.f32 %v2557, %v4426
        %v4798 = vmul.f32 %v2558, %v4428
        %v4799 = vmul.f32 %v2559, %v4430
        %v4800 = vmul.f32 %v2560, %v4432
        %v4801 = vmul.f32 %v2561, %v4434
        %v4802 = vmul.f32 %v2562, %v4436
        %v4803 = vmul.f32 %v2563, %v4438
        %v4804 = vmul.f32 %v2564, %v4440
        %v4805 = vmul.f32 %v2565, %v4442
        %v4806 = vmul.f32 %v2566, %v4444
        %v4807 = vmul.f32 %v2567, %v4446
        %v4808 = vmul.f32 %v2568, %v4448
        %v4809 = vmul.f32 %v2569, %v4450
        %v4810 = vmul.f32 %v2570, %v4452
        %v4811 = vmul.f32 %v2571, %v4454
        %v4812 = vmul.f32 %v2572, %v4456
        %v4813 = vmul.f32 %v2573, %v4458
        %v4814 = vmul.f32 %v2574, %v4460
        %v4815 = vmul.f32 %v2575, %v4462
        %v4816 = vmul.f32 %v2576, %v4464
        %v4817 = vmul.f32 %v2577, %v4466
        %v4818 = vmul.f32 %v2578, %v4468
        %v4819 = vmul.f32 %v2579, %v4470
        %v4820 = vmul.f32 %v2580, %v4472
        %v4821 = vmul.f32 %v2581, %v4474
        %v4822 = vmul.f32 %v2582, %v4476
        %v4823 = vmul.f32 %v2583, %v4478
        %v4824 = vmul.f32 %v2584, %v4480
        %v4825 = vmul.f32 %v2585, %v4482
        %v4826 = vmul.f32 %v2586, %v4484
        %v4827 = vmul.f32 %v2587, %v4486
        %v4828 = vmul.f32 %v2588, %v4488
        %v4829 = vmul.f32 %v2589, %v4490
        %v4830 = vmul.f32 %v2590, %v4492
        %v4831 = vmul.f32 %v2591, %v4494
        %v4832 = vmul.f32 %v2592, %v4496
        %v4833 = vmul.f32 %v2593, %v4498
        %v4834 = vmul.f32 %v2594, %v4500
        %v4835 = vmul.f32 %v2595, %v4502
        %v4836 = vmul.f32 %v2596, %v4504
        %v4837 = vmul.f32 %v2597, %v4506
        %v4838 = vmul.f32 %v2598, %v4508
        %v4839 = vmul.f32 %v2599, %v4510
        %v4840 = vmul.f32 %v2600, %v4512
        %v4841 = vmul.f32 %v2601, %v4514
        %v4842 = vmul.f32 %v2602, %v4516
        %v4843 = vmul.f32 %v2603, %v4518
        %v4844 = vmul.f32 %v2604, %v4520
        %v4845 = vmul.f32 %v2605, %v4522
        %v4846 = vmul.f32 %v2606, %v4524
        %v4847 = vmul.f32 %v2607, %v4526
        %v4848 = vmul.f32 %v2608, %v4528
        %v4849 = vld [vmem:[#allocation2] sm:$0xff]
        %v4850 = vld [vmem:[#allocation2 + $0x8] sm:$0x3]
        %v4851 = vadd.f32 %v4529, %v4539
        %v4852 = vadd.f32 %v4851, %v4549
        %v4853 = vadd.f32 %v4852, %v4559
        %v4854 = vadd.f32 %v4853, %v4569
        %v4855 = vadd.f32 %v4854, %v4579
        %v4856 = vadd.f32 %v4855, %v4589
        %v4857 = vadd.f32 %v4856, %v4599
        %v4858 = vadd.f32 %v4857, %v4609
        %v4859 = vadd.f32 %v4858, %v4619
        %v4860 = vadd.f32 %v4859, %v4629
        %v4861 = vadd.f32 %v4860, %v4639
        %v4862 = vadd.f32 %v4861, %v4649
        %v4863 = vadd.f32 %v4862, %v4659
        %v4864 = vadd.f32 %v4863, %v4669
        %v4865 = vadd.f32 %v4864, %v4679
        %v4866 = vadd.f32 %v4865, %v4689
        %v4867 = vadd.f32 %v4866, %v4699
        %v4868 = vadd.f32 %v4867, %v4709
        %v4869 = vadd.f32 %v4868, %v4719
        %v4870 = vadd.f32 %v4869, %v4729
        %v4871 = vadd.f32 %v4870, %v4739
        %v4872 = vadd.f32 %v4871, %v4749
        %v4873 = vadd.f32 %v4872, %v4759
        %v4874 = vadd.f32 %v4873, %v4769
        %v4875 = vadd.f32 %v4874, %v4779
        %v4876 = vadd.f32 %v4875, %v4789
        %v4877 = vadd.f32 %v4876, %v4799
        %v4878 = vadd.f32 %v4877, %v4809
        %v4879 = vadd.f32 %v4878, %v4819
        %v4880 = vadd.f32 %v4879, %v4829
        %v4881 = vadd.f32 %v4880, %v4839
        %v4882 = vrot.slane %v4881, 4
        %v4883 = vadd.f32 %v4881, %v4882
        %v4884 = vrot.slane %v4883, 2
        %v4885 = vadd.f32 %v4883, %v4884
        %v4886 = vrot.slane %v4885, 1
        %v4887 = vadd.f32 %v4885, %v4886
        %v4888 = vadd.f32 %v4530, %v4540
        %v4889 = vadd.f32 %v4888, %v4550
        %v4890 = vadd.f32 %v4889, %v4560
        %v4891 = vadd.f32 %v4890, %v4570
        %v4892 = vadd.f32 %v4891, %v4580
        %v4893 = vadd.f32 %v4892, %v4590
        %v4894 = vadd.f32 %v4893, %v4600
        %v4895 = vadd.f32 %v4894, %v4610
        %v4896 = vadd.f32 %v4895, %v4620
        %v4897 = vadd.f32 %v4896, %v4630
        %v4898 = vadd.f32 %v4897, %v4640
        %v4899 = vadd.f32 %v4898, %v4650
        %v4900 = vadd.f32 %v4899, %v4660
        %v4901 = vadd.f32 %v4900, %v4670
        %v4902 = vadd.f32 %v4901, %v4680
        %v4903 = vadd.f32 %v4902, %v4690
        %v4904 = vadd.f32 %v4903, %v4700
        %v4905 = vadd.f32 %v4904, %v4710
        %v4906 = vadd.f32 %v4905, %v4720
        %v4907 = vadd.f32 %v4906, %v4730
        %v4908 = vadd.f32 %v4907, %v4740
        %v4909 = vadd.f32 %v4908, %v4750
        %v4910 = vadd.f32 %v4909, %v4760
        %v4911 = vadd.f32 %v4910, %v4770
        %v4912 = vadd.f32 %v4911, %v4780
        %v4913 = vadd.f32 %v4912, %v4790
        %v4914 = vadd.f32 %v4913, %v4800
        %v4915 = vadd.f32 %v4914, %v4810
        %v4916 = vadd.f32 %v4915, %v4820
        %v4917 = vadd.f32 %v4916, %v4830
        %v4918 = vadd.f32 %v4917, %v4840
        %v4919 = vrot.slane %v4918, 4
        %v4920 = vadd.f32 %v4918, %v4919
        %v4921 = vrot.slane %v4920, 2
        %v4922 = vadd.f32 %v4920, %v4921
        %v4923 = vrot.slane %v4922, 1
        %v4924 = vadd.f32 %v4922, %v4923
        %v4925 = vadd.f32 %v4531, %v4541
        %v4926 = vadd.f32 %v4925, %v4551
        %v4927 = vadd.f32 %v4926, %v4561
        %v4928 = vadd.f32 %v4927, %v4571
        %v4929 = vadd.f32 %v4928, %v4581
        %v4930 = vadd.f32 %v4929, %v4591
        %v4931 = vadd.f32 %v4930, %v4601
        %v4932 = vadd.f32 %v4931, %v4611
        %v4933 = vadd.f32 %v4932, %v4621
        %v4934 = vadd.f32 %v4933, %v4631
        %v4935 = vadd.f32 %v4934, %v4641
        %v4936 = vadd.f32 %v4935, %v4651
        %v4937 = vadd.f32 %v4936, %v4661
        %v4938 = vadd.f32 %v4937, %v4671
        %v4939 = vadd.f32 %v4938, %v4681
        %v4940 = vadd.f32 %v4939, %v4691
        %v4941 = vadd.f32 %v4940, %v4701
        %v4942 = vadd.f32 %v4941, %v4711
        %v4943 = vadd.f32 %v4942, %v4721
        %v4944 = vadd.f32 %v4943, %v4731
        %v4945 = vadd.f32 %v4944, %v4741
        %v4946 = vadd.f32 %v4945, %v4751
        %v4947 = vadd.f32 %v4946, %v4761
        %v4948 = vadd.f32 %v4947, %v4771
        %v4949 = vadd.f32 %v4948, %v4781
        %v4950 = vadd.f32 %v4949, %v4791
        %v4951 = vadd.f32 %v4950, %v4801
        %v4952 = vadd.f32 %v4951, %v4811
        %v4953 = vadd.f32 %v4952, %v4821
        %v4954 = vadd.f32 %v4953, %v4831
        %v4955 = vadd.f32 %v4954, %v4841
        %v4956 = vrot.slane %v4955, 4
        %v4957 = vadd.f32 %v4955, %v4956
        %v4958 = vrot.slane %v4957, 2
        %v4959 = vadd.f32 %v4957, %v4958
        %v4960 = vrot.slane %v4959, 1
        %v4961 = vadd.f32 %v4959, %v4960
        %v4962 = vadd.f32 %v4532, %v4542
        %v4963 = vadd.f32 %v4962, %v4552
        %v4964 = vadd.f32 %v4963, %v4562
        %v4965 = vadd.f32 %v4964, %v4572
        %v4966 = vadd.f32 %v4965, %v4582
        %v4967 = vadd.f32 %v4966, %v4592
        %v4968 = vadd.f32 %v4967, %v4602
        %v4969 = vadd.f32 %v4968, %v4612
        %v4970 = vadd.f32 %v4969, %v4622
        %v4971 = vadd.f32 %v4970, %v4632
        %v4972 = vadd.f32 %v4971, %v4642
        %v4973 = vadd.f32 %v4972, %v4652
        %v4974 = vadd.f32 %v4973, %v4662
        %v4975 = vadd.f32 %v4974, %v4672
        %v4976 = vadd.f32 %v4975, %v4682
        %v4977 = vadd.f32 %v4976, %v4692
        %v4978 = vadd.f32 %v4977, %v4702
        %v4979 = vadd.f32 %v4978, %v4712
        %v4980 = vadd.f32 %v4979, %v4722
        %v4981 = vadd.f32 %v4980, %v4732
        %v4982 = vadd.f32 %v4981, %v4742
        %v4983 = vadd.f32 %v4982, %v4752
        %v4984 = vadd.f32 %v4983, %v4762
        %v4985 = vadd.f32 %v4984, %v4772
        %v4986 = vadd.f32 %v4985, %v4782
        %v4987 = vadd.f32 %v4986, %v4792
        %v4988 = vadd.f32 %v4987, %v4802
        %v4989 = vadd.f32 %v4988, %v4812
        %v4990 = vadd.f32 %v4989, %v4822
        %v4991 = vadd.f32 %v4990, %v4832
        %v4992 = vadd.f32 %v4991, %v4842
        %v4993 = vrot.slane %v4992, 4
        %v4994 = vadd.f32 %v4992, %v4993
        %v4995 = vrot.slane %v4994, 2
        %v4996 = vadd.f32 %v4994, %v4995
        %v4997 = vrot.slane %v4996, 1
        %v4998 = vadd.f32 %v4996, %v4997
        %v4999 = vadd.f32 %v4533, %v4543
        %v5000 = vadd.f32 %v4999, %v4553
        %v5001 = vadd.f32 %v5000, %v4563
        %v5002 = vadd.f32 %v5001, %v4573
        %v5003 = vadd.f32 %v5002, %v4583
        %v5004 = vadd.f32 %v5003, %v4593
        %v5005 = vadd.f32 %v5004, %v4603
        %v5006 = vadd.f32 %v5005, %v4613
        %v5007 = vadd.f32 %v5006, %v4623
        %v5008 = vadd.f32 %v5007, %v4633
        %v5009 = vadd.f32 %v5008, %v4643
        %v5010 = vadd.f32 %v5009, %v4653
        %v5011 = vadd.f32 %v5010, %v4663
        %v5012 = vadd.f32 %v5011, %v4673
        %v5013 = vadd.f32 %v5012, %v4683
        %v5014 = vadd.f32 %v5013, %v4693
        %v5015 = vadd.f32 %v5014, %v4703
        %v5016 = vadd.f32 %v5015, %v4713
        %v5017 = vadd.f32 %v5016, %v4723
        %v5018 = vadd.f32 %v5017, %v4733
        %v5019 = vadd.f32 %v5018, %v4743
        %v5020 = vadd.f32 %v5019, %v4753
        %v5021 = vadd.f32 %v5020, %v4763
        %v5022 = vadd.f32 %v5021, %v4773
        %v5023 = vadd.f32 %v5022, %v4783
        %v5024 = vadd.f32 %v5023, %v4793
        %v5025 = vadd.f32 %v5024, %v4803
        %v5026 = vadd.f32 %v5025, %v4813
        %v5027 = vadd.f32 %v5026, %v4823
        %v5028 = vadd.f32 %v5027, %v4833
        %v5029 = vadd.f32 %v5028, %v4843
        %v5030 = vrot.slane %v5029, 4
        %v5031 = vadd.f32 %v5029, %v5030
        %v5032 = vrot.slane %v5031, 2
        %v5033 = vadd.f32 %v5031, %v5032
        %v5034 = vrot.slane %v5033, 1
        %v5035 = vadd.f32 %v5033, %v5034
        %v5036 = vadd.f32 %v4534, %v4544
        %v5037 = vadd.f32 %v5036, %v4554
        %v5038 = vadd.f32 %v5037, %v4564
        %v5039 = vadd.f32 %v5038, %v4574
        %v5040 = vadd.f32 %v5039, %v4584
        %v5041 = vadd.f32 %v5040, %v4594
        %v5042 = vadd.f32 %v5041, %v4604
        %v5043 = vadd.f32 %v5042, %v4614
        %v5044 = vadd.f32 %v5043, %v4624
        %v5045 = vadd.f32 %v5044, %v4634
        %v5046 = vadd.f32 %v5045, %v4644
        %v5047 = vadd.f32 %v5046, %v4654
        %v5048 = vadd.f32 %v5047, %v4664
        %v5049 = vadd.f32 %v5048, %v4674
        %v5050 = vadd.f32 %v5049, %v4684
        %v5051 = vadd.f32 %v5050, %v4694
        %v5052 = vadd.f32 %v5051, %v4704
        %v5053 = vadd.f32 %v5052, %v4714
        %v5054 = vadd.f32 %v5053, %v4724
        %v5055 = vadd.f32 %v5054, %v4734
        %v5056 = vadd.f32 %v5055, %v4744
        %v5057 = vadd.f32 %v5056, %v4754
        %v5058 = vadd.f32 %v5057, %v4764
        %v5059 = vadd.f32 %v5058, %v4774
        %v5060 = vadd.f32 %v5059, %v4784
        %v5061 = vadd.f32 %v5060, %v4794
        %v5062 = vadd.f32 %v5061, %v4804
        %v5063 = vadd.f32 %v5062, %v4814
        %v5064 = vadd.f32 %v5063, %v4824
        %v5065 = vadd.f32 %v5064, %v4834
        %v5066 = vadd.f32 %v5065, %v4844
        %v5067 = vrot.slane %v5066, 4
        %v5068 = vadd.f32 %v5066, %v5067
        %v5069 = vrot.slane %v5068, 2
        %v5070 = vadd.f32 %v5068, %v5069
        %v5071 = vrot.slane %v5070, 1
        %v5072 = vadd.f32 %v5070, %v5071
        %v5073 = vadd.f32 %v4535, %v4545
        %v5074 = vadd.f32 %v5073, %v4555
        %v5075 = vadd.f32 %v5074, %v4565
        %v5076 = vadd.f32 %v5075, %v4575
        %v5077 = vadd.f32 %v5076, %v4585
        %v5078 = vadd.f32 %v5077, %v4595
        %v5079 = vadd.f32 %v5078, %v4605
        %v5080 = vadd.f32 %v5079, %v4615
        %v5081 = vadd.f32 %v5080, %v4625
        %v5082 = vadd.f32 %v5081, %v4635
        %v5083 = vadd.f32 %v5082, %v4645
        %v5084 = vadd.f32 %v5083, %v4655
        %v5085 = vadd.f32 %v5084, %v4665
        %v5086 = vadd.f32 %v5085, %v4675
        %v5087 = vadd.f32 %v5086, %v4685
        %v5088 = vadd.f32 %v5087, %v4695
        %v5089 = vadd.f32 %v5088, %v4705
        %v5090 = vadd.f32 %v5089, %v4715
        %v5091 = vadd.f32 %v5090, %v4725
        %v5092 = vadd.f32 %v5091, %v4735
        %v5093 = vadd.f32 %v5092, %v4745
        %v5094 = vadd.f32 %v5093, %v4755
        %v5095 = vadd.f32 %v5094, %v4765
        %v5096 = vadd.f32 %v5095, %v4775
        %v5097 = vadd.f32 %v5096, %v4785
        %v5098 = vadd.f32 %v5097, %v4795
        %v5099 = vadd.f32 %v5098, %v4805
        %v5100 = vadd.f32 %v5099, %v4815
        %v5101 = vadd.f32 %v5100, %v4825
        %v5102 = vadd.f32 %v5101, %v4835
        %v5103 = vadd.f32 %v5102, %v4845
        %v5104 = vrot.slane %v5103, 4
        %v5105 = vadd.f32 %v5103, %v5104
        %v5106 = vrot.slane %v5105, 2
        %v5107 = vadd.f32 %v5105, %v5106
        %v5108 = vrot.slane %v5107, 1
        %v5109 = vadd.f32 %v5107, %v5108
        %v5110 = vadd.f32 %v4536, %v4546
        %v5111 = vadd.f32 %v5110, %v4556
        %v5112 = vadd.f32 %v5111, %v4566
        %v5113 = vadd.f32 %v5112, %v4576
        %v5114 = vadd.f32 %v5113, %v4586
        %v5115 = vadd.f32 %v5114, %v4596
        %v5116 = vadd.f32 %v5115, %v4606
        %v5117 = vadd.f32 %v5116, %v4616
        %v5118 = vadd.f32 %v5117, %v4626
        %v5119 = vadd.f32 %v5118, %v4636
        %v5120 = vadd.f32 %v5119, %v4646
        %v5121 = vadd.f32 %v5120, %v4656
        %v5122 = vadd.f32 %v5121, %v4666
        %v5123 = vadd.f32 %v5122, %v4676
        %v5124 = vadd.f32 %v5123, %v4686
        %v5125 = vadd.f32 %v5124, %v4696
        %v5126 = vadd.f32 %v5125, %v4706
        %v5127 = vadd.f32 %v5126, %v4716
        %v5128 = vadd.f32 %v5127, %v4726
        %v5129 = vadd.f32 %v5128, %v4736
        %v5130 = vadd.f32 %v5129, %v4746
        %v5131 = vadd.f32 %v5130, %v4756
        %v5132 = vadd.f32 %v5131, %v4766
        %v5133 = vadd.f32 %v5132, %v4776
        %v5134 = vadd.f32 %v5133, %v4786
        %v5135 = vadd.f32 %v5134, %v4796
        %v5136 = vadd.f32 %v5135, %v4806
        %v5137 = vadd.f32 %v5136, %v4816
        %v5138 = vadd.f32 %v5137, %v4826
        %v5139 = vadd.f32 %v5138, %v4836
        %v5140 = vadd.f32 %v5139, %v4846
        %v5141 = vrot.slane %v5140, 4
        %v5142 = vadd.f32 %v5140, %v5141
        %v5143 = vrot.slane %v5142, 2
        %v5144 = vadd.f32 %v5142, %v5143
        %v5145 = vrot.slane %v5144, 1
        %v5146 = vadd.f32 %v5144, %v5145
        %v5147 = vadd.f32 %v4537, %v4547
        %v5148 = vadd.f32 %v5147, %v4557
        %v5149 = vadd.f32 %v5148, %v4567
        %v5150 = vadd.f32 %v5149, %v4577
        %v5151 = vadd.f32 %v5150, %v4587
        %v5152 = vadd.f32 %v5151, %v4597
        %v5153 = vadd.f32 %v5152, %v4607
        %v5154 = vadd.f32 %v5153, %v4617
        %v5155 = vadd.f32 %v5154, %v4627
        %v5156 = vadd.f32 %v5155, %v4637
        %v5157 = vadd.f32 %v5156, %v4647
        %v5158 = vadd.f32 %v5157, %v4657
        %v5159 = vadd.f32 %v5158, %v4667
        %v5160 = vadd.f32 %v5159, %v4677
        %v5161 = vadd.f32 %v5160, %v4687
        %v5162 = vadd.f32 %v5161, %v4697
        %v5163 = vadd.f32 %v5162, %v4707
        %v5164 = vadd.f32 %v5163, %v4717
        %v5165 = vadd.f32 %v5164, %v4727
        %v5166 = vadd.f32 %v5165, %v4737
        %v5167 = vadd.f32 %v5166, %v4747
        %v5168 = vadd.f32 %v5167, %v4757
        %v5169 = vadd.f32 %v5168, %v4767
        %v5170 = vadd.f32 %v5169, %v4777
        %v5171 = vadd.f32 %v5170, %v4787
        %v5172 = vadd.f32 %v5171, %v4797
        %v5173 = vadd.f32 %v5172, %v4807
        %v5174 = vadd.f32 %v5173, %v4817
        %v5175 = vadd.f32 %v5174, %v4827
        %v5176 = vadd.f32 %v5175, %v4837
        %v5177 = vadd.f32 %v5176, %v4847
        %v5178 = vrot.slane %v5177, 4
        %v5179 = vadd.f32 %v5177, %v5178
        %v5180 = vrot.slane %v5179, 2
        %v5181 = vadd.f32 %v5179, %v5180
        %v5182 = vrot.slane %v5181, 1
        %v5183 = vadd.f32 %v5181, %v5182
        %v5184 = vadd.f32 %v4538, %v4548
        %v5185 = vadd.f32 %v5184, %v4558
        %v5186 = vadd.f32 %v5185, %v4568
        %v5187 = vadd.f32 %v5186, %v4578
        %v5188 = vadd.f32 %v5187, %v4588
        %v5189 = vadd.f32 %v5188, %v4598
        %v5190 = vadd.f32 %v5189, %v4608
        %v5191 = vadd.f32 %v5190, %v4618
        %v5192 = vadd.f32 %v5191, %v4628
        %v5193 = vadd.f32 %v5192, %v4638
        %v5194 = vadd.f32 %v5193, %v4648
        %v5195 = vadd.f32 %v5194, %v4658
        %v5196 = vadd.f32 %v5195, %v4668
        %v5197 = vadd.f32 %v5196, %v4678
        %v5198 = vadd.f32 %v5197, %v4688
        %v5199 = vadd.f32 %v5198, %v4698
        %v5200 = vadd.f32 %v5199, %v4708
        %v5201 = vadd.f32 %v5200, %v4718
        %v5202 = vadd.f32 %v5201, %v4728
        %v5203 = vadd.f32 %v5202, %v4738
        %v5204 = vadd.f32 %v5203, %v4748
        %v5205 = vadd.f32 %v5204, %v4758
        %v5206 = vadd.f32 %v5205, %v4768
        %v5207 = vadd.f32 %v5206, %v4778
        %v5208 = vadd.f32 %v5207, %v4788
        %v5209 = vadd.f32 %v5208, %v4798
        %v5210 = vadd.f32 %v5209, %v4808
        %v5211 = vadd.f32 %v5210, %v4818
        %v5212 = vadd.f32 %v5211, %v4828
        %v5213 = vadd.f32 %v5212, %v4838
        %v5214 = vadd.f32 %v5213, %v4848
        %v5215 = vrot.slane %v5214, 4
        %v5216 = vadd.f32 %v5214, %v5215
        %v5217 = vrot.slane %v5216, 2
        %v5218 = vadd.f32 %v5216, %v5217
        %v5219 = vrot.slane %v5218, 1
        %v5220 = vadd.f32 %v5218, %v5219
        %v5231 = vcombine.low %v4887, %v4924
        %v5232 = vcombine.low %v4961, %v4998
        %v5233 = vcombine.low %v5035, %v5072
        %v5234 = vcombine.low %v5109, %v5146
        %v5236 = vunpack.c.l.s4 1966171168
        %v5237 = vunpack.c.0.s8 %v5236
        %v5238 = vlaneseq
        %v5239 = vshrl.u32 %v5238, 7
        %v5240 = vsub.s32 %v5237, %v5239
        %v5241 = vrot.slane %v5231, %v5240
        %v5243 = vunpack.c.l.s4 1966171168
        %v5244 = vunpack.c.0.s8 %v5243
        %v5245 = vlaneseq
        %v5246 = vshrl.u32 %v5245, 7
        %v5247 = vsub.s32 %v5244, %v5246
        %v5248 = vrot.slane %v5232, %v5247
        %v5250 = vunpack.c.l.s4 1966171168
        %v5251 = vunpack.c.0.s8 %v5250
        %v5252 = vlaneseq
        %v5253 = vshrl.u32 %v5252, 7
        %v5254 = vsub.s32 %v5251, %v5253
        %v5255 = vrot.slane %v5233, %v5254
        %v5257 = vunpack.c.l.s4 1966171168
        %v5258 = vunpack.c.0.s8 %v5257
        %v5259 = vlaneseq
        %v5260 = vshrl.u32 %v5259, 7
        %v5261 = vsub.s32 %v5258, %v5260
        %v5262 = vrot.slane %v5234, %v5261
        %v5263 = vcombine.low %v5241, %v5248
        %v5264 = vcombine.low %v5255, %v5262
        %v5266 = vunpack.c.l.s4 1966171168
        %v5267 = vunpack.c.0.s8 %v5266
        %v5268 = vlaneseq
        %v5269 = vshrl.u32 %v5268, 7
        %v5270 = vsub.s32 %v5267, %v5269
        %v5271 = vrot.slane %v5263, %v5270
        %v5273 = vunpack.c.l.s4 1966171168
        %v5274 = vunpack.c.0.s8 %v5273
        %v5275 = vlaneseq
        %v5276 = vshrl.u32 %v5275, 7
        %v5277 = vsub.s32 %v5274, %v5276
        %v5278 = vrot.slane %v5264, %v5277
        %v5279 = vcombine.low %v5271, %v5278
        %v5280 = vcombine.low %v5183, %v5220
        %v5282 = vunpack.c.l.s4 1966171168
        %v5283 = vunpack.c.0.s8 %v5282
        %v5284 = vlaneseq
        %v5285 = vshrl.u32 %v5284, 7
        %v5286 = vsub.s32 %v5283, %v5285
        %v5287 = vrot.slane %v5280, %v5286
        %v5289 = vunpack.c.l.s4 1966171168
        %v5290 = vunpack.c.0.s8 %v5289
        %v5291 = vlaneseq
        %v5292 = vshrl.u32 %v5291, 7
        %v5293 = vsub.s32 %v5290, %v5292
        %v5294 = vrot.slane %v5287, %v5293
        %v5297 = vadd.f32 %v4849, %v5279
        %v5298 = vadd.f32 %v4850, %v5294
        %5299 = vst [vmem:[#allocation2] sm:$0xff] %v5297
        %v5300 = vlaneseq
        %vm5301 = vcmp.ge.s32.totalorder %v5300, 0
        %vm5302 = vcmp.lt.s32.totalorder %v5300, 256
        %vm5303 = vmand %vm5301, %vm5302
        %5304 = vst.msk [vmem:[#allocation2 + $0x8] sm:$0x3] %vm5303, %v5298
        // Predicated region
        $region49: #{classify_forward.1} parent=43 // pred_check
          %p5305 = pneg %p278
        $region50: #{classify_forward.1} parent=43 // pred_check_branch
          %5307 = sbr.rel (%p5305) target = $region52
        $region51: #{classify_forward.1} parent=43 // pred_region
          %v5308 = vld [vmem:[#allocation2] sm:$0xff]
          %v5309 = vld [vmem:[#allocation2 + $0x8] sm:$0x3]
          %v5310 = vmul.f32 %v5308, 0.00390625
          %v5311 = vmul.f32 %v5309, 0.00390625
          %v5314 = vlaneseq
          %v5315 = vshrl.u32 %v5314, 7
          %v5316 = vsub.s32 0, %v5315
          %v5317 = vrot.slane %v5310, %v5316
          %v5318 = vlaneseq
          %v5319 = vshrl.u32 %v5318, 7
          %v5320 = vsub.s32 1, %v5319
          %v5321 = vrot.slane %v5310, %v5320
          %v5322 = vlaneseq
          %v5323 = vshrl.u32 %v5322, 7
          %v5324 = vsub.s32 2, %v5323
          %v5325 = vrot.slane %v5310, %v5324
          %v5326 = vlaneseq
          %v5327 = vshrl.u32 %v5326, 7
          %v5328 = vsub.s32 3, %v5327
          %v5329 = vrot.slane %v5310, %v5328
          %v5330 = vlaneseq
          %v5331 = vshrl.u32 %v5330, 7
          %v5332 = vsub.s32 4, %v5331
          %v5333 = vrot.slane %v5310, %v5332
          %v5334 = vlaneseq
          %v5335 = vshrl.u32 %v5334, 7
          %v5336 = vsub.s32 5, %v5335
          %v5337 = vrot.slane %v5310, %v5336
          %v5338 = vlaneseq
          %v5339 = vshrl.u32 %v5338, 7
          %v5340 = vsub.s32 6, %v5339
          %v5341 = vrot.slane %v5310, %v5340
          %v5342 = vlaneseq
          %v5343 = vshrl.u32 %v5342, 7
          %v5344 = vsub.s32 7, %v5343
          %v5345 = vrot.slane %v5310, %v5344
          %v5346 = vlaneseq
          %v5347 = vshrl.u32 %v5346, 7
          %v5348 = vsub.s32 0, %v5347
          %v5349 = vrot.slane %v5311, %v5348
          %v5350 = vlaneseq
          %v5351 = vshrl.u32 %v5350, 7
          %v5352 = vsub.s32 1, %v5351
          %v5353 = vrot.slane %v5311, %v5352
          %v5364 = vpack.c.bf16 %v5317, %v5317
          %v5365 = vpack.c.bf16 %v5321, %v5321
          %v5366 = vpack.c.bf16 %v5325, %v5325
          %v5367 = vpack.c.bf16 %v5329, %v5329
          %v5368 = vpack.c.bf16 %v5333, %v5333
          %v5369 = vpack.c.bf16 %v5337, %v5337
          %v5370 = vpack.c.bf16 %v5341, %v5341
          %v5371 = vpack.c.bf16 %v5345, %v5345
          %v5372 = vpack.c.bf16 %v5349, %v5349
          %v5373 = vpack.c.bf16 %v5353, %v5353
          %v5374 = vld [vmem:[%s4] sm:$0xf]
          %v5375 = vld [vmem:[%s4 + $0x4] sm:$0xf]
          %v5376 = vld [vmem:[%s4 + $0x8] sm:$0xf]
          %v5377 = vld [vmem:[%s4 + $0xc] sm:$0xf]
          %v5378 = vld [vmem:[%s4 + $0x10] sm:$0xf]
          %v5379 = vld [vmem:[%s4 + $0x14] sm:$0xf]
          %v5380 = vld [vmem:[%s4 + $0x18] sm:$0xf]
          %v5381 = vld [vmem:[%s4 + $0x1c] sm:$0xf]
          %v5382 = vld [vmem:[%s4 + $0x20] sm:$0xf]
          %v5383 = vld [vmem:[%s4 + $0x24] sm:$0xf]
          %v5384 = vld [vmem:[%s4 + $0x28] sm:$0xf]
          %v5385 = vld [vmem:[%s4 + $0x2c] sm:$0xf]
          %v5386 = vld [vmem:[%s4 + $0x30] sm:$0xf]
          %v5387 = vld [vmem:[%s4 + $0x34] sm:$0xf]
          %v5388 = vld [vmem:[%s4 + $0x38] sm:$0xf]
          %v5389 = vld [vmem:[%s4 + $0x3c] sm:$0xf]
          %v5390 = vld [vmem:[%s4 + $0x40] sm:$0xf]
          %v5391 = vld [vmem:[%s4 + $0x44] sm:$0xf]
          %v5392 = vld [vmem:[%s4 + $0x48] sm:$0xf]
          %v5393 = vld [vmem:[%s4 + $0x4c] sm:$0xf]
          %v5394 = vld [vmem:[%s4 + $0x50] sm:$0xf]
          %v5395 = vld [vmem:[%s4 + $0x54] sm:$0xf]
          %v5396 = vld [vmem:[%s4 + $0x58] sm:$0xf]
          %v5397 = vld [vmem:[%s4 + $0x5c] sm:$0xf]
          %v5398 = vld [vmem:[%s4 + $0x60] sm:$0xf]
          %v5399 = vld [vmem:[%s4 + $0x64] sm:$0xf]
          %v5400 = vld [vmem:[%s4 + $0x68] sm:$0xf]
          %v5401 = vld [vmem:[%s4 + $0x6c] sm:$0xf]
          %v5402 = vld [vmem:[%s4 + $0x70] sm:$0xf]
          %v5403 = vld [vmem:[%s4 + $0x74] sm:$0xf]
          %v5404 = vld [vmem:[%s4 + $0x78] sm:$0xf]
          %v5405 = vld [vmem:[%s4 + $0x7c] sm:$0xf]
          %v5406 = vld [vmem:[%s4 + $0x80] sm:$0xf]
          %v5407 = vld [vmem:[%s4 + $0x84] sm:$0xf]
          %v5408 = vld [vmem:[%s4 + $0x88] sm:$0xf]
          %v5409 = vld [vmem:[%s4 + $0x8c] sm:$0xf]
          %v5410 = vld [vmem:[%s4 + $0x90] sm:$0xf]
          %v5411 = vld [vmem:[%s4 + $0x94] sm:$0xf]
          %v5412 = vld [vmem:[%s4 + $0x98] sm:$0xf]
          %v5413 = vld [vmem:[%s4 + $0x9c] sm:$0xf]
          %v5414 = vld [vmem:[%s4 + $0xa0] sm:$0xf]
          %v5415 = vld [vmem:[%s4 + $0xa4] sm:$0xf]
          %v5416 = vld [vmem:[%s4 + $0xa8] sm:$0xf]
          %v5417 = vld [vmem:[%s4 + $0xac] sm:$0xf]
          %v5418 = vld [vmem:[%s4 + $0xb0] sm:$0xf]
          %v5419 = vld [vmem:[%s4 + $0xb4] sm:$0xf]
          %v5420 = vld [vmem:[%s4 + $0xb8] sm:$0xf]
          %v5421 = vld [vmem:[%s4 + $0xbc] sm:$0xf]
          %v5422 = vld [vmem:[%s4 + $0xc0] sm:$0xf]
          %v5423 = vld [vmem:[%s4 + $0xc4] sm:$0xf]
          %v5424 = vld [vmem:[%s4 + $0xc8] sm:$0xf]
          %v5425 = vld [vmem:[%s4 + $0xcc] sm:$0xf]
          %v5426 = vld [vmem:[%s4 + $0xd0] sm:$0xf]
          %v5427 = vld [vmem:[%s4 + $0xd4] sm:$0xf]
          %v5428 = vld [vmem:[%s4 + $0xd8] sm:$0xf]
          %v5429 = vld [vmem:[%s4 + $0xdc] sm:$0xf]
          %v5430 = vld [vmem:[%s4 + $0xe0] sm:$0xf]
          %v5431 = vld [vmem:[%s4 + $0xe4] sm:$0xf]
          %v5432 = vld [vmem:[%s4 + $0xe8] sm:$0xf]
          %v5433 = vld [vmem:[%s4 + $0xec] sm:$0xf]
          %v5434 = vld [vmem:[%s4 + $0xf0] sm:$0xf]
          %v5435 = vld [vmem:[%s4 + $0xf4] sm:$0xf]
          %v5436 = vld [vmem:[%s4 + $0xf8] sm:$0xf]
          %v5437 = vld [vmem:[%s4 + $0xfc] sm:$0xf]
          %v5438 = vld [vmem:[%s4 + $0x100] sm:$0xf]
          %v5439 = vld [vmem:[%s4 + $0x104] sm:$0xf]
          %v5440 = vld [vmem:[%s4 + $0x108] sm:$0xf]
          %v5441 = vld [vmem:[%s4 + $0x10c] sm:$0xf]
          %v5442 = vld [vmem:[%s4 + $0x110] sm:$0xf]
          %v5443 = vld [vmem:[%s4 + $0x114] sm:$0xf]
          %v5444 = vld [vmem:[%s4 + $0x118] sm:$0xf]
          %v5445 = vld [vmem:[%s4 + $0x11c] sm:$0xf]
          %v5446 = vld [vmem:[%s4 + $0x120] sm:$0xf]
          %v5447 = vld [vmem:[%s4 + $0x124] sm:$0xf]
          %v5448 = vld [vmem:[%s4 + $0x128] sm:$0xf]
          %v5449 = vld [vmem:[%s4 + $0x12c] sm:$0xf]
          %v5450 = vld [vmem:[%s4 + $0x130] sm:$0xf]
          %v5451 = vld [vmem:[%s4 + $0x134] sm:$0xf]
          %v5452 = vld [vmem:[%s4 + $0x138] sm:$0xf]
          %v5453 = vld [vmem:[%s4 + $0x13c] sm:$0xf]
          %v5454 = vld [vmem:[%s4 + $0x140] sm:$0xf]
          %v5455 = vld [vmem:[%s4 + $0x144] sm:$0xf]
          %v5456 = vld [vmem:[%s4 + $0x148] sm:$0xf]
          %v5457 = vld [vmem:[%s4 + $0x14c] sm:$0xf]
          %v5458 = vld [vmem:[%s4 + $0x150] sm:$0xf]
          %v5459 = vld [vmem:[%s4 + $0x154] sm:$0xf]
          %v5460 = vld [vmem:[%s4 + $0x158] sm:$0xf]
          %v5461 = vld [vmem:[%s4 + $0x15c] sm:$0xf]
          %v5462 = vld [vmem:[%s4 + $0x160] sm:$0xf]
          %v5463 = vld [vmem:[%s4 + $0x164] sm:$0xf]
          %v5464 = vld [vmem:[%s4 + $0x168] sm:$0xf]
          %v5465 = vld [vmem:[%s4 + $0x16c] sm:$0xf]
          %v5466 = vld [vmem:[%s4 + $0x170] sm:$0xf]
          %v5467 = vld [vmem:[%s4 + $0x174] sm:$0xf]
          %v5468 = vld [vmem:[%s4 + $0x178] sm:$0xf]
          %v5469 = vld [vmem:[%s4 + $0x17c] sm:$0xf]
          %v5470 = vld [vmem:[%s4 + $0x180] sm:$0xf]
          %v5471 = vld [vmem:[%s4 + $0x184] sm:$0xf]
          %v5472 = vld [vmem:[%s4 + $0x188] sm:$0xf]
          %v5473 = vld [vmem:[%s4 + $0x18c] sm:$0xf]
          %v5474 = vld [vmem:[%s4 + $0x190] sm:$0xf]
          %v5475 = vld [vmem:[%s4 + $0x194] sm:$0xf]
          %v5476 = vld [vmem:[%s4 + $0x198] sm:$0xf]
          %v5477 = vld [vmem:[%s4 + $0x19c] sm:$0xf]
          %v5478 = vld [vmem:[%s4 + $0x1a0] sm:$0xf]
          %v5479 = vld [vmem:[%s4 + $0x1a4] sm:$0xf]
          %v5480 = vld [vmem:[%s4 + $0x1a8] sm:$0xf]
          %v5481 = vld [vmem:[%s4 + $0x1ac] sm:$0xf]
          %v5482 = vld [vmem:[%s4 + $0x1b0] sm:$0xf]
          %v5483 = vld [vmem:[%s4 + $0x1b4] sm:$0xf]
          %v5484 = vld [vmem:[%s4 + $0x1b8] sm:$0xf]
          %v5485 = vld [vmem:[%s4 + $0x1bc] sm:$0xf]
          %v5486 = vld [vmem:[%s4 + $0x1c0] sm:$0xf]
          %v5487 = vld [vmem:[%s4 + $0x1c4] sm:$0xf]
          %v5488 = vld [vmem:[%s4 + $0x1c8] sm:$0xf]
          %v5489 = vld [vmem:[%s4 + $0x1cc] sm:$0xf]
          %v5490 = vld [vmem:[%s4 + $0x1d0] sm:$0xf]
          %v5491 = vld [vmem:[%s4 + $0x1d4] sm:$0xf]
          %v5492 = vld [vmem:[%s4 + $0x1d8] sm:$0xf]
          %v5493 = vld [vmem:[%s4 + $0x1dc] sm:$0xf]
          %v5494 = vld [vmem:[%s4 + $0x1e0] sm:$0xf]
          %v5495 = vld [vmem:[%s4 + $0x1e4] sm:$0xf]
          %v5496 = vld [vmem:[%s4 + $0x1e8] sm:$0xf]
          %v5497 = vld [vmem:[%s4 + $0x1ec] sm:$0xf]
          %v5498 = vld [vmem:[%s4 + $0x1f0] sm:$0xf]
          %v5499 = vld [vmem:[%s4 + $0x1f4] sm:$0xf]
          %v5500 = vld [vmem:[%s4 + $0x1f8] sm:$0xf]
          %v5501 = vld [vmem:[%s4 + $0x1fc] sm:$0xf]
          %v5502 = vld [vmem:[%s4 + $0x200] sm:$0xf]
          %v5503 = vld [vmem:[%s4 + $0x204] sm:$0xf]
          %v5504 = vld [vmem:[%s4 + $0x208] sm:$0xf]
          %v5505 = vld [vmem:[%s4 + $0x20c] sm:$0xf]
          %v5506 = vld [vmem:[%s4 + $0x210] sm:$0xf]
          %v5507 = vld [vmem:[%s4 + $0x214] sm:$0xf]
          %v5508 = vld [vmem:[%s4 + $0x218] sm:$0xf]
          %v5509 = vld [vmem:[%s4 + $0x21c] sm:$0xf]
          %v5510 = vld [vmem:[%s4 + $0x220] sm:$0xf]
          %v5511 = vld [vmem:[%s4 + $0x224] sm:$0xf]
          %v5512 = vld [vmem:[%s4 + $0x228] sm:$0xf]
          %v5513 = vld [vmem:[%s4 + $0x22c] sm:$0xf]
          %v5514 = vld [vmem:[%s4 + $0x230] sm:$0xf]
          %v5515 = vld [vmem:[%s4 + $0x234] sm:$0xf]
          %v5516 = vld [vmem:[%s4 + $0x238] sm:$0xf]
          %v5517 = vld [vmem:[%s4 + $0x23c] sm:$0xf]
          %v5518 = vld [vmem:[%s4 + $0x240] sm:$0xf]
          %v5519 = vld [vmem:[%s4 + $0x244] sm:$0xf]
          %v5520 = vld [vmem:[%s4 + $0x248] sm:$0xf]
          %v5521 = vld [vmem:[%s4 + $0x24c] sm:$0xf]
          %v5522 = vld [vmem:[%s4 + $0x250] sm:$0xf]
          %v5523 = vld [vmem:[%s4 + $0x254] sm:$0xf]
          %v5524 = vld [vmem:[%s4 + $0x258] sm:$0xf]
          %v5525 = vld [vmem:[%s4 + $0x25c] sm:$0xf]
          %v5526 = vld [vmem:[%s4 + $0x260] sm:$0xf]
          %v5527 = vld [vmem:[%s4 + $0x264] sm:$0xf]
          %v5528 = vld [vmem:[%s4 + $0x268] sm:$0xf]
          %v5529 = vld [vmem:[%s4 + $0x26c] sm:$0xf]
          %v5530 = vld [vmem:[%s4 + $0x270] sm:$0xf]
          %v5531 = vld [vmem:[%s4 + $0x274] sm:$0xf]
          %v5532 = vld [vmem:[%s4 + $0x278] sm:$0xf]
          %v5533 = vld [vmem:[%s4 + $0x27c] sm:$0xf]
          %v5534 = vld [vmem:[%s5] sm:$0x1]
          %v5695 = vunpack.c.l.b16 %v5374
          %v5696 = vunpack.c.l.b16 %v5375
          %v5697 = vunpack.c.l.b16 %v5376
          %v5698 = vunpack.c.l.b16 %v5377
          %v5699 = vunpack.c.l.b16 %v5378
          %v5700 = vunpack.c.l.b16 %v5379
          %v5701 = vunpack.c.l.b16 %v5380
          %v5702 = vunpack.c.l.b16 %v5381
          %v5703 = vunpack.c.l.b16 %v5382
          %v5704 = vunpack.c.l.b16 %v5383
          %v5705 = vunpack.c.l.b16 %v5384
          %v5706 = vunpack.c.l.b16 %v5385
          %v5707 = vunpack.c.l.b16 %v5386
          %v5708 = vunpack.c.l.b16 %v5387
          %v5709 = vunpack.c.l.b16 %v5388
          %v5710 = vunpack.c.l.b16 %v5389
          %v5711 = vunpack.c.l.b16 %v5390
          %v5712 = vunpack.c.l.b16 %v5391
          %v5713 = vunpack.c.l.b16 %v5392
          %v5714 = vunpack.c.l.b16 %v5393
          %v5715 = vunpack.c.l.b16 %v5394
          %v5716 = vunpack.c.l.b16 %v5395
          %v5717 = vunpack.c.l.b16 %v5396
          %v5718 = vunpack.c.l.b16 %v5397
          %v5719 = vunpack.c.l.b16 %v5398
          %v5720 = vunpack.c.l.b16 %v5399
          %v5721 = vunpack.c.l.b16 %v5400
          %v5722 = vunpack.c.l.b16 %v5401
          %v5723 = vunpack.c.l.b16 %v5402
          %v5724 = vunpack.c.l.b16 %v5403
          %v5725 = vunpack.c.l.b16 %v5404
          %v5726 = vunpack.c.l.b16 %v5405
          %v5727 = vunpack.c.l.b16 %v5406
          %v5728 = vunpack.c.l.b16 %v5407
          %v5729 = vunpack.c.l.b16 %v5408
          %v5730 = vunpack.c.l.b16 %v5409
          %v5731 = vunpack.c.l.b16 %v5410
          %v5732 = vunpack.c.l.b16 %v5411
          %v5733 = vunpack.c.l.b16 %v5412
          %v5734 = vunpack.c.l.b16 %v5413
          %v5735 = vunpack.c.l.b16 %v5414
          %v5736 = vunpack.c.l.b16 %v5415
          %v5737 = vunpack.c.l.b16 %v5416
          %v5738 = vunpack.c.l.b16 %v5417
          %v5739 = vunpack.c.l.b16 %v5418
          %v5740 = vunpack.c.l.b16 %v5419
          %v5741 = vunpack.c.l.b16 %v5420
          %v5742 = vunpack.c.l.b16 %v5421
          %v5743 = vunpack.c.l.b16 %v5422
          %v5744 = vunpack.c.l.b16 %v5423
          %v5745 = vunpack.c.l.b16 %v5424
          %v5746 = vunpack.c.l.b16 %v5425
          %v5747 = vunpack.c.l.b16 %v5426
          %v5748 = vunpack.c.l.b16 %v5427
          %v5749 = vunpack.c.l.b16 %v5428
          %v5750 = vunpack.c.l.b16 %v5429
          %v5751 = vunpack.c.l.b16 %v5430
          %v5752 = vunpack.c.l.b16 %v5431
          %v5753 = vunpack.c.l.b16 %v5432
          %v5754 = vunpack.c.l.b16 %v5433
          %v5755 = vunpack.c.l.b16 %v5434
          %v5756 = vunpack.c.l.b16 %v5435
          %v5757 = vunpack.c.l.b16 %v5436
          %v5758 = vunpack.c.l.b16 %v5437
          %v5759 = vunpack.c.l.b16 %v5438
          %v5760 = vunpack.c.l.b16 %v5439
          %v5761 = vunpack.c.l.b16 %v5440
          %v5762 = vunpack.c.l.b16 %v5441
          %v5763 = vunpack.c.l.b16 %v5442
          %v5764 = vunpack.c.l.b16 %v5443
          %v5765 = vunpack.c.l.b16 %v5444
          %v5766 = vunpack.c.l.b16 %v5445
          %v5767 = vunpack.c.l.b16 %v5446
          %v5768 = vunpack.c.l.b16 %v5447
          %v5769 = vunpack.c.l.b16 %v5448
          %v5770 = vunpack.c.l.b16 %v5449
          %v5771 = vunpack.c.l.b16 %v5450
          %v5772 = vunpack.c.l.b16 %v5451
          %v5773 = vunpack.c.l.b16 %v5452
          %v5774 = vunpack.c.l.b16 %v5453
          %v5775 = vunpack.c.l.b16 %v5454
          %v5776 = vunpack.c.l.b16 %v5455
          %v5777 = vunpack.c.l.b16 %v5456
          %v5778 = vunpack.c.l.b16 %v5457
          %v5779 = vunpack.c.l.b16 %v5458
          %v5780 = vunpack.c.l.b16 %v5459
          %v5781 = vunpack.c.l.b16 %v5460
          %v5782 = vunpack.c.l.b16 %v5461
          %v5783 = vunpack.c.l.b16 %v5462
          %v5784 = vunpack.c.l.b16 %v5463
          %v5785 = vunpack.c.l.b16 %v5464
          %v5786 = vunpack.c.l.b16 %v5465
          %v5787 = vunpack.c.l.b16 %v5466
          %v5788 = vunpack.c.l.b16 %v5467
          %v5789 = vunpack.c.l.b16 %v5468
          %v5790 = vunpack.c.l.b16 %v5469
          %v5791 = vunpack.c.l.b16 %v5470
          %v5792 = vunpack.c.l.b16 %v5471
          %v5793 = vunpack.c.l.b16 %v5472
          %v5794 = vunpack.c.l.b16 %v5473
          %v5795 = vunpack.c.l.b16 %v5474
          %v5796 = vunpack.c.l.b16 %v5475
          %v5797 = vunpack.c.l.b16 %v5476
          %v5798 = vunpack.c.l.b16 %v5477
          %v5799 = vunpack.c.l.b16 %v5478
          %v5800 = vunpack.c.l.b16 %v5479
          %v5801 = vunpack.c.l.b16 %v5480
          %v5802 = vunpack.c.l.b16 %v5481
          %v5803 = vunpack.c.l.b16 %v5482
          %v5804 = vunpack.c.l.b16 %v5483
          %v5805 = vunpack.c.l.b16 %v5484
          %v5806 = vunpack.c.l.b16 %v5485
          %v5807 = vunpack.c.l.b16 %v5486
          %v5808 = vunpack.c.l.b16 %v5487
          %v5809 = vunpack.c.l.b16 %v5488
          %v5810 = vunpack.c.l.b16 %v5489
          %v5811 = vunpack.c.l.b16 %v5490
          %v5812 = vunpack.c.l.b16 %v5491
          %v5813 = vunpack.c.l.b16 %v5492
          %v5814 = vunpack.c.l.b16 %v5493
          %v5815 = vunpack.c.l.b16 %v5494
          %v5816 = vunpack.c.l.b16 %v5495
          %v5817 = vunpack.c.l.b16 %v5496
          %v5818 = vunpack.c.l.b16 %v5497
          %v5819 = vunpack.c.l.b16 %v5498
          %v5820 = vunpack.c.l.b16 %v5499
          %v5821 = vunpack.c.l.b16 %v5500
          %v5822 = vunpack.c.l.b16 %v5501
          %v5823 = vunpack.c.l.b16 %v5502
          %v5824 = vunpack.c.l.b16 %v5503
          %v5825 = vunpack.c.l.b16 %v5504
          %v5826 = vunpack.c.l.b16 %v5505
          %v5827 = vunpack.c.l.b16 %v5506
          %v5828 = vunpack.c.l.b16 %v5507
          %v5829 = vunpack.c.l.b16 %v5508
          %v5830 = vunpack.c.l.b16 %v5509
          %v5831 = vunpack.c.l.b16 %v5510
          %v5832 = vunpack.c.l.b16 %v5511
          %v5833 = vunpack.c.l.b16 %v5512
          %v5834 = vunpack.c.l.b16 %v5513
          %v5835 = vunpack.c.l.b16 %v5514
          %v5836 = vunpack.c.l.b16 %v5515
          %v5837 = vunpack.c.l.b16 %v5516
          %v5838 = vunpack.c.l.b16 %v5517
          %v5839 = vunpack.c.l.b16 %v5518
          %v5840 = vunpack.c.l.b16 %v5519
          %v5841 = vunpack.c.l.b16 %v5520
          %v5842 = vunpack.c.l.b16 %v5521
          %v5843 = vunpack.c.l.b16 %v5522
          %v5844 = vunpack.c.l.b16 %v5523
          %v5845 = vunpack.c.l.b16 %v5524
          %v5846 = vunpack.c.l.b16 %v5525
          %v5847 = vunpack.c.l.b16 %v5526
          %v5848 = vunpack.c.l.b16 %v5527
          %v5849 = vunpack.c.l.b16 %v5528
          %v5850 = vunpack.c.l.b16 %v5529
          %v5851 = vunpack.c.l.b16 %v5530
          %v5852 = vunpack.c.l.b16 %v5531
          %v5853 = vunpack.c.l.b16 %v5532
          %v5854 = vunpack.c.l.b16 %v5533
          %v5855 = vpack.c.b16 %v5696, %v5695
          %v5856 = vpack.c.b16 %v5698, %v5697
          %v5857 = vpack.c.b16 %v5700, %v5699
          %v5858 = vpack.c.b16 %v5702, %v5701
          %v5859 = vpack.c.b16 %v5704, %v5703
          %v5860 = vpack.c.b16 %v5706, %v5705
          %v5861 = vpack.c.b16 %v5708, %v5707
          %v5862 = vpack.c.b16 %v5710, %v5709
          %v5863 = vpack.c.b16 %v5712, %v5711
          %v5864 = vpack.c.b16 %v5714, %v5713
          %v5865 = vpack.c.b16 %v5716, %v5715
          %v5866 = vpack.c.b16 %v5718, %v5717
          %v5867 = vpack.c.b16 %v5720, %v5719
          %v5868 = vpack.c.b16 %v5722, %v5721
          %v5869 = vpack.c.b16 %v5724, %v5723
          %v5870 = vpack.c.b16 %v5726, %v5725
          %v5871 = vpack.c.b16 %v5728, %v5727
          %v5872 = vpack.c.b16 %v5730, %v5729
          %v5873 = vpack.c.b16 %v5732, %v5731
          %v5874 = vpack.c.b16 %v5734, %v5733
          %v5875 = vpack.c.b16 %v5736, %v5735
          %v5876 = vpack.c.b16 %v5738, %v5737
          %v5877 = vpack.c.b16 %v5740, %v5739
          %v5878 = vpack.c.b16 %v5742, %v5741
          %v5879 = vpack.c.b16 %v5744, %v5743
          %v5880 = vpack.c.b16 %v5746, %v5745
          %v5881 = vpack.c.b16 %v5748, %v5747
          %v5882 = vpack.c.b16 %v5750, %v5749
          %v5883 = vpack.c.b16 %v5752, %v5751
          %v5884 = vpack.c.b16 %v5754, %v5753
          %v5885 = vpack.c.b16 %v5756, %v5755
          %v5886 = vpack.c.b16 %v5758, %v5757
          %v5887 = vpack.c.b16 %v5760, %v5759
          %v5888 = vpack.c.b16 %v5762, %v5761
          %v5889 = vpack.c.b16 %v5764, %v5763
          %v5890 = vpack.c.b16 %v5766, %v5765
          %v5891 = vpack.c.b16 %v5768, %v5767
          %v5892 = vpack.c.b16 %v5770, %v5769
          %v5893 = vpack.c.b16 %v5772, %v5771
          %v5894 = vpack.c.b16 %v5774, %v5773
          %v5895 = vpack.c.b16 %v5776, %v5775
          %v5896 = vpack.c.b16 %v5778, %v5777
          %v5897 = vpack.c.b16 %v5780, %v5779
          %v5898 = vpack.c.b16 %v5782, %v5781
          %v5899 = vpack.c.b16 %v5784, %v5783
          %v5900 = vpack.c.b16 %v5786, %v5785
          %v5901 = vpack.c.b16 %v5788, %v5787
          %v5902 = vpack.c.b16 %v5790, %v5789
          %v5903 = vpack.c.b16 %v5792, %v5791
          %v5904 = vpack.c.b16 %v5794, %v5793
          %v5905 = vpack.c.b16 %v5796, %v5795
          %v5906 = vpack.c.b16 %v5798, %v5797
          %v5907 = vpack.c.b16 %v5800, %v5799
          %v5908 = vpack.c.b16 %v5802, %v5801
          %v5909 = vpack.c.b16 %v5804, %v5803
          %v5910 = vpack.c.b16 %v5806, %v5805
          %v5911 = vpack.c.b16 %v5808, %v5807
          %v5912 = vpack.c.b16 %v5810, %v5809
          %v5913 = vpack.c.b16 %v5812, %v5811
          %v5914 = vpack.c.b16 %v5814, %v5813
          %v5915 = vpack.c.b16 %v5816, %v5815
          %v5916 = vpack.c.b16 %v5818, %v5817
          %v5917 = vpack.c.b16 %v5820, %v5819
          %v5918 = vpack.c.b16 %v5822, %v5821
          %v5919 = vpack.c.b16 %v5824, %v5823
          %v5920 = vpack.c.b16 %v5826, %v5825
          %v5921 = vpack.c.b16 %v5828, %v5827
          %v5922 = vpack.c.b16 %v5830, %v5829
          %v5923 = vpack.c.b16 %v5832, %v5831
          %v5924 = vpack.c.b16 %v5834, %v5833
          %v5925 = vpack.c.b16 %v5836, %v5835
          %v5926 = vpack.c.b16 %v5838, %v5837
          %v5927 = vpack.c.b16 %v5840, %v5839
          %v5928 = vpack.c.b16 %v5842, %v5841
          %v5929 = vpack.c.b16 %v5844, %v5843
          %v5930 = vpack.c.b16 %v5846, %v5845
          %v5931 = vpack.c.b16 %v5848, %v5847
          %v5932 = vpack.c.b16 %v5850, %v5849
          %v5933 = vpack.c.b16 %v5852, %v5851
          %v5934 = vpack.c.b16 %v5854, %v5853
          %6015 = vmatprep.subr.bf16.mxu0 0
          %6016 = vmatpush1.bf16.msra.mxu0 %v5862
          %6017 = vmatprep.subr.bf16.mxu0 0
          %6018 = vmatpush1.bf16.msra.mxu0 %v5861
          %6019 = vmatprep.subr.bf16.mxu0 0
          %6020 = vmatpush1.bf16.msra.mxu0 %v5860
          %6021 = vmatprep.subr.bf16.mxu0 0
          %6022 = vmatpush1.bf16.msra.mxu0 %v5859
          %6023 = vmatprep.subr.bf16.mxu0 0
          %6024 = vmatpush1.bf16.msra.mxu0 %v5858
          %6025 = vmatprep.subr.bf16.mxu0 0
          %6026 = vmatpush1.bf16.msra.mxu0 %v5857
          %6027 = vmatprep.subr.bf16.mxu0 0
          %6028 = vmatpush1.bf16.msra.mxu0 %v5856
          %6029 = vmatprep.subr.bf16.mxu0 0
          %6030 = vmatpush1.bf16.msra.mxu0 %v5855
          %6031 = vmatprep.subr.bf16.mxu0 0
          %6032 = vmatpush2.bf16.msra.mxu0 %v5870
          %6033 = vmatprep.subr.bf16.mxu0 0
          %6034 = vmatpush2.bf16.msra.mxu0 %v5869
          %6035 = vmatprep.subr.bf16.mxu0 0
          %6036 = vmatpush2.bf16.msra.mxu0 %v5868
          %6037 = vmatprep.subr.bf16.mxu0 0
          %6038 = vmatpush2.bf16.msra.mxu0 %v5867
          %6039 = vmatprep.subr.bf16.mxu0 0
          %6040 = vmatpush2.bf16.msra.mxu0 %v5866
          %6041 = vmatprep.subr.bf16.mxu0 0
          %6042 = vmatpush2.bf16.msra.mxu0 %v5865
          %6043 = vmatprep.subr.bf16.mxu0 0
          %6044 = vmatpush2.bf16.msra.mxu0 %v5864
          %6045 = vmatprep.subr.bf16.mxu0 0
          %6046 = vmatpush2.bf16.msra.mxu0 %v5863
          %6047 = vmatprep.mubr.bf16.mxu0 %v5365
          %6048 = vmatmul.mubr.bf16.gmra.mxu0 %v5364
          %v6049 = vpop.f32.mrf.mxu0
          %v6050 = vadd.f32 %v5534, %v6049
          %v6051 = vpop.f32.mrf.mxu0
          %v6052 = vpop.f32.mrf.mxu0
          %v6053 = vpop.f32.mrf.mxu0
          %6054 = vdwg.mxu0
          %6055 = vmatprep.subr.bf16.mxu0 0
          %6056 = vmatpush1.bf16.msra.mxu0 %v5878
          %6057 = vmatprep.subr.bf16.mxu0 0
          %6058 = vmatpush1.bf16.msra.mxu0 %v5877
          %6059 = vmatprep.subr.bf16.mxu0 0
          %6060 = vmatpush1.bf16.msra.mxu0 %v5876
          %6061 = vmatprep.subr.bf16.mxu0 0
          %6062 = vmatpush1.bf16.msra.mxu0 %v5875
          %6063 = vmatprep.subr.bf16.mxu0 0
          %6064 = vmatpush1.bf16.msra.mxu0 %v5874
          %6065 = vmatprep.subr.bf16.mxu0 0
          %6066 = vmatpush1.bf16.msra.mxu0 %v5873
          %6067 = vmatprep.subr.bf16.mxu0 0
          %6068 = vmatpush1.bf16.msra.mxu0 %v5872
          %6069 = vmatprep.subr.bf16.mxu0 0
          %6070 = vmatpush1.bf16.msra.mxu0 %v5871
          %6071 = vmatprep.subr.bf16.mxu0 0
          %6072 = vmatpush2.bf16.msra.mxu0 %v5886
          %6073 = vmatprep.subr.bf16.mxu0 0
          %6074 = vmatpush2.bf16.msra.mxu0 %v5885
          %6075 = vmatprep.subr.bf16.mxu0 0
          %6076 = vmatpush2.bf16.msra.mxu0 %v5884
          %6077 = vmatprep.subr.bf16.mxu0 0
          %6078 = vmatpush2.bf16.msra.mxu0 %v5883
          %6079 = vmatprep.subr.bf16.mxu0 0
          %6080 = vmatpush2.bf16.msra.mxu0 %v5882
          %6081 = vmatprep.subr.bf16.mxu0 0
          %6082 = vmatpush2.bf16.msra.mxu0 %v5881
          %6083 = vmatprep.subr.bf16.mxu0 0
          %6084 = vmatpush2.bf16.msra.mxu0 %v5880
          %6085 = vmatprep.subr.bf16.mxu0 0
          %6086 = vmatpush2.bf16.msra.mxu0 %v5879
          %6087 = vmatprep.mubr.bf16.mxu0 %v5367
          %6088 = vmatmul.mubr.bf16.gmra.mxu0 %v5366
          %v6089 = vpop.f32.mrf.mxu0
          %v6090 = vadd.f32 %v6050, %v6089
          %v6091 = vpop.f32.mrf.mxu0
          %v6092 = vpop.f32.mrf.mxu0
          %v6093 = vpop.f32.mrf.mxu0
          %6094 = vdwg.mxu0
          %6095 = vmatprep.subr.bf16.mxu0 0
          %6096 = vmatpush1.bf16.msra.mxu0 %v5894
          %6097 = vmatprep.subr.bf16.mxu0 0
          %6098 = vmatpush1.bf16.msra.mxu0 %v5893
          %6099 = vmatprep.subr.bf16.mxu0 0
          %6100 = vmatpush1.bf16.msra.mxu0 %v5892
          %6101 = vmatprep.subr.bf16.mxu0 0
          %6102 = vmatpush1.bf16.msra.mxu0 %v5891
          %6103 = vmatprep.subr.bf16.mxu0 0
          %6104 = vmatpush1.bf16.msra.mxu0 %v5890
          %6105 = vmatprep.subr.bf16.mxu0 0
          %6106 = vmatpush1.bf16.msra.mxu0 %v5889
          %6107 = vmatprep.subr.bf16.mxu0 0
          %6108 = vmatpush1.bf16.msra.mxu0 %v5888
          %6109 = vmatprep.subr.bf16.mxu0 0
          %6110 = vmatpush1.bf16.msra.mxu0 %v5887
          %6111 = vmatprep.subr.bf16.mxu0 0
          %6112 = vmatpush2.bf16.msra.mxu0 %v5902
          %6113 = vmatprep.subr.bf16.mxu0 0
          %6114 = vmatpush2.bf16.msra.mxu0 %v5901
          %6115 = vmatprep.subr.bf16.mxu0 0
          %6116 = vmatpush2.bf16.msra.mxu0 %v5900
          %6117 = vmatprep.subr.bf16.mxu0 0
          %6118 = vmatpush2.bf16.msra.mxu0 %v5899
          %6119 = vmatprep.subr.bf16.mxu0 0
          %6120 = vmatpush2.bf16.msra.mxu0 %v5898
          %6121 = vmatprep.subr.bf16.mxu0 0
          %6122 = vmatpush2.bf16.msra.mxu0 %v5897
          %6123 = vmatprep.subr.bf16.mxu0 0
          %6124 = vmatpush2.bf16.msra.mxu0 %v5896
          %6125 = vmatprep.subr.bf16.mxu0 0
          %6126 = vmatpush2.bf16.msra.mxu0 %v5895
          %6127 = vmatprep.mubr.bf16.mxu0 %v5369
          %6128 = vmatmul.mubr.bf16.gmra.mxu0 %v5368
          %v6129 = vpop.f32.mrf.mxu0
          %v6130 = vadd.f32 %v6090, %v6129
          %v6131 = vpop.f32.mrf.mxu0
          %v6132 = vpop.f32.mrf.mxu0
          %v6133 = vpop.f32.mrf.mxu0
          %6134 = vdwg.mxu0
          %6135 = vmatprep.subr.bf16.mxu0 0
          %6136 = vmatpush1.bf16.msra.mxu0 %v5910
          %6137 = vmatprep.subr.bf16.mxu0 0
          %6138 = vmatpush1.bf16.msra.mxu0 %v5909
          %6139 = vmatprep.subr.bf16.mxu0 0
          %6140 = vmatpush1.bf16.msra.mxu0 %v5908
          %6141 = vmatprep.subr.bf16.mxu0 0
          %6142 = vmatpush1.bf16.msra.mxu0 %v5907
          %6143 = vmatprep.subr.bf16.mxu0 0
          %6144 = vmatpush1.bf16.msra.mxu0 %v5906
          %6145 = vmatprep.subr.bf16.mxu0 0
          %6146 = vmatpush1.bf16.msra.mxu0 %v5905
          %6147 = vmatprep.subr.bf16.mxu0 0
          %6148 = vmatpush1.bf16.msra.mxu0 %v5904
          %6149 = vmatprep.subr.bf16.mxu0 0
          %6150 = vmatpush1.bf16.msra.mxu0 %v5903
          %6151 = vmatprep.subr.bf16.mxu0 0
          %6152 = vmatpush2.bf16.msra.mxu0 %v5918
          %6153 = vmatprep.subr.bf16.mxu0 0
          %6154 = vmatpush2.bf16.msra.mxu0 %v5917
          %6155 = vmatprep.subr.bf16.mxu0 0
          %6156 = vmatpush2.bf16.msra.mxu0 %v5916
          %6157 = vmatprep.subr.bf16.mxu0 0
          %6158 = vmatpush2.bf16.msra.mxu0 %v5915
          %6159 = vmatprep.subr.bf16.mxu0 0
          %6160 = vmatpush2.bf16.msra.mxu0 %v5914
          %6161 = vmatprep.subr.bf16.mxu0 0
          %6162 = vmatpush2.bf16.msra.mxu0 %v5913
          %6163 = vmatprep.subr.bf16.mxu0 0
          %6164 = vmatpush2.bf16.msra.mxu0 %v5912
          %6165 = vmatprep.subr.bf16.mxu0 0
          %6166 = vmatpush2.bf16.msra.mxu0 %v5911
          %6167 = vmatprep.mubr.bf16.mxu0 %v5371
          %6168 = vmatmul.mubr.bf16.gmra.mxu0 %v5370
          %v6169 = vpop.f32.mrf.mxu0
          %v6170 = vadd.f32 %v6130, %v6169
          %v6171 = vpop.f32.mrf.mxu0
          %v6172 = vpop.f32.mrf.mxu0
          %v6173 = vpop.f32.mrf.mxu0
          %6174 = vdwg.mxu0
          %6175 = vmatprep.subr.bf16.mxu0 0
          %6176 = vmatpush1.bf16.msra.mxu0 %v5926
          %6177 = vmatprep.subr.bf16.mxu0 0
          %6178 = vmatpush1.bf16.msra.mxu0 %v5925
          %6179 = vmatprep.subr.bf16.mxu0 0
          %6180 = vmatpush1.bf16.msra.mxu0 %v5924
          %6181 = vmatprep.subr.bf16.mxu0 0
          %6182 = vmatpush1.bf16.msra.mxu0 %v5923
          %6183 = vmatprep.subr.bf16.mxu0 0
          %6184 = vmatpush1.bf16.msra.mxu0 %v5922
          %6185 = vmatprep.subr.bf16.mxu0 0
          %6186 = vmatpush1.bf16.msra.mxu0 %v5921
          %6187 = vmatprep.subr.bf16.mxu0 0
          %6188 = vmatpush1.bf16.msra.mxu0 %v5920
          %6189 = vmatprep.subr.bf16.mxu0 0
          %6190 = vmatpush1.bf16.msra.mxu0 %v5919
          %6191 = vmatprep.subr.bf16.mxu0 0
          %6192 = vmatpush2.bf16.msra.mxu0 %v5934
          %6193 = vmatprep.subr.bf16.mxu0 0
          %6194 = vmatpush2.bf16.msra.mxu0 %v5933
          %6195 = vmatprep.subr.bf16.mxu0 0
          %6196 = vmatpush2.bf16.msra.mxu0 %v5932
          %6197 = vmatprep.subr.bf16.mxu0 0
          %6198 = vmatpush2.bf16.msra.mxu0 %v5931
          %6199 = vmatprep.subr.bf16.mxu0 0
          %6200 = vmatpush2.bf16.msra.mxu0 %v5930
          %6201 = vmatprep.subr.bf16.mxu0 0
          %6202 = vmatpush2.bf16.msra.mxu0 %v5929
          %6203 = vmatprep.subr.bf16.mxu0 0
          %6204 = vmatpush2.bf16.msra.mxu0 %v5928
          %6205 = vmatprep.subr.bf16.mxu0 0
          %6206 = vmatpush2.bf16.msra.mxu0 %v5927
          %6207 = vmatprep.mubr.bf16.mxu0 %v5373
          %6208 = vmatmul.mubr.bf16.gmra.mxu0 %v5372
          %v6209 = vpop.f32.mrf.mxu0
          %v6210 = vadd.f32 %v6170, %v6209
          %v6211 = vpop.f32.mrf.mxu0
          %v6212 = vpop.f32.mrf.mxu0
          %v6213 = vpop.f32.mrf.mxu0
          %6214 = vdwg.mxu0
          %v6215 = vlaneseq
          %v6216 = vand.u32 %v6215, 127
          %vm6217 = vcmp.lt.s32.totalorder %v6216, 10
          %v6218 = vsel %vm6217, %v6210, -1e+30
          %vm6219 = vcmask 1040384
          %v6220 = vsel %vm6219, %v6218, -inf
          %6221 = vmax.xlane.f32.xlu0 %v6220
          %v6222 = vpop.xlane.xlu0 %6221
          %v6223 = vsub.f32 %v6218, %v6222
          %v6224 = vmul.f32 %v6223, 1.442695
          %v6225 = vpow.pop %v6224
          %v6226 = vsel %vm6219, %v6225, 0.0
          %6227 = vadd.xlane.f32.xlu0 %v6226
          %v6228 = vpop.xlane.xlu0 %6227
          %v6229 = vrcp.pop %v6228
          %v6230 = vmul.f32 %v6225, %v6229
          %6231 = vst [vmem:[%s266] sm:$0x1] %v6230
        $region52: #{classify_forward.1} parent=43 // pred_fallthru
          _
        %s6232 = sand.u32 %s173, 1
        %s6233 = scalar_lea.sflag [#allocation4], %s6232
        %s6234 = sand.u32 %s173, 1
        %s6235 = scalar_lea.vmem [#allocation3], %s6234
        // Predicated region
        $region53: #{classify_forward.1} parent=43 // pred_check
          %p6236 = pneg %p183
        $region54: #{classify_forward.1} parent=43 // pred_check_branch
          %6238 = sbr.rel (%p6236) target = $region56
        $region55: #{classify_forward.1} parent=43 // pred_region
          %s6240 = ssub.s32 16, 16
          %6241 = vsyncadd %s6233, %s6240
          %s6242 = smul.addr %s24, 16
          %s6243 = scalar_lea.hbm %s6, %s6242
          %s6245 = sshll.u32 %s6235, 4
          %s6246 = int_to_ptr.vmem [resolvable:$true] %s6245
          %6248 = dma.vmem_to_hbm [thread:$0]  %s6246, 16, %s6243, %s6233
        $region56: #{classify_forward.1} parent=43 // pred_fallthru
          _
      $region44: #{classify_forward.1} parent=5 // pred_fallthru
        _
      %p6249 = scmp.le.s32.totalorder 2, %s15
      // Predicated region
      $region57: #{classify_forward.1} parent=5 // pred_check
        %p6250 = pneg %p6249
      $region58: #{classify_forward.1} parent=5 // pred_check_branch
        %6252 = sbr.rel (%p6250) target = $region60
      $region59: #{classify_forward.1} parent=5 // pred_region
        %s6253 = ssub.s32 %s15, 2
        // Predicated region
        $region61: #{classify_forward.1} parent=59 // pred_check
          %p6254 = pneg %p189
        $region62: #{classify_forward.1} parent=59 // pred_check_branch
          %6256 = sbr.rel (%p6254) target = $region64
        $region63: #{classify_forward.1} parent=59 // pred_region
          %s6257 = sand.u32 %s174, 1
          %s6258 = scalar_lea.sflag [#allocation4], %s6257
          %s6259 = sand.u32 %s174, 1
          %s6260 = scalar_lea.vmem [#allocation3], %s6259
          %6261 = dma.done %s6258, 16
        $region64: #{classify_forward.1} parent=59 // pred_fallthru
          _
      $region60: #{classify_forward.1} parent=5 // pred_fallthru
        _
    $region6: #{classify_forward.1} parent=1 // loop_footer
      %s19 = sadd.s32 1, %s15
    $region7: #{classify_forward.1} parent=1 // loop_footer_branch
      %14 = sbr.rel target = $region3
    $region8: #{classify_forward.1} parent=1 // loop_exit
      _
    %6262 = vsyncpa [#allocation4], 1
    %s6263 = scalar_lea.sflag [#allocation4], 1
    %6264 = vsyncpa %s6263, 1

</llo_original>
